<compile_context>
chip_gen: v6e
topology: v6e:2x2x1
jax: 0.10.0
libtpu: 0.0.40
codegen_flags: <defaults>
</compile_context>

<pallas_src>
import functools
import math

import jax
import jax.numpy as jnp
from jax import lax
from jax.experimental import pallas as pl
from jax.experimental.pallas import tpu as pltpu

NEG_INF = -1e9


# ----------------------------------------------------------------------------
# Kernel: the WHOLE DecoderLayer for the whole batch in one invocation
# ----------------------------------------------------------------------------
def decoder_layer_kernel(
    x_ref, enc_ref, srcbias_ref,
    # self-attention params
    wq1, bq1, wk1, bk1, wv1, bv1, wo1, bo1, g1, be1,
    # cross-attention params
    wq2, bq2, wk2, bk2, wv2, bv2, wo2, bo2, g2, be2,
    # feed-forward params
    wff1, bff1, wff2, bff2, g3, be3,
    out_ref,
    *, batch: int, num_heads: int, approx_recip: bool,
):
    f32 = jnp.float32
    bf16 = jnp.bfloat16
    B, H = batch, num_heads

    x16 = x_ref[...]                        # (B*S, D)  bf16
    enc16 = enc_ref[...]                    # (B*Se, D) bf16
    BS, D = x16.shape
    S = BS // B
    Se = enc16.shape[0] // B
    dh = D // H
    scale = 1.0 / math.sqrt(dh)

    # ---- additive mask biases, generated on the VPU (no O(S^2) HBM traffic) ----
    rows = lax.broadcasted_iota(jnp.int32, (S, S), 0)
    cols = lax.broadcasted_iota(jnp.int32, (S, S), 1)
    causal_bias = jnp.where(rows >= cols, 0.0, NEG_INF).astype(f32)         # (S, S)
    # key-padding bias for cross-attention: (B, Se) -> (B*H, Se)
    src_bias = jnp.broadcast_to(
        srcbias_ref[...][:, None, :], (B, H, Se)).reshape(B * H, Se)

    def split_heads(t, L):
        # (B*L, D) -> (B*H, L, dh); minor (lane) dim stays minor throughout.
        return t.reshape(B, L, H, dh).transpose(0, 2, 1, 3).reshape(B * H, L, dh)

    def attention(q16, kv16, Sk, bias, wq, bq, wk, bk, wv, bv, wo, bo):
        Sq = q16.shape[0] // B
        # bf16 operands -> MXU, f32 accumulation; batch folded into the rows.
        Q = jnp.dot(q16, wq[...], preferred_element_type=f32) + bq[0]       # (B*Sq, D)
        K = jnp.dot(kv16, wk[...], preferred_element_type=f32) + bk[0]      # (B*Sk, D)
        V = jnp.dot(kv16, wv[...], preferred_element_type=f32) + bv[0]      # (B*Sk, D)

        Qh = split_heads(Q.astype(bf16), Sq)                                # (B*H,Sq,dh)
        Kh = split_heads(K.astype(bf16), Sk)
        Vh = split_heads(V.astype(bf16), Sk)

        # scores[b,q,k] over the fused (B*H) batch dim — contract dh directly,
        # no materialized K^T.
        scores = jnp.einsum('bqd,bkd->bqk', Qh, Kh,
                            preferred_element_type=f32)                     # (B*H,Sq,Sk)
        scores = scores * scale + bias

        # softmax in f32
        m = jnp.max(scores, axis=-1, keepdims=True)
        p = jnp.exp(scores - m)
        denom = jnp.sum(p, axis=-1, keepdims=True)
        if approx_recip:
            p = p * pl.reciprocal(denom, approx=True)   # EUP slot, frees the VALU
        else:
            p = p / denom

        ctx = jnp.einsum('bqk,bkd->bqd', p.astype(bf16), Vh,
                         preferred_element_type=f32)                        # (B*H,Sq,dh)

        # Re-assemble to a lane-dense (B*Sq, D=128) slab and do ONE full-depth
        # output projection (full MXU depth; no per-head depth-dh matmul + sum).
        ctx = ctx.reshape(B, H, Sq, dh).transpose(0, 2, 1, 3).reshape(B * Sq, D)
        return jnp.dot(ctx.astype(bf16), wo[...],
                       preferred_element_type=f32) + bo[0]                  # (B*Sq, D)

    def layer_norm(v, gamma, beta):
        mu = jnp.mean(v, axis=-1, keepdims=True)
        var = jnp.mean(jnp.square(v - mu), axis=-1, keepdims=True)
        return (v - mu) * lax.rsqrt(var + 1e-5) * gamma[0] + beta[0]

    x_res = x16.astype(f32)

    # 1) masked self-attention + residual + LN
    sa = attention(x16, x16, S, causal_bias[None, :, :],
                   wq1, bq1, wk1, bk1, wv1, bv1, wo1, bo1)
    x = layer_norm(sa + x_res, g1, be1)

    # 2) encoder-decoder cross-attention + residual + LN
    ea = attention(x.astype(bf16), enc16, Se, src_bias[:, None, :],
                   wq2, bq2, wk2, bk2, wv2, bv2, wo2, bo2)
    x = layer_norm(ea + x, g2, be2)

    # 3) position-wise FFN (ReLU) + residual + LN
    h = jnp.maximum(
        jnp.dot(x.astype(bf16), wff1[...], preferred_element_type=f32) + bff1[0], 0.0)
    f = jnp.dot(h.astype(bf16), wff2[...], preferred_element_type=f32) + bff2[0]
    x = layer_norm(f + x, g3, be3)

    out_ref[...] = x.astype(out_ref.dtype)


# ----------------------------------------------------------------------------
# Wrapper
# ----------------------------------------------------------------------------
def run_decoder_layer(x, enc_out, trg_mask, src_mask, params, num_heads,
                      approx_recip=True):
    """x: (B,S,D) f32, enc_out: (B,Se,D) f32, masks: (B,1,Sq,Sk) 0/1 ints.

    The causal target mask is regenerated in-kernel (trg_mask is assumed to be
    the standard lower-triangular mask); src_mask is collapsed to a per-key
    padding vector so no O(S^2) bias is ever shipped through HBM.
    """
    B, S, D = x.shape
    Se = enc_out.shape[1]
    del trg_mask  # generated in-kernel (causal); see TODO(synk) at top of file

    # Cast activations to bf16 ONCE (halves activation DMA) and fold batch into rows.
    x2d = x.astype(jnp.bfloat16).reshape(B * S, D)
    enc2d = enc_out.astype(jnp.bfloat16).reshape(B * Se, D)

    # Per-key padding bias for cross-attention: O(B*Se) bytes only.
    src_bias = jnp.where(src_mask[:, 0, 0, :] == 0, NEG_INF, 0.0).astype(jnp.float32)

    kernel = functools.partial(decoder_layer_kernel, batch=B,
                               num_heads=num_heads, approx_recip=approx_recip)

    n_inputs = 3 + len(params)
    vmem_spec = pl.BlockSpec(memory_space=pltpu.MemorySpace.VMEM)

    out2d = pl.pallas_call(
        kernel,
        out_shape=jax.ShapeDtypeStruct((B * S, D), jnp.float32),
        # No grid: one invocation for the whole layer -> zero per-grid-step
        # overhead and every weight is single-buffered (no double-buffering).
        in_specs=[vmem_spec] * n_inputs,
        out_specs=vmem_spec,
        compiler_params=pltpu.CompilerParams(
            vmem_limit_bytes=32 * 1024 * 1024),
    )(x2d, enc2d, src_bias, *params)

    return out2d.reshape(B, S, D)


# ----------------------------------------------------------------------------
# Deterministic parameter construction (weights bf16, biases / LN params f32)
# ----------------------------------------------------------------------------
def xavier_uniform(key, fan_in, fan_out):
    a = math.sqrt(6.0 / (fan_in + fan_out))
    return jax.random.uniform(key, (fan_in, fan_out), jnp.float32, -a, a)


def bias_init(key, fan_in, fan_out):
    a = 1.0 / math.sqrt(fan_in)
    return jax.random.uniform(key, (1, fan_out), jnp.float32, -a, a)


def make_layer_params(key, d_model, d_ff):
    keys = jax.random.split(key, 32)
    ki = 0
    params = []
    ones = jnp.ones((1, d_model), jnp.float32)
    zeros = jnp.zeros((1, d_model), jnp.float32)

    def attn_block():
        nonlocal ki
        blk = []
        for _ in range(4):                       # W_Q, W_K, W_V, W_O
            w = xavier_uniform(keys[ki], d_model, d_model).astype(jnp.bfloat16)
            b = bias_init(keys[ki + 1], d_model, d_model)
            ki += 2
            blk += [w, b]
        return blk

    params += attn_block() + [ones, zeros]       # self-attention + norm1
    params += attn_block() + [ones, zeros]       # cross-attention + norm2
    w1 = xavier_uniform(keys[ki], d_model, d_ff).astype(jnp.bfloat16)
    b1 = bias_init(keys[ki + 1], d_model, d_ff)
    w2 = xavier_uniform(keys[ki + 2], d_ff, d_model).astype(jnp.bfloat16)
    b2 = bias_init(keys[ki + 3], d_ff, d_model)
    params += [w1, b1, w2, b2, ones, zeros]      # ffn + norm3
    return params


# ----------------------------------------------------------------------------
# Pure-JAX reference mirroring the kernel's bf16 rounding points (exact softmax)
# ----------------------------------------------------------------------------
def reference_decoder_layer(x, enc, src_mask, params, num_heads):
    (wq1, bq1, wk1, bk1, wv1, bv1, wo1, bo1, g1, be1,
     wq2, bq2, wk2, bk2, wv2, bv2, wo2, bo2, g2, be2,
     wff1, bff1, wff2, bff2, g3, be3) = params
    f32, bf16 = jnp.float32, jnp.bfloat16
    B, S, D = x.shape
    H = num_heads
    dh = D // H

    def mm(a, w):    # bf16 operands, f32 math (mirrors MXU bf16 x bf16 -> f32)
        return jnp.dot(a.astype(bf16).astype(f32), w.astype(f32))

    x16 = x.astype(bf16).astype(f32)
    enc16 = enc.astype(bf16).astype(f32)

    causal = jnp.tril(jnp.ones((S, S), jnp.int32))

    def mha(q_in, kv_in, mask, wq, bq, wk, bk, wv, bv, wo, bo):
        Sq, Sk = q_in.shape[1], kv_in.shape[1]
        Q = mm(q_in, wq) + bq[0]
        K = mm(kv_in, wk) + bk[0]
        V = mm(kv_in, wv) + bv[0]
        Qh = Q.reshape(B, Sq, H, dh).transpose(0, 2, 1, 3)
        Kh = K.reshape(B, Sk, H, dh).transpose(0, 2, 1, 3)
        Vh = V.reshape(B, Sk, H, dh).transpose(0, 2, 1, 3)
        score = jnp.einsum('bhqd,bhkd->bhqk',
                           Qh.astype(bf16).astype(f32),
                           Kh.astype(bf16).astype(f32)) / math.sqrt(dh)
        score = jnp.where(mask == 0, NEG_INF, score)
        p = jax.nn.softmax(score, axis=-1)
        ctx = jnp.einsum('bhqk,bhkd->bhqd',
                         p.astype(bf16).astype(f32),
                         Vh.astype(bf16).astype(f32))
        ctx = ctx.transpose(0, 2, 1, 3).reshape(B, Sq, D)
        return mm(ctx, wo) + bo[0]

    def ln(v, g, b):
        mu = v.mean(-1, keepdims=True)
        var = ((v - mu) ** 2).mean(-1, keepdims=True)
        return (v - mu) / jnp.sqrt(var + 1e-5) * g[0] + b[0]

    trg = causal[None, None]
    src = src_mask[:, 0, 0, :][:, None, None, :]

    xr = x16
    sa = mha(xr, xr, trg, wq1, bq1, wk1, bk1, wv1, bv1, wo1, bo1)
    xr = ln(sa + xr, g1, be1)
    ea = mha(xr, enc16, src, wq2, bq2, wk2, bk2, wv2, bv2, wo2, bo2)
    xr = ln(ea + xr, g2, be2)
    h = jax.nn.relu(mm(xr, wff1) + bff1[0])
    f = mm(h, wff2) + bff2[0]
    return ln(f + xr, g3, be3)


# ----------------------------------------------------------------------------
# Main
# ----------------------------------------------------------------------------
if __name__ == "__main__":
    B, S, Se = 2, 8, 8
    d_model, d_ff, num_heads = 128, 256, 4     # D=128 -> lane-dense stores

    root = jax.random.PRNGKey(0)
    k_x, k_enc, k_p = jax.random.split(root, 3)

    dec_in = jax.random.normal(k_x, (B, S, d_model), jnp.float32)
    enc_out = jax.random.normal(k_enc, (B, Se, d_model), jnp.float32)

    # causal target mask, all-ones source mask (0 = masked position)
    trg_mask = jnp.tril(jnp.ones((S, S), jnp.int32))[None, None].repeat(B, axis=0)
    src_mask = jnp.ones((B, 1, S, Se), jnp.int32)

    params = make_layer_params(k_p, d_model, d_ff)

    out = run_decoder_layer(dec_in, enc_out, trg_mask, src_mask, params, num_heads)
    out = jax.block_until_ready(out)

    assert out.shape == (B, S, d_model)
    assert bool(jnp.all(jnp.isfinite(out)))

    ref = reference_decoder_layer(dec_in, enc_out, src_mask, params, num_heads)
    max_err = float(jnp.max(jnp.abs(out - ref)))
    assert bool(jnp.allclose(out, ref, atol=5e-2, rtol=5e-2)), max_err

    print("KERNEL_OK")
</pallas_src>

<mosaic_0001>
module attributes {stable_mosaic.version = 11 : i64} {
  func.func @decoder_layer_kernel(%arg0: memref<16x128xbf16, #tpu.memory_space<vmem>>, %arg1: memref<16x128xbf16, #tpu.memory_space<vmem>>, %arg2: memref<2x8xf32, #tpu.memory_space<vmem>>, %arg3: memref<128x128xbf16, #tpu.memory_space<vmem>>, %arg4: memref<1x128xf32, #tpu.memory_space<vmem>>, %arg5: memref<128x128xbf16, #tpu.memory_space<vmem>>, %arg6: memref<1x128xf32, #tpu.memory_space<vmem>>, %arg7: memref<128x128xbf16, #tpu.memory_space<vmem>>, %arg8: memref<1x128xf32, #tpu.memory_space<vmem>>, %arg9: memref<128x128xbf16, #tpu.memory_space<vmem>>, %arg10: memref<1x128xf32, #tpu.memory_space<vmem>>, %arg11: memref<1x128xf32, #tpu.memory_space<vmem>>, %arg12: memref<1x128xf32, #tpu.memory_space<vmem>>, %arg13: memref<128x128xbf16, #tpu.memory_space<vmem>>, %arg14: memref<1x128xf32, #tpu.memory_space<vmem>>, %arg15: memref<128x128xbf16, #tpu.memory_space<vmem>>, %arg16: memref<1x128xf32, #tpu.memory_space<vmem>>, %arg17: memref<128x128xbf16, #tpu.memory_space<vmem>>, %arg18: memref<1x128xf32, #tpu.memory_space<vmem>>, %arg19: memref<128x128xbf16, #tpu.memory_space<vmem>>, %arg20: memref<1x128xf32, #tpu.memory_space<vmem>>, %arg21: memref<1x128xf32, #tpu.memory_space<vmem>>, %arg22: memref<1x128xf32, #tpu.memory_space<vmem>>, %arg23: memref<128x256xbf16, #tpu.memory_space<vmem>>, %arg24: memref<1x256xf32, #tpu.memory_space<vmem>>, %arg25: memref<256x128xbf16, #tpu.memory_space<vmem>>, %arg26: memref<1x128xf32, #tpu.memory_space<vmem>>, %arg27: memref<1x128xf32, #tpu.memory_space<vmem>>, %arg28: memref<1x128xf32, #tpu.memory_space<vmem>>, %arg29: memref<16x128xf32, #tpu.memory_space<vmem>>) attributes {dimension_semantics = [], scalar_prefetch = 0 : i64, scratch_operands = 0 : i64, tpu.core_type = #tpu.core_type<tc>} {
    %c0 = arith.constant 0 : index
    %c0_0 = arith.constant 0 : index
    %0 = vector.load %arg0[%c0, %c0_0] : memref<16x128xbf16, #tpu.memory_space<vmem>>, vector<16x128xbf16>
    %c0_1 = arith.constant 0 : index
    %c0_2 = arith.constant 0 : index
    %1 = vector.load %arg1[%c0_1, %c0_2] : memref<16x128xbf16, #tpu.memory_space<vmem>>, vector<16x128xbf16>
    %2 = tpu.iota {dimensions = array<i32: 0>} : vector<8x8xi32>
    %3 = tpu.iota {dimensions = array<i32: 1>} : vector<8x8xi32>
    %4 = arith.cmpi sge, %2, %3 : vector<8x8xi32>
    %cst = arith.constant 0.000000e+00 : f32
    %cst_3 = arith.constant -1.000000e+09 : f32
    %5 = vector.broadcast %cst : f32 to vector<8x8xf32>
    %6 = vector.broadcast %cst_3 : f32 to vector<8x8xf32>
    %7 = arith.select %4, %5, %6 : vector<8x8xi1>, vector<8x8xf32>
    %c0_4 = arith.constant 0 : index
    %c0_5 = arith.constant 0 : index
    %8 = vector.load %arg2[%c0_4, %c0_5] : memref<2x8xf32, #tpu.memory_space<vmem>>, vector<2x8xf32>
    %9 = vector.shape_cast %8 : vector<2x8xf32> to vector<2x1x8xf32>
    %10 = vector.shape_cast %9 : vector<2x1x8xf32> to vector<2x1x8xf32>
    %11 = vector.broadcast %10 : vector<2x1x8xf32> to vector<2x4x8xf32>
    %12 = vector.shape_cast %11 : vector<2x4x8xf32> to vector<8x8xf32>
    %13 = arith.extf %0 : vector<16x128xbf16> to vector<16x128xf32>
    %14 = vector.shape_cast %7 : vector<8x8xf32> to vector<1x8x8xf32>
    %c0_6 = arith.constant 0 : index
    %c0_7 = arith.constant 0 : index
    %15 = vector.load %arg3[%c0_6, %c0_7] : memref<128x128xbf16, #tpu.memory_space<vmem>>, vector<128x128xbf16>
    %cst_8 = arith.constant dense<0.000000e+00> : vector<16x128xf32>
    %16 = tpu.matmul %0, %15, %cst_8 {dimension_numbers = #tpu.dot_dimension_numbers<[1], [0], [0], [1], [0, 0, 1, 1], [], []>} : vector<16x128xbf16>, vector<128x128xbf16>, vector<16x128xf32> -> vector<16x128xf32>
    %c0_9 = arith.constant 0 : index
    %c0_10 = arith.constant 0 : index
    %17 = vector.load %arg4[%c0_9, %c0_10] : memref<1x128xf32, #tpu.memory_space<vmem>>, vector<1x128xf32>
    %18 = vector.shape_cast %17 : vector<1x128xf32> to vector<128xf32>
    %19 = vector.shape_cast %18 : vector<128xf32> to vector<1x128xf32>
    %20 = vector.broadcast %19 : vector<1x128xf32> to vector<16x128xf32>
    %21 = arith.addf %16, %20 : vector<16x128xf32>
    %c0_11 = arith.constant 0 : index
    %c0_12 = arith.constant 0 : index
    %22 = vector.load %arg5[%c0_11, %c0_12] : memref<128x128xbf16, #tpu.memory_space<vmem>>, vector<128x128xbf16>
    %cst_13 = arith.constant dense<0.000000e+00> : vector<16x128xf32>
    %23 = tpu.matmul %0, %22, %cst_13 {dimension_numbers = #tpu.dot_dimension_numbers<[1], [0], [0], [1], [0, 0, 1, 1], [], []>} : vector<16x128xbf16>, vector<128x128xbf16>, vector<16x128xf32> -> vector<16x128xf32>
    %c0_14 = arith.constant 0 : index
    %c0_15 = arith.constant 0 : index
    %24 = vector.load %arg6[%c0_14, %c0_15] : memref<1x128xf32, #tpu.memory_space<vmem>>, vector<1x128xf32>
    %25 = vector.shape_cast %24 : vector<1x128xf32> to vector<128xf32>
    %26 = vector.shape_cast %25 : vector<128xf32> to vector<1x128xf32>
    %27 = vector.broadcast %26 : vector<1x128xf32> to vector<16x128xf32>
    %28 = arith.addf %23, %27 : vector<16x128xf32>
    %c0_16 = arith.constant 0 : index
    %c0_17 = arith.constant 0 : index
    %29 = vector.load %arg7[%c0_16, %c0_17] : memref<128x128xbf16, #tpu.memory_space<vmem>>, vector<128x128xbf16>
    %cst_18 = arith.constant dense<0.000000e+00> : vector<16x128xf32>
    %30 = tpu.matmul %0, %29, %cst_18 {dimension_numbers = #tpu.dot_dimension_numbers<[1], [0], [0], [1], [0, 0, 1, 1], [], []>} : vector<16x128xbf16>, vector<128x128xbf16>, vector<16x128xf32> -> vector<16x128xf32>
    %c0_19 = arith.constant 0 : index
    %c0_20 = arith.constant 0 : index
    %31 = vector.load %arg8[%c0_19, %c0_20] : memref<1x128xf32, #tpu.memory_space<vmem>>, vector<1x128xf32>
    %32 = vector.shape_cast %31 : vector<1x128xf32> to vector<128xf32>
    %33 = vector.shape_cast %32 : vector<128xf32> to vector<1x128xf32>
    %34 = vector.broadcast %33 : vector<1x128xf32> to vector<16x128xf32>
    %35 = arith.addf %30, %34 : vector<16x128xf32>
    %36 = arith.truncf %21 : vector<16x128xf32> to vector<16x128xbf16>
    %37 = vector.shape_cast %36 : vector<16x128xbf16> to vector<2x8x4x32xbf16>
    %38 = tpu.transpose %37, [0, 2, 1, 3] : vector<2x8x4x32xbf16> -> vector<2x4x8x32xbf16>
    %39 = vector.shape_cast %38 : vector<2x4x8x32xbf16> to vector<8x8x32xbf16>
    %40 = arith.truncf %28 : vector<16x128xf32> to vector<16x128xbf16>
    %41 = vector.shape_cast %40 : vector<16x128xbf16> to vector<2x8x4x32xbf16>
    %42 = tpu.transpose %41, [0, 2, 1, 3] : vector<2x8x4x32xbf16> -> vector<2x4x8x32xbf16>
    %43 = vector.shape_cast %42 : vector<2x4x8x32xbf16> to vector<8x8x32xbf16>
    %44 = arith.truncf %35 : vector<16x128xf32> to vector<16x128xbf16>
    %45 = vector.shape_cast %44 : vector<16x128xbf16> to vector<2x8x4x32xbf16>
    %46 = tpu.transpose %45, [0, 2, 1, 3] : vector<2x8x4x32xbf16> -> vector<2x4x8x32xbf16>
    %47 = vector.shape_cast %46 : vector<2x4x8x32xbf16> to vector<8x8x32xbf16>
    "tpu.trace_start"() <{level = 10 : i32, message = "bqd,bkd->bqk"}> : () -> ()
    %cst_21 = arith.constant dense<0.000000e+00> : vector<8x8x8xf32>
    %48 = tpu.matmul %39, %43, %cst_21 {dimension_numbers = #tpu.dot_dimension_numbers<[2], [2], [1], [1], [0, 0, 0, 1, 1, 1], [0], [0]>} : vector<8x8x32xbf16>, vector<8x8x32xbf16>, vector<8x8x8xf32> -> vector<8x8x8xf32>
    "tpu.trace_stop"() : () -> ()
    %cst_22 = arith.constant 0.176776692 : f32
    %49 = vector.broadcast %cst_22 : f32 to vector<8x8x8xf32>
    %50 = arith.mulf %48, %49 : vector<8x8x8xf32>
    %51 = vector.broadcast %14 : vector<1x8x8xf32> to vector<8x8x8xf32>
    %52 = arith.addf %50, %51 : vector<8x8x8xf32>
    %cst_23 = arith.constant dense<0xFF800000> : vector<8x8xf32>
    %53 = vector.multi_reduction <maximumf>, %52, %cst_23 [2] : vector<8x8x8xf32> to vector<8x8xf32>
    %54 = vector.shape_cast %53 : vector<8x8xf32> to vector<8x8x1xf32>
    %55 = vector.broadcast %54 : vector<8x8x1xf32> to vector<8x8x8xf32>
    %56 = arith.subf %52, %55 : vector<8x8x8xf32>
    %57 = math.exp %56 : vector<8x8x8xf32>
    %cst_24 = arith.constant dense<0.000000e+00> : vector<8x8xf32>
    %58 = vector.multi_reduction <add>, %57, %cst_24 [2] : vector<8x8x8xf32> to vector<8x8xf32>
    %59 = vector.shape_cast %58 : vector<8x8xf32> to vector<8x8x1xf32>
    %60 = tpu.reciprocal %59 {approx = true} : vector<8x8x1xf32> -> vector<8x8x1xf32>
    %61 = vector.broadcast %60 : vector<8x8x1xf32> to vector<8x8x8xf32>
    %62 = arith.mulf %57, %61 : vector<8x8x8xf32>
    %63 = arith.truncf %62 : vector<8x8x8xf32> to vector<8x8x8xbf16>
    "tpu.trace_start"() <{level = 10 : i32, message = "bqk,bkd->bqd"}> : () -> ()
    %cst_25 = arith.constant dense<0.000000e+00> : vector<8x8x32xf32>
    %64 = tpu.matmul %63, %47, %cst_25 {dimension_numbers = #tpu.dot_dimension_numbers<[2], [1], [1], [2], [0, 0, 0, 1, 1, 2], [0], [0]>} : vector<8x8x8xbf16>, vector<8x8x32xbf16>, vector<8x8x32xf32> -> vector<8x8x32xf32>
    "tpu.trace_stop"() : () -> ()
    %65 = vector.shape_cast %64 : vector<8x8x32xf32> to vector<2x4x8x32xf32>
    %66 = tpu.transpose %65, [0, 2, 1, 3] : vector<2x4x8x32xf32> -> vector<2x8x4x32xf32>
    %67 = vector.shape_cast %66 : vector<2x8x4x32xf32> to vector<16x128xf32>
    %68 = arith.truncf %67 : vector<16x128xf32> to vector<16x128xbf16>
    %c0_26 = arith.constant 0 : index
    %c0_27 = arith.constant 0 : index
    %69 = vector.load %arg9[%c0_26, %c0_27] : memref<128x128xbf16, #tpu.memory_space<vmem>>, vector<128x128xbf16>
    %cst_28 = arith.constant dense<0.000000e+00> : vector<16x128xf32>
    %70 = tpu.matmul %68, %69, %cst_28 {dimension_numbers = #tpu.dot_dimension_numbers<[1], [0], [0], [1], [0, 0, 1, 1], [], []>} : vector<16x128xbf16>, vector<128x128xbf16>, vector<16x128xf32> -> vector<16x128xf32>
    %c0_29 = arith.constant 0 : index
    %c0_30 = arith.constant 0 : index
    %71 = vector.load %arg10[%c0_29, %c0_30] : memref<1x128xf32, #tpu.memory_space<vmem>>, vector<1x128xf32>
    %72 = vector.shape_cast %71 : vector<1x128xf32> to vector<128xf32>
    %73 = vector.shape_cast %72 : vector<128xf32> to vector<1x128xf32>
    %74 = vector.broadcast %73 : vector<1x128xf32> to vector<16x128xf32>
    %75 = arith.addf %70, %74 : vector<16x128xf32>
    %76 = arith.addf %75, %13 : vector<16x128xf32>
    %cst_31 = arith.constant dense<0.000000e+00> : vector<16xf32>
    %77 = vector.multi_reduction <add>, %76, %cst_31 [1] : vector<16x128xf32> to vector<16xf32>
    %78 = vector.shape_cast %77 : vector<16xf32> to vector<16x1xf32>
    %cst_32 = arith.constant 1.280000e+02 : f32
    %79 = vector.broadcast %cst_32 : f32 to vector<16x1xf32>
    %80 = arith.divf %78, %79 : vector<16x1xf32>
    %81 = vector.broadcast %80 : vector<16x1xf32> to vector<16x128xf32>
    %82 = arith.subf %76, %81 : vector<16x128xf32>
    %83 = arith.mulf %82, %82 : vector<16x128xf32>
    %cst_33 = arith.constant dense<0.000000e+00> : vector<16xf32>
    %84 = vector.multi_reduction <add>, %83, %cst_33 [1] : vector<16x128xf32> to vector<16xf32>
    %85 = vector.shape_cast %84 : vector<16xf32> to vector<16x1xf32>
    %cst_34 = arith.constant 1.280000e+02 : f32
    %86 = vector.broadcast %cst_34 : f32 to vector<16x1xf32>
    %87 = arith.divf %85, %86 : vector<16x1xf32>
    %88 = vector.broadcast %80 : vector<16x1xf32> to vector<16x128xf32>
    %89 = arith.subf %76, %88 : vector<16x128xf32>
    %cst_35 = arith.constant 9.99999974E-6 : f32
    %90 = vector.broadcast %cst_35 : f32 to vector<16x1xf32>
    %91 = arith.addf %87, %90 : vector<16x1xf32>
    %92 = math.rsqrt %91 : vector<16x1xf32>
    %93 = vector.broadcast %92 : vector<16x1xf32> to vector<16x128xf32>
    %94 = arith.mulf %89, %93 : vector<16x128xf32>
    %c0_36 = arith.constant 0 : index
    %c0_37 = arith.constant 0 : index
    %95 = vector.load %arg11[%c0_36, %c0_37] : memref<1x128xf32, #tpu.memory_space<vmem>>, vector<1x128xf32>
    %96 = vector.shape_cast %95 : vector<1x128xf32> to vector<128xf32>
    %97 = vector.shape_cast %96 : vector<128xf32> to vector<1x128xf32>
    %98 = vector.broadcast %97 : vector<1x128xf32> to vector<16x128xf32>
    %99 = arith.mulf %94, %98 : vector<16x128xf32>
    %c0_38 = arith.constant 0 : index
    %c0_39 = arith.constant 0 : index
    %100 = vector.load %arg12[%c0_38, %c0_39] : memref<1x128xf32, #tpu.memory_space<vmem>>, vector<1x128xf32>
    %101 = vector.shape_cast %100 : vector<1x128xf32> to vector<128xf32>
    %102 = vector.shape_cast %101 : vector<128xf32> to vector<1x128xf32>
    %103 = vector.broadcast %102 : vector<1x128xf32> to vector<16x128xf32>
    %104 = arith.addf %99, %103 : vector<16x128xf32>
    %105 = arith.truncf %104 : vector<16x128xf32> to vector<16x128xbf16>
    %106 = vector.shape_cast %12 : vector<8x8xf32> to vector<8x1x8xf32>
    %c0_40 = arith.constant 0 : index
    %c0_41 = arith.constant 0 : index
    %107 = vector.load %arg13[%c0_40, %c0_41] : memref<128x128xbf16, #tpu.memory_space<vmem>>, vector<128x128xbf16>
    %cst_42 = arith.constant dense<0.000000e+00> : vector<16x128xf32>
    %108 = tpu.matmul %105, %107, %cst_42 {dimension_numbers = #tpu.dot_dimension_numbers<[1], [0], [0], [1], [0, 0, 1, 1], [], []>} : vector<16x128xbf16>, vector<128x128xbf16>, vector<16x128xf32> -> vector<16x128xf32>
    %c0_43 = arith.constant 0 : index
    %c0_44 = arith.constant 0 : index
    %109 = vector.load %arg14[%c0_43, %c0_44] : memref<1x128xf32, #tpu.memory_space<vmem>>, vector<1x128xf32>
    %110 = vector.shape_cast %109 : vector<1x128xf32> to vector<128xf32>
    %111 = vector.shape_cast %110 : vector<128xf32> to vector<1x128xf32>
    %112 = vector.broadcast %111 : vector<1x128xf32> to vector<16x128xf32>
    %113 = arith.addf %108, %112 : vector<16x128xf32>
    %c0_45 = arith.constant 0 : index
    %c0_46 = arith.constant 0 : index
    %114 = vector.load %arg15[%c0_45, %c0_46] : memref<128x128xbf16, #tpu.memory_space<vmem>>, vector<128x128xbf16>
    %cst_47 = arith.constant dense<0.000000e+00> : vector<16x128xf32>
    %115 = tpu.matmul %1, %114, %cst_47 {dimension_numbers = #tpu.dot_dimension_numbers<[1], [0], [0], [1], [0, 0, 1, 1], [], []>} : vector<16x128xbf16>, vector<128x128xbf16>, vector<16x128xf32> -> vector<16x128xf32>
    %c0_48 = arith.constant 0 : index
    %c0_49 = arith.constant 0 : index
    %116 = vector.load %arg16[%c0_48, %c0_49] : memref<1x128xf32, #tpu.memory_space<vmem>>, vector<1x128xf32>
    %117 = vector.shape_cast %116 : vector<1x128xf32> to vector<128xf32>
    %118 = vector.shape_cast %117 : vector<128xf32> to vector<1x128xf32>
    %119 = vector.broadcast %118 : vector<1x128xf32> to vector<16x128xf32>
    %120 = arith.addf %115, %119 : vector<16x128xf32>
    %c0_50 = arith.constant 0 : index
    %c0_51 = arith.constant 0 : index
    %121 = vector.load %arg17[%c0_50, %c0_51] : memref<128x128xbf16, #tpu.memory_space<vmem>>, vector<128x128xbf16>
    %cst_52 = arith.constant dense<0.000000e+00> : vector<16x128xf32>
    %122 = tpu.matmul %1, %121, %cst_52 {dimension_numbers = #tpu.dot_dimension_numbers<[1], [0], [0], [1], [0, 0, 1, 1], [], []>} : vector<16x128xbf16>, vector<128x128xbf16>, vector<16x128xf32> -> vector<16x128xf32>
    %c0_53 = arith.constant 0 : index
    %c0_54 = arith.constant 0 : index
    %123 = vector.load %arg18[%c0_53, %c0_54] : memref<1x128xf32, #tpu.memory_space<vmem>>, vector<1x128xf32>
    %124 = vector.shape_cast %123 : vector<1x128xf32> to vector<128xf32>
    %125 = vector.shape_cast %124 : vector<128xf32> to vector<1x128xf32>
    %126 = vector.broadcast %125 : vector<1x128xf32> to vector<16x128xf32>
    %127 = arith.addf %122, %126 : vector<16x128xf32>
    %128 = arith.truncf %113 : vector<16x128xf32> to vector<16x128xbf16>
    %129 = vector.shape_cast %128 : vector<16x128xbf16> to vector<2x8x4x32xbf16>
    %130 = tpu.transpose %129, [0, 2, 1, 3] : vector<2x8x4x32xbf16> -> vector<2x4x8x32xbf16>
    %131 = vector.shape_cast %130 : vector<2x4x8x32xbf16> to vector<8x8x32xbf16>
    %132 = arith.truncf %120 : vector<16x128xf32> to vector<16x128xbf16>
    %133 = vector.shape_cast %132 : vector<16x128xbf16> to vector<2x8x4x32xbf16>
    %134 = tpu.transpose %133, [0, 2, 1, 3] : vector<2x8x4x32xbf16> -> vector<2x4x8x32xbf16>
    %135 = vector.shape_cast %134 : vector<2x4x8x32xbf16> to vector<8x8x32xbf16>
    %136 = arith.truncf %127 : vector<16x128xf32> to vector<16x128xbf16>
    %137 = vector.shape_cast %136 : vector<16x128xbf16> to vector<2x8x4x32xbf16>
    %138 = tpu.transpose %137, [0, 2, 1, 3] : vector<2x8x4x32xbf16> -> vector<2x4x8x32xbf16>
    %139 = vector.shape_cast %138 : vector<2x4x8x32xbf16> to vector<8x8x32xbf16>
    "tpu.trace_start"() <{level = 10 : i32, message = "bqd,bkd->bqk"}> : () -> ()
    %cst_55 = arith.constant dense<0.000000e+00> : vector<8x8x8xf32>
    %140 = tpu.matmul %131, %135, %cst_55 {dimension_numbers = #tpu.dot_dimension_numbers<[2], [2], [1], [1], [0, 0, 0, 1, 1, 1], [0], [0]>} : vector<8x8x32xbf16>, vector<8x8x32xbf16>, vector<8x8x8xf32> -> vector<8x8x8xf32>
    "tpu.trace_stop"() : () -> ()
    %cst_56 = arith.constant 0.176776692 : f32
    %141 = vector.broadcast %cst_56 : f32 to vector<8x8x8xf32>
    %142 = arith.mulf %140, %141 : vector<8x8x8xf32>
    %143 = vector.broadcast %106 : vector<8x1x8xf32> to vector<8x8x8xf32>
    %144 = arith.addf %142, %143 : vector<8x8x8xf32>
    %cst_57 = arith.constant dense<0xFF800000> : vector<8x8xf32>
    %145 = vector.multi_reduction <maximumf>, %144, %cst_57 [2] : vector<8x8x8xf32> to vector<8x8xf32>
    %146 = vector.shape_cast %145 : vector<8x8xf32> to vector<8x8x1xf32>
    %147 = vector.broadcast %146 : vector<8x8x1xf32> to vector<8x8x8xf32>
    %148 = arith.subf %144, %147 : vector<8x8x8xf32>
    %149 = math.exp %148 : vector<8x8x8xf32>
    %cst_58 = arith.constant dense<0.000000e+00> : vector<8x8xf32>
    %150 = vector.multi_reduction <add>, %149, %cst_58 [2] : vector<8x8x8xf32> to vector<8x8xf32>
    %151 = vector.shape_cast %150 : vector<8x8xf32> to vector<8x8x1xf32>
    %152 = tpu.reciprocal %151 {approx = true} : vector<8x8x1xf32> -> vector<8x8x1xf32>
    %153 = vector.broadcast %152 : vector<8x8x1xf32> to vector<8x8x8xf32>
    %154 = arith.mulf %149, %153 : vector<8x8x8xf32>
    %155 = arith.truncf %154 : vector<8x8x8xf32> to vector<8x8x8xbf16>
    "tpu.trace_start"() <{level = 10 : i32, message = "bqk,bkd->bqd"}> : () -> ()
    %cst_59 = arith.constant dense<0.000000e+00> : vector<8x8x32xf32>
    %156 = tpu.matmul %155, %139, %cst_59 {dimension_numbers = #tpu.dot_dimension_numbers<[2], [1], [1], [2], [0, 0, 0, 1, 1, 2], [0], [0]>} : vector<8x8x8xbf16>, vector<8x8x32xbf16>, vector<8x8x32xf32> -> vector<8x8x32xf32>
    "tpu.trace_stop"() : () -> ()
    %157 = vector.shape_cast %156 : vector<8x8x32xf32> to vector<2x4x8x32xf32>
    %158 = tpu.transpose %157, [0, 2, 1, 3] : vector<2x4x8x32xf32> -> vector<2x8x4x32xf32>
    %159 = vector.shape_cast %158 : vector<2x8x4x32xf32> to vector<16x128xf32>
    %160 = arith.truncf %159 : vector<16x128xf32> to vector<16x128xbf16>
    %c0_60 = arith.constant 0 : index
    %c0_61 = arith.constant 0 : index
    %161 = vector.load %arg19[%c0_60, %c0_61] : memref<128x128xbf16, #tpu.memory_space<vmem>>, vector<128x128xbf16>
    %cst_62 = arith.constant dense<0.000000e+00> : vector<16x128xf32>
    %162 = tpu.matmul %160, %161, %cst_62 {dimension_numbers = #tpu.dot_dimension_numbers<[1], [0], [0], [1], [0, 0, 1, 1], [], []>} : vector<16x128xbf16>, vector<128x128xbf16>, vector<16x128xf32> -> vector<16x128xf32>
    %c0_63 = arith.constant 0 : index
    %c0_64 = arith.constant 0 : index
    %163 = vector.load %arg20[%c0_63, %c0_64] : memref<1x128xf32, #tpu.memory_space<vmem>>, vector<1x128xf32>
    %164 = vector.shape_cast %163 : vector<1x128xf32> to vector<128xf32>
    %165 = vector.shape_cast %164 : vector<128xf32> to vector<1x128xf32>
    %166 = vector.broadcast %165 : vector<1x128xf32> to vector<16x128xf32>
    %167 = arith.addf %162, %166 : vector<16x128xf32>
    %168 = arith.addf %167, %104 : vector<16x128xf32>
    %cst_65 = arith.constant dense<0.000000e+00> : vector<16xf32>
    %169 = vector.multi_reduction <add>, %168, %cst_65 [1] : vector<16x128xf32> to vector<16xf32>
    %170 = vector.shape_cast %169 : vector<16xf32> to vector<16x1xf32>
    %cst_66 = arith.constant 1.280000e+02 : f32
    %171 = vector.broadcast %cst_66 : f32 to vector<16x1xf32>
    %172 = arith.divf %170, %171 : vector<16x1xf32>
    %173 = vector.broadcast %172 : vector<16x1xf32> to vector<16x128xf32>
    %174 = arith.subf %168, %173 : vector<16x128xf32>
    %175 = arith.mulf %174, %174 : vector<16x128xf32>
    %cst_67 = arith.constant dense<0.000000e+00> : vector<16xf32>
    %176 = vector.multi_reduction <add>, %175, %cst_67 [1] : vector<16x128xf32> to vector<16xf32>
    %177 = vector.shape_cast %176 : vector<16xf32> to vector<16x1xf32>
    %cst_68 = arith.constant 1.280000e+02 : f32
    %178 = vector.broadcast %cst_68 : f32 to vector<16x1xf32>
    %179 = arith.divf %177, %178 : vector<16x1xf32>
    %180 = vector.broadcast %172 : vector<16x1xf32> to vector<16x128xf32>
    %181 = arith.subf %168, %180 : vector<16x128xf32>
    %cst_69 = arith.constant 9.99999974E-6 : f32
    %182 = vector.broadcast %cst_69 : f32 to vector<16x1xf32>
    %183 = arith.addf %179, %182 : vector<16x1xf32>
    %184 = math.rsqrt %183 : vector<16x1xf32>
    %185 = vector.broadcast %184 : vector<16x1xf32> to vector<16x128xf32>
    %186 = arith.mulf %181, %185 : vector<16x128xf32>
    %c0_70 = arith.constant 0 : index
    %c0_71 = arith.constant 0 : index
    %187 = vector.load %arg21[%c0_70, %c0_71] : memref<1x128xf32, #tpu.memory_space<vmem>>, vector<1x128xf32>
    %188 = vector.shape_cast %187 : vector<1x128xf32> to vector<128xf32>
    %189 = vector.shape_cast %188 : vector<128xf32> to vector<1x128xf32>
    %190 = vector.broadcast %189 : vector<1x128xf32> to vector<16x128xf32>
    %191 = arith.mulf %186, %190 : vector<16x128xf32>
    %c0_72 = arith.constant 0 : index
    %c0_73 = arith.constant 0 : index
    %192 = vector.load %arg22[%c0_72, %c0_73] : memref<1x128xf32, #tpu.memory_space<vmem>>, vector<1x128xf32>
    %193 = vector.shape_cast %192 : vector<1x128xf32> to vector<128xf32>
    %194 = vector.shape_cast %193 : vector<128xf32> to vector<1x128xf32>
    %195 = vector.broadcast %194 : vector<1x128xf32> to vector<16x128xf32>
    %196 = arith.addf %191, %195 : vector<16x128xf32>
    %197 = arith.truncf %196 : vector<16x128xf32> to vector<16x128xbf16>
    %c0_74 = arith.constant 0 : index
    %c0_75 = arith.constant 0 : index
    %198 = vector.load %arg23[%c0_74, %c0_75] : memref<128x256xbf16, #tpu.memory_space<vmem>>, vector<128x256xbf16>
    %cst_76 = arith.constant dense<0.000000e+00> : vector<16x256xf32>
    %199 = tpu.matmul %197, %198, %cst_76 {dimension_numbers = #tpu.dot_dimension_numbers<[1], [0], [0], [1], [0, 0, 1, 1], [], []>} : vector<16x128xbf16>, vector<128x256xbf16>, vector<16x256xf32> -> vector<16x256xf32>
    %c0_77 = arith.constant 0 : index
    %c0_78 = arith.constant 0 : index
    %200 = vector.load %arg24[%c0_77, %c0_78] : memref<1x256xf32, #tpu.memory_space<vmem>>, vector<1x256xf32>
    %201 = vector.shape_cast %200 : vector<1x256xf32> to vector<256xf32>
    %202 = vector.shape_cast %201 : vector<256xf32> to vector<1x256xf32>
    %203 = vector.broadcast %202 : vector<1x256xf32> to vector<16x256xf32>
    %204 = arith.addf %199, %203 : vector<16x256xf32>
    %cst_79 = arith.constant 0.000000e+00 : f32
    %205 = vector.broadcast %cst_79 : f32 to vector<16x256xf32>
    %206 = arith.maximumf %204, %205 : vector<16x256xf32>
    %207 = arith.truncf %206 : vector<16x256xf32> to vector<16x256xbf16>
    %c0_80 = arith.constant 0 : index
    %c0_81 = arith.constant 0 : index
    %208 = vector.load %arg25[%c0_80, %c0_81] : memref<256x128xbf16, #tpu.memory_space<vmem>>, vector<256x128xbf16>
    %cst_82 = arith.constant dense<0.000000e+00> : vector<16x128xf32>
    %209 = tpu.matmul %207, %208, %cst_82 {dimension_numbers = #tpu.dot_dimension_numbers<[1], [0], [0], [1], [0, 0, 1, 1], [], []>} : vector<16x256xbf16>, vector<256x128xbf16>, vector<16x128xf32> -> vector<16x128xf32>
    %c0_83 = arith.constant 0 : index
    %c0_84 = arith.constant 0 : index
    %210 = vector.load %arg26[%c0_83, %c0_84] : memref<1x128xf32, #tpu.memory_space<vmem>>, vector<1x128xf32>
    %211 = vector.shape_cast %210 : vector<1x128xf32> to vector<128xf32>
    %212 = vector.shape_cast %211 : vector<128xf32> to vector<1x128xf32>
    %213 = vector.broadcast %212 : vector<1x128xf32> to vector<16x128xf32>
    %214 = arith.addf %209, %213 : vector<16x128xf32>
    %215 = arith.addf %214, %196 : vector<16x128xf32>
    %cst_85 = arith.constant dense<0.000000e+00> : vector<16xf32>
    %216 = vector.multi_reduction <add>, %215, %cst_85 [1] : vector<16x128xf32> to vector<16xf32>
    %217 = vector.shape_cast %216 : vector<16xf32> to vector<16x1xf32>
    %cst_86 = arith.constant 1.280000e+02 : f32
    %218 = vector.broadcast %cst_86 : f32 to vector<16x1xf32>
    %219 = arith.divf %217, %218 : vector<16x1xf32>
    %220 = vector.broadcast %219 : vector<16x1xf32> to vector<16x128xf32>
    %221 = arith.subf %215, %220 : vector<16x128xf32>
    %222 = arith.mulf %221, %221 : vector<16x128xf32>
    %cst_87 = arith.constant dense<0.000000e+00> : vector<16xf32>
    %223 = vector.multi_reduction <add>, %222, %cst_87 [1] : vector<16x128xf32> to vector<16xf32>
    %224 = vector.shape_cast %223 : vector<16xf32> to vector<16x1xf32>
    %cst_88 = arith.constant 1.280000e+02 : f32
    %225 = vector.broadcast %cst_88 : f32 to vector<16x1xf32>
    %226 = arith.divf %224, %225 : vector<16x1xf32>
    %227 = vector.broadcast %219 : vector<16x1xf32> to vector<16x128xf32>
    %228 = arith.subf %215, %227 : vector<16x128xf32>
    %cst_89 = arith.constant 9.99999974E-6 : f32
    %229 = vector.broadcast %cst_89 : f32 to vector<16x1xf32>
    %230 = arith.addf %226, %229 : vector<16x1xf32>
    %231 = math.rsqrt %230 : vector<16x1xf32>
    %232 = vector.broadcast %231 : vector<16x1xf32> to vector<16x128xf32>
    %233 = arith.mulf %228, %232 : vector<16x128xf32>
    %c0_90 = arith.constant 0 : index
    %c0_91 = arith.constant 0 : index
    %234 = vector.load %arg27[%c0_90, %c0_91] : memref<1x128xf32, #tpu.memory_space<vmem>>, vector<1x128xf32>
    %235 = vector.shape_cast %234 : vector<1x128xf32> to vector<128xf32>
    %236 = vector.shape_cast %235 : vector<128xf32> to vector<1x128xf32>
    %237 = vector.broadcast %236 : vector<1x128xf32> to vector<16x128xf32>
    %238 = arith.mulf %233, %237 : vector<16x128xf32>
    %c0_92 = arith.constant 0 : index
    %c0_93 = arith.constant 0 : index
    %239 = vector.load %arg28[%c0_92, %c0_93] : memref<1x128xf32, #tpu.memory_space<vmem>>, vector<1x128xf32>
    %240 = vector.shape_cast %239 : vector<1x128xf32> to vector<128xf32>
    %241 = vector.shape_cast %240 : vector<128xf32> to vector<1x128xf32>
    %242 = vector.broadcast %241 : vector<1x128xf32> to vector<16x128xf32>
    %243 = arith.addf %238, %242 : vector<16x128xf32>
    %c0_94 = arith.constant 0 : index
    %c0_95 = arith.constant 0 : index
    %244 = vector.load %arg29[%c0_94, %c0_95] : memref<16x128xf32, #tpu.memory_space<vmem>>, vector<16x128xf32>
    tpu.vector_store %arg29[%c0_94, %c0_95], %243 {strides = array<i32>} : memref<16x128xf32, #tpu.memory_space<vmem>>, vector<16x128xf32>,
    return
  }
}

</mosaic_0001>

<llo_original>
// kernel: tpu_custom_call.1
$region0: #{tpu_custom_call.1}
  #allocation0 [shape = 'u32[]', space=smem, size = 0x4, offset = 0x4, fixed_abs, tag = 'smem constant byte address 0x4 - core index']
  #allocation1 [shape = 'u32[144,128]{1,0:T(1,128)}', space=vmem, size = 0x12000, scoped, tag = 'internal scratch']
  %s0 = inlined_call_operand.smem [shape: u32[30], index: -1, kind: input, shape index: {}]
  %s1 = sld [smem:[%s0]]
  %s2 = scalar_lea.smem %s0, 1
  %s3 = sld [smem:[%s2]]
  %s4 = scalar_lea.smem %s0, 2
  %s5 = sld [smem:[%s4]]
  %s6 = scalar_lea.smem %s0, 3
  %s7 = sld [smem:[%s6]]
  %s8 = scalar_lea.smem %s0, 4
  %s9 = sld [smem:[%s8]]
  %s10 = scalar_lea.smem %s0, 5
  %s11 = sld [smem:[%s10]]
  %s12 = scalar_lea.smem %s0, 6
  %s13 = sld [smem:[%s12]]
  %s14 = scalar_lea.smem %s0, 7
  %s15 = sld [smem:[%s14]]
  %s16 = scalar_lea.smem %s0, 8
  %s17 = sld [smem:[%s16]]
  %s18 = scalar_lea.smem %s0, 9
  %s19 = sld [smem:[%s18]]
  %s20 = scalar_lea.smem %s0, 10
  %s21 = sld [smem:[%s20]]
  %s22 = scalar_lea.smem %s0, 11
  %s23 = sld [smem:[%s22]]
  %s24 = scalar_lea.smem %s0, 12
  %s25 = sld [smem:[%s24]]
  %s26 = scalar_lea.smem %s0, 13
  %s27 = sld [smem:[%s26]]
  %s28 = scalar_lea.smem %s0, 14
  %s29 = sld [smem:[%s28]]
  %s30 = scalar_lea.smem %s0, 15
  %s31 = sld [smem:[%s30]]
  %s32 = scalar_lea.smem %s0, 16
  %s33 = sld [smem:[%s32]]
  %s34 = scalar_lea.smem %s0, 17
  %s35 = sld [smem:[%s34]]
  %s36 = scalar_lea.smem %s0, 18
  %s37 = sld [smem:[%s36]]
  %s38 = scalar_lea.smem %s0, 19
  %s39 = sld [smem:[%s38]]
  %s40 = scalar_lea.smem %s0, 20
  %s41 = sld [smem:[%s40]]
  %s42 = scalar_lea.smem %s0, 21
  %s43 = sld [smem:[%s42]]
  %s44 = scalar_lea.smem %s0, 22
  %s45 = sld [smem:[%s44]]
  %s46 = scalar_lea.smem %s0, 23
  %s47 = sld [smem:[%s46]]
  %s48 = scalar_lea.smem %s0, 24
  %s49 = sld [smem:[%s48]]
  %s50 = scalar_lea.smem %s0, 25
  %s51 = sld [smem:[%s50]]
  %s52 = scalar_lea.smem %s0, 26
  %s53 = sld [smem:[%s52]]
  %s54 = scalar_lea.smem %s0, 27
  %s55 = sld [smem:[%s54]]
  %s56 = scalar_lea.smem %s0, 28
  %s57 = sld [smem:[%s56]]
  %s58 = scalar_lea.smem %s0, 29
  %s59 = sld [smem:[%s58]]
  %s60 = sld [smem:[#allocation0]]
  $region174: #{tpu_custom_call.1} parent=0
    _
  %s62 = ssub.s32 1, %s60
  %s63 = scalar_select 0, %s62, %s60
  $region1: #{tpu_custom_call.1} parent=0
    #allocation2 [shape = 'u8[4096]{0}', space=vmem, size = 0x1000, scoped, tag = 'input window, operand 0, single buffered']
    #allocation3 [shape = 's32[1]{0}', space=sflag, size = 0x4, scoped, tag = 'scoped memory for tpu_custom_call.1']
    #allocation4 [shape = 's32[1]{0}', space=sflag, size = 0x4, scoped, tag = 'scoped memory for tpu_custom_call.1']
    #allocation5 [shape = 'u8[4096]{0}', space=vmem, size = 0x1000, scoped, tag = 'input window, operand 1, single buffered']
    #allocation6 [shape = 's32[1]{0}', space=sflag, size = 0x4, scoped, tag = 'scoped memory for tpu_custom_call.1']
    #allocation7 [shape = 'u8[32768]{0}', space=vmem, size = 0x8000, scoped, tag = 'input window, operand 3, single buffered']
    #allocation8 [shape = 'u8[32768]{0}', space=vmem, size = 0x8000, scoped, tag = 'input window, operand 5, single buffered']
    #allocation9 [shape = 's32[1]{0}', space=sflag, size = 0x4, scoped, tag = 'scoped memory for tpu_custom_call.1']
    #allocation10 [shape = 'u8[32768]{0}', space=vmem, size = 0x8000, scoped, tag = 'input window, operand 7, single buffered']
    #allocation11 [shape = 'u8[32768]{0}', space=vmem, size = 0x8000, scoped, tag = 'input window, operand 9, single buffered']
    #allocation12 [shape = 's32[1]{0}', space=sflag, size = 0x4, scoped, tag = 'scoped memory for tpu_custom_call.1']
    #allocation13 [shape = 'u8[32768]{0}', space=vmem, size = 0x8000, scoped, tag = 'input window, operand 13, single buffered']
    #allocation14 [shape = 'u8[32768]{0}', space=vmem, size = 0x8000, scoped, tag = 'input window, operand 15, single buffered']
    #allocation15 [shape = 's32[1]{0}', space=sflag, size = 0x4, scoped, tag = 'scoped memory for tpu_custom_call.1']
    #allocation16 [shape = 'u8[32768]{0}', space=vmem, size = 0x8000, scoped, tag = 'input window, operand 17, single buffered']
    #allocation17 [shape = 'u8[32768]{0}', space=vmem, size = 0x8000, scoped, tag = 'input window, operand 19, single buffered']
    #allocation18 [shape = 's32[1]{0}', space=sflag, size = 0x4, scoped, tag = 'scoped memory for tpu_custom_call.1']
    #allocation19 [shape = 'u8[65536]{0}', space=vmem, size = 0x10000, scoped, tag = 'input window, operand 23, single buffered']
    #allocation20 [shape = 'u8[65536]{0}', space=vmem, size = 0x10000, scoped, tag = 'input window, operand 25, single buffered']
    #allocation21 [shape = 's32[1]{0}', space=sflag, size = 0x4, scoped, tag = 'scoped memory for tpu_custom_call.1']
    #allocation22 [shape = 'u8[8192]{0}', space=vmem, size = 0x2000, scoped, tag = 'output window, operand 0, single buffered']
    %64 = vsyncpa [#allocation3], 0
    %65 = vsyncpa [#allocation6], 0
    %66 = vsyncpa [#allocation9], 0
    %67 = vsyncpa [#allocation12], 0
    %68 = vsyncpa [#allocation15], 0
    %69 = vsyncpa [#allocation18], 0
    %70 = vsyncpa [#allocation21], 0
    %71 = vsyncpa [#allocation4], 0
    // Predicated region
    $region2: #{tpu_custom_call.1} parent=1 // pred_check
      _
    $region3: #{tpu_custom_call.1} parent=1 // pred_check_branch
      %73 = sbr.rel (0) target = $region5
    $region4: #{tpu_custom_call.1} parent=1 // pred_region
      %s75 = ssub.s32 128, 128
      %76 = vsyncadd [#allocation3], %s75
      %s77 = sshll.u32 [#allocation2], 4
      %s78 = int_to_ptr.vmem [resolvable:$true] %s77
      %83 = dma.hbm_to_vmem [thread:$0]  %s1, 128, %s78, [#allocation3], 64, 64, 4
    $region5: #{tpu_custom_call.1} parent=1 // pred_fallthru
      _
    // Predicated region
    $region6: #{tpu_custom_call.1} parent=1 // pred_check
      _
    $region7: #{tpu_custom_call.1} parent=1 // pred_check_branch
      %85 = sbr.rel (0) target = $region9
    $region8: #{tpu_custom_call.1} parent=1 // pred_region
      %s87 = ssub.s32 128, 128
      %88 = vsyncadd [#allocation6], %s87
      %s89 = sshll.u32 [#allocation5], 4
      %s90 = int_to_ptr.vmem [resolvable:$true] %s89
      %95 = dma.hbm_to_vmem [thread:$0]  %s3, 128, %s90, [#allocation6], 64, 64, 4
    $region9: #{tpu_custom_call.1} parent=1 // pred_fallthru
      _
    // Predicated region
    $region10: #{tpu_custom_call.1} parent=1 // pred_check
      _
    $region11: #{tpu_custom_call.1} parent=1 // pred_check_branch
      %97 = sbr.rel (0) target = $region13
    $region12: #{tpu_custom_call.1} parent=1 // pred_region
      _
    $region13: #{tpu_custom_call.1} parent=1 // pred_fallthru
      _
    // Predicated region
    $region14: #{tpu_custom_call.1} parent=1 // pred_check
      _
    $region15: #{tpu_custom_call.1} parent=1 // pred_check_branch
      %99 = sbr.rel (0) target = $region17
    $region16: #{tpu_custom_call.1} parent=1 // pred_region
      %s101 = ssub.s32 1024, 1024
      %102 = vsyncadd [#allocation6], %s101
      %s103 = sshll.u32 [#allocation7], 4
      %s104 = int_to_ptr.vmem [resolvable:$true] %s103
      %109 = dma.hbm_to_vmem [thread:$0]  %s7, 1024, %s104, [#allocation6], 64, 64, 4
    $region17: #{tpu_custom_call.1} parent=1 // pred_fallthru
      _
    // Predicated region
    $region18: #{tpu_custom_call.1} parent=1 // pred_check
      _
    $region19: #{tpu_custom_call.1} parent=1 // pred_check_branch
      %111 = sbr.rel (0) target = $region21
    $region20: #{tpu_custom_call.1} parent=1 // pred_region
      _
    $region21: #{tpu_custom_call.1} parent=1 // pred_fallthru
      _
    // Predicated region
    $region22: #{tpu_custom_call.1} parent=1 // pred_check
      _
    $region23: #{tpu_custom_call.1} parent=1 // pred_check_branch
      %113 = sbr.rel (0) target = $region25
    $region24: #{tpu_custom_call.1} parent=1 // pred_region
      %s115 = ssub.s32 1024, 1024
      %116 = vsyncadd [#allocation9], %s115
      %s117 = sshll.u32 [#allocation8], 4
      %s118 = int_to_ptr.vmem [resolvable:$true] %s117
      %123 = dma.hbm_to_vmem [thread:$0]  %s11, 1024, %s118, [#allocation9], 64, 64, 4
    $region25: #{tpu_custom_call.1} parent=1 // pred_fallthru
      _
    // Predicated region
    $region26: #{tpu_custom_call.1} parent=1 // pred_check
      _
    $region27: #{tpu_custom_call.1} parent=1 // pred_check_branch
      %125 = sbr.rel (0) target = $region29
    $region28: #{tpu_custom_call.1} parent=1 // pred_region
      _
    $region29: #{tpu_custom_call.1} parent=1 // pred_fallthru
      _
    // Predicated region
    $region30: #{tpu_custom_call.1} parent=1 // pred_check
      _
    $region31: #{tpu_custom_call.1} parent=1 // pred_check_branch
      %127 = sbr.rel (0) target = $region33
    $region32: #{tpu_custom_call.1} parent=1 // pred_region
      %s129 = ssub.s32 1024, 1024
      %130 = vsyncadd [#allocation9], %s129
      %s131 = sshll.u32 [#allocation10], 4
      %s132 = int_to_ptr.vmem [resolvable:$true] %s131
      %137 = dma.hbm_to_vmem [thread:$0]  %s15, 1024, %s132, [#allocation9], 64, 64, 4
    $region33: #{tpu_custom_call.1} parent=1 // pred_fallthru
      _
    // Predicated region
    $region34: #{tpu_custom_call.1} parent=1 // pred_check
      _
    $region35: #{tpu_custom_call.1} parent=1 // pred_check_branch
      %139 = sbr.rel (0) target = $region37
    $region36: #{tpu_custom_call.1} parent=1 // pred_region
      _
    $region37: #{tpu_custom_call.1} parent=1 // pred_fallthru
      _
    // Predicated region
    $region38: #{tpu_custom_call.1} parent=1 // pred_check
      _
    $region39: #{tpu_custom_call.1} parent=1 // pred_check_branch
      %141 = sbr.rel (0) target = $region41
    $region40: #{tpu_custom_call.1} parent=1 // pred_region
      %s143 = ssub.s32 1024, 1024
      %144 = vsyncadd [#allocation12], %s143
      %s145 = sshll.u32 [#allocation11], 4
      %s146 = int_to_ptr.vmem [resolvable:$true] %s145
      %151 = dma.hbm_to_vmem [thread:$0]  %s19, 1024, %s146, [#allocation12], 64, 64, 4
    $region41: #{tpu_custom_call.1} parent=1 // pred_fallthru
      _
    // Predicated region
    $region42: #{tpu_custom_call.1} parent=1 // pred_check
      _
    $region43: #{tpu_custom_call.1} parent=1 // pred_check_branch
      %153 = sbr.rel (0) target = $region45
    $region44: #{tpu_custom_call.1} parent=1 // pred_region
      _
    $region45: #{tpu_custom_call.1} parent=1 // pred_fallthru
      _
    // Predicated region
    $region46: #{tpu_custom_call.1} parent=1 // pred_check
      _
    $region47: #{tpu_custom_call.1} parent=1 // pred_check_branch
      %155 = sbr.rel (0) target = $region49
    $region48: #{tpu_custom_call.1} parent=1 // pred_region
      _
    $region49: #{tpu_custom_call.1} parent=1 // pred_fallthru
      _
    // Predicated region
    $region50: #{tpu_custom_call.1} parent=1 // pred_check
      _
    $region51: #{tpu_custom_call.1} parent=1 // pred_check_branch
      %157 = sbr.rel (0) target = $region53
    $region52: #{tpu_custom_call.1} parent=1 // pred_region
      _
    $region53: #{tpu_custom_call.1} parent=1 // pred_fallthru
      _
    // Predicated region
    $region54: #{tpu_custom_call.1} parent=1 // pred_check
      _
    $region55: #{tpu_custom_call.1} parent=1 // pred_check_branch
      %159 = sbr.rel (0) target = $region57
    $region56: #{tpu_custom_call.1} parent=1 // pred_region
      %s161 = ssub.s32 1024, 1024
      %162 = vsyncadd [#allocation12], %s161
      %s163 = sshll.u32 [#allocation13], 4
      %s164 = int_to_ptr.vmem [resolvable:$true] %s163
      %169 = dma.hbm_to_vmem [thread:$0]  %s27, 1024, %s164, [#allocation12], 64, 64, 4
    $region57: #{tpu_custom_call.1} parent=1 // pred_fallthru
      _
    // Predicated region
    $region58: #{tpu_custom_call.1} parent=1 // pred_check
      _
    $region59: #{tpu_custom_call.1} parent=1 // pred_check_branch
      %171 = sbr.rel (0) target = $region61
    $region60: #{tpu_custom_call.1} parent=1 // pred_region
      _
    $region61: #{tpu_custom_call.1} parent=1 // pred_fallthru
      _
    // Predicated region
    $region62: #{tpu_custom_call.1} parent=1 // pred_check
      _
    $region63: #{tpu_custom_call.1} parent=1 // pred_check_branch
      %173 = sbr.rel (0) target = $region65
    $region64: #{tpu_custom_call.1} parent=1 // pred_region
      %s175 = ssub.s32 1024, 1024
      %176 = vsyncadd [#allocation15], %s175
      %s177 = sshll.u32 [#allocation14], 4
      %s178 = int_to_ptr.vmem [resolvable:$true] %s177
      %183 = dma.hbm_to_vmem [thread:$0]  %s31, 1024, %s178, [#allocation15], 64, 64, 4
    $region65: #{tpu_custom_call.1} parent=1 // pred_fallthru
      _
    // Predicated region
    $region66: #{tpu_custom_call.1} parent=1 // pred_check
      _
    $region67: #{tpu_custom_call.1} parent=1 // pred_check_branch
      %185 = sbr.rel (0) target = $region69
    $region68: #{tpu_custom_call.1} parent=1 // pred_region
      _
    $region69: #{tpu_custom_call.1} parent=1 // pred_fallthru
      _
    // Predicated region
    $region70: #{tpu_custom_call.1} parent=1 // pred_check
      _
    $region71: #{tpu_custom_call.1} parent=1 // pred_check_branch
      %187 = sbr.rel (0) target = $region73
    $region72: #{tpu_custom_call.1} parent=1 // pred_region
      %s189 = ssub.s32 1024, 1024
      %190 = vsyncadd [#allocation15], %s189
      %s191 = sshll.u32 [#allocation16], 4
      %s192 = int_to_ptr.vmem [resolvable:$true] %s191
      %197 = dma.hbm_to_vmem [thread:$0]  %s35, 1024, %s192, [#allocation15], 64, 64, 4
    $region73: #{tpu_custom_call.1} parent=1 // pred_fallthru
      _
    // Predicated region
    $region74: #{tpu_custom_call.1} parent=1 // pred_check
      _
    $region75: #{tpu_custom_call.1} parent=1 // pred_check_branch
      %199 = sbr.rel (0) target = $region77
    $region76: #{tpu_custom_call.1} parent=1 // pred_region
      _
    $region77: #{tpu_custom_call.1} parent=1 // pred_fallthru
      _
    // Predicated region
    $region78: #{tpu_custom_call.1} parent=1 // pred_check
      _
    $region79: #{tpu_custom_call.1} parent=1 // pred_check_branch
      %201 = sbr.rel (0) target = $region81
    $region80: #{tpu_custom_call.1} parent=1 // pred_region
      %s203 = ssub.s32 1024, 1024
      %204 = vsyncadd [#allocation18], %s203
      %s205 = sshll.u32 [#allocation17], 4
      %s206 = int_to_ptr.vmem [resolvable:$true] %s205
      %211 = dma.hbm_to_vmem [thread:$0]  %s39, 1024, %s206, [#allocation18], 64, 64, 4
    $region81: #{tpu_custom_call.1} parent=1 // pred_fallthru
      _
    // Predicated region
    $region82: #{tpu_custom_call.1} parent=1 // pred_check
      _
    $region83: #{tpu_custom_call.1} parent=1 // pred_check_branch
      %213 = sbr.rel (0) target = $region85
    $region84: #{tpu_custom_call.1} parent=1 // pred_region
      _
    $region85: #{tpu_custom_call.1} parent=1 // pred_fallthru
      _
    // Predicated region
    $region86: #{tpu_custom_call.1} parent=1 // pred_check
      _
    $region87: #{tpu_custom_call.1} parent=1 // pred_check_branch
      %215 = sbr.rel (0) target = $region89
    $region88: #{tpu_custom_call.1} parent=1 // pred_region
      _
    $region89: #{tpu_custom_call.1} parent=1 // pred_fallthru
      _
    // Predicated region
    $region90: #{tpu_custom_call.1} parent=1 // pred_check
      _
    $region91: #{tpu_custom_call.1} parent=1 // pred_check_branch
      %217 = sbr.rel (0) target = $region93
    $region92: #{tpu_custom_call.1} parent=1 // pred_region
      _
    $region93: #{tpu_custom_call.1} parent=1 // pred_fallthru
      _
    // Predicated region
    $region94: #{tpu_custom_call.1} parent=1 // pred_check
      _
    $region95: #{tpu_custom_call.1} parent=1 // pred_check_branch
      %219 = sbr.rel (0) target = $region97
    $region96: #{tpu_custom_call.1} parent=1 // pred_region
      %s221 = ssub.s32 2048, 2048
      %222 = vsyncadd [#allocation18], %s221
      %s223 = sshll.u32 [#allocation19], 4
      %s224 = int_to_ptr.vmem [resolvable:$true] %s223
      %229 = dma.hbm_to_vmem [thread:$0]  %s47, 2048, %s224, [#allocation18], 128, 128, 8
    $region97: #{tpu_custom_call.1} parent=1 // pred_fallthru
      _
    // Predicated region
    $region98: #{tpu_custom_call.1} parent=1 // pred_check
      _
    $region99: #{tpu_custom_call.1} parent=1 // pred_check_branch
      %231 = sbr.rel (0) target = $region101
    $region100: #{tpu_custom_call.1} parent=1 // pred_region
      _
    $region101: #{tpu_custom_call.1} parent=1 // pred_fallthru
      _
    // Predicated region
    $region102: #{tpu_custom_call.1} parent=1 // pred_check
      _
    $region103: #{tpu_custom_call.1} parent=1 // pred_check_branch
      %233 = sbr.rel (0) target = $region105
    $region104: #{tpu_custom_call.1} parent=1 // pred_region
      %s235 = ssub.s32 2048, 2048
      %236 = vsyncadd [#allocation21], %s235
      %s237 = sshll.u32 [#allocation20], 4
      %s238 = int_to_ptr.vmem [resolvable:$true] %s237
      %243 = dma.hbm_to_vmem [thread:$0]  %s51, 2048, %s238, [#allocation21], 64, 64, 4
    $region105: #{tpu_custom_call.1} parent=1 // pred_fallthru
      _
    // Predicated region
    $region106: #{tpu_custom_call.1} parent=1 // pred_check
      _
    $region107: #{tpu_custom_call.1} parent=1 // pred_check_branch
      %245 = sbr.rel (0) target = $region109
    $region108: #{tpu_custom_call.1} parent=1 // pred_region
      _
    $region109: #{tpu_custom_call.1} parent=1 // pred_fallthru
      _
    // Predicated region
    $region110: #{tpu_custom_call.1} parent=1 // pred_check
      _
    $region111: #{tpu_custom_call.1} parent=1 // pred_check_branch
      %247 = sbr.rel (0) target = $region113
    $region112: #{tpu_custom_call.1} parent=1 // pred_region
      _
    $region113: #{tpu_custom_call.1} parent=1 // pred_fallthru
      _
    // Predicated region
    $region114: #{tpu_custom_call.1} parent=1 // pred_check
      _
    $region115: #{tpu_custom_call.1} parent=1 // pred_check_branch
      %249 = sbr.rel (0) target = $region117
    $region116: #{tpu_custom_call.1} parent=1 // pred_region
      _
    $region117: #{tpu_custom_call.1} parent=1 // pred_fallthru
      _
    // Predicated region
    $region118: #{tpu_custom_call.1} parent=1 // pred_check
      _
    $region119: #{tpu_custom_call.1} parent=1 // pred_check_branch
      %251 = sbr.rel (0) target = $region121
    $region120: #{tpu_custom_call.1} parent=1 // pred_region
      %252 = dma.done [#allocation3], 128
    $region121: #{tpu_custom_call.1} parent=1 // pred_fallthru
      _
    // Predicated region
    $region122: #{tpu_custom_call.1} parent=1 // pred_check
      _
    $region123: #{tpu_custom_call.1} parent=1 // pred_check_branch
      %254 = sbr.rel (0) target = $region125
    $region124: #{tpu_custom_call.1} parent=1 // pred_region
      %255 = dma.done [#allocation6], 128
    $region125: #{tpu_custom_call.1} parent=1 // pred_fallthru
      _
    // Predicated region
    $region126: #{tpu_custom_call.1} parent=1 // pred_check
      _
    $region127: #{tpu_custom_call.1} parent=1 // pred_check_branch
      %257 = sbr.rel (0) target = $region129
    $region128: #{tpu_custom_call.1} parent=1 // pred_region
      %258 = dma.done [#allocation6], 1024
    $region129: #{tpu_custom_call.1} parent=1 // pred_fallthru
      _
    // Predicated region
    $region130: #{tpu_custom_call.1} parent=1 // pred_check
      _
    $region131: #{tpu_custom_call.1} parent=1 // pred_check_branch
      %260 = sbr.rel (0) target = $region133
    $region132: #{tpu_custom_call.1} parent=1 // pred_region
      %261 = dma.done [#allocation9], 1024
    $region133: #{tpu_custom_call.1} parent=1 // pred_fallthru
      _
    // Predicated region
    $region134: #{tpu_custom_call.1} parent=1 // pred_check
      _
    $region135: #{tpu_custom_call.1} parent=1 // pred_check_branch
      %263 = sbr.rel (0) target = $region137
    $region136: #{tpu_custom_call.1} parent=1 // pred_region
      %264 = dma.done [#allocation9], 1024
    $region137: #{tpu_custom_call.1} parent=1 // pred_fallthru
      _
    // Predicated region
    $region138: #{tpu_custom_call.1} parent=1 // pred_check
      _
    $region139: #{tpu_custom_call.1} parent=1 // pred_check_branch
      %266 = sbr.rel (0) target = $region141
    $region140: #{tpu_custom_call.1} parent=1 // pred_region
      %267 = dma.done [#allocation12], 1024
    $region141: #{tpu_custom_call.1} parent=1 // pred_fallthru
      _
    // Predicated region
    $region142: #{tpu_custom_call.1} parent=1 // pred_check
      _
    $region143: #{tpu_custom_call.1} parent=1 // pred_check_branch
      %269 = sbr.rel (0) target = $region145
    $region144: #{tpu_custom_call.1} parent=1 // pred_region
      %270 = dma.done [#allocation12], 1024
    $region145: #{tpu_custom_call.1} parent=1 // pred_fallthru
      _
    // Predicated region
    $region146: #{tpu_custom_call.1} parent=1 // pred_check
      _
    $region147: #{tpu_custom_call.1} parent=1 // pred_check_branch
      %272 = sbr.rel (0) target = $region149
    $region148: #{tpu_custom_call.1} parent=1 // pred_region
      %273 = dma.done [#allocation15], 1024
    $region149: #{tpu_custom_call.1} parent=1 // pred_fallthru
      _
    // Predicated region
    $region150: #{tpu_custom_call.1} parent=1 // pred_check
      _
    $region151: #{tpu_custom_call.1} parent=1 // pred_check_branch
      %275 = sbr.rel (0) target = $region153
    $region152: #{tpu_custom_call.1} parent=1 // pred_region
      %276 = dma.done [#allocation15], 1024
    $region153: #{tpu_custom_call.1} parent=1 // pred_fallthru
      _
    // Predicated region
    $region154: #{tpu_custom_call.1} parent=1 // pred_check
      _
    $region155: #{tpu_custom_call.1} parent=1 // pred_check_branch
      %278 = sbr.rel (0) target = $region157
    $region156: #{tpu_custom_call.1} parent=1 // pred_region
      %279 = dma.done [#allocation18], 1024
    $region157: #{tpu_custom_call.1} parent=1 // pred_fallthru
      _
    // Predicated region
    $region158: #{tpu_custom_call.1} parent=1 // pred_check
      _
    $region159: #{tpu_custom_call.1} parent=1 // pred_check_branch
      %281 = sbr.rel (0) target = $region161
    $region160: #{tpu_custom_call.1} parent=1 // pred_region
      %282 = dma.done [#allocation18], 2048
    $region161: #{tpu_custom_call.1} parent=1 // pred_fallthru
      _
    // Predicated region
    $region162: #{tpu_custom_call.1} parent=1 // pred_check
      _
    $region163: #{tpu_custom_call.1} parent=1 // pred_check_branch
      %284 = sbr.rel (0) target = $region165
    $region164: #{tpu_custom_call.1} parent=1 // pred_region
      %285 = dma.done [#allocation21], 2048
    $region165: #{tpu_custom_call.1} parent=1 // pred_fallthru
      _
    %v287 = vld [vmem:[#allocation2] sm:$0xf]
    %v288 = vld [vmem:[#allocation2 + $0x4] sm:$0xf]
    %v289 = vld [vmem:[#allocation5] sm:$0xf]
    %v290 = vld [vmem:[#allocation5 + $0x4] sm:$0xf]
    %v291 = vlaneseq
    %v292 = vshrl.u32 %v291, 7
    %v293 = vlaneseq
    %v294 = vand.u32 %v293, 127
    %vm295 = vcmp.ge.s32.totalorder %v292, %v294
    %v296 = vsel %vm295, 0.0, -1e+09
    %v297 = vld [vmem:[%s5] sm:$0x3]
    %v300 = vunpack.c.l.s4 1966171168
    %v301 = vunpack.c.0.s8 %v300
    %v302 = vlaneseq
    %v303 = vshrl.u32 %v302, 7
    %v304 = vsub.s32 %v301, %v303
    %v305 = vrot.slane %v297, %v304
    %v306 = vcombine.high %v305, %v305
    %v308 = vunpack.c.l.s4 1966171168
    %v309 = vunpack.c.0.s8 %v308
    %v310 = vlaneseq
    %v311 = vshrl.u32 %v310, 7
    %v312 = vsub.s32 %v309, %v311
    %v313 = vrot.slane %v305, %v312
    %v315 = vunpack.c.l.s4 1966171168
    %v316 = vunpack.c.0.s8 %v315
    %v317 = vlaneseq
    %v318 = vshrl.u32 %v317, 7
    %v319 = vsub.s32 %v316, %v318
    %v320 = vrot.slane %v306, %v319
    %v321 = vlaneseq
    %v322 = vshrl.u32 %v321, 7
    %v323 = vsub.s32 0, %v322
    %v324 = vrot.slane %v313, %v323
    %v325 = vlaneseq
    %v326 = vshrl.u32 %v325, 7
    %v327 = vsub.s32 0, %v326
    %v328 = vrot.slane %v320, %v327
    %v329 = vunpack.c.l.bf16 %v287
    %v330 = vunpack.c.l.bf16 %v288
    %v331 = vld [vmem:[#allocation7] sm:$0xf]
    %v332 = vld [vmem:[#allocation7 + $0x4] sm:$0xf]
    %v333 = vld [vmem:[#allocation7 + $0x8] sm:$0xf]
    %v334 = vld [vmem:[#allocation7 + $0xc] sm:$0xf]
    %v335 = vld [vmem:[#allocation7 + $0x10] sm:$0xf]
    %v336 = vld [vmem:[#allocation7 + $0x14] sm:$0xf]
    %v337 = vld [vmem:[#allocation7 + $0x18] sm:$0xf]
    %v338 = vld [vmem:[#allocation7 + $0x1c] sm:$0xf]
    %v339 = vld [vmem:[#allocation7 + $0x20] sm:$0xf]
    %v340 = vld [vmem:[#allocation7 + $0x24] sm:$0xf]
    %v341 = vld [vmem:[#allocation7 + $0x28] sm:$0xf]
    %v342 = vld [vmem:[#allocation7 + $0x2c] sm:$0xf]
    %v343 = vld [vmem:[#allocation7 + $0x30] sm:$0xf]
    %v344 = vld [vmem:[#allocation7 + $0x34] sm:$0xf]
    %v345 = vld [vmem:[#allocation7 + $0x38] sm:$0xf]
    %v346 = vld [vmem:[#allocation7 + $0x3c] sm:$0xf]
    %v347 = vld [vmem:[%s9] sm:$0x1]
    %v349 = vlaneseq
    %v350 = vshrl.u32 %v349, 7
    %v351 = vsub.s32 0, %v350
    %v352 = vrot.slane %v347, %v351
    %v356 = vunpack.c.l.b16 %v287
    %v357 = vunpack.c.l.b16 %v288
    %v358 = vpack.c.b16 %v357, %v356
    %v376 = vunpack.c.l.b16 %v331
    %v377 = vunpack.c.l.b16 %v332
    %v378 = vunpack.c.l.b16 %v333
    %v379 = vunpack.c.l.b16 %v334
    %v380 = vunpack.c.l.b16 %v335
    %v381 = vunpack.c.l.b16 %v336
    %v382 = vunpack.c.l.b16 %v337
    %v383 = vunpack.c.l.b16 %v338
    %v384 = vunpack.c.l.b16 %v339
    %v385 = vunpack.c.l.b16 %v340
    %v386 = vunpack.c.l.b16 %v341
    %v387 = vunpack.c.l.b16 %v342
    %v388 = vunpack.c.l.b16 %v343
    %v389 = vunpack.c.l.b16 %v344
    %v390 = vunpack.c.l.b16 %v345
    %v391 = vunpack.c.l.b16 %v346
    %v392 = vpack.c.b16 %v377, %v376
    %v393 = vpack.c.b16 %v379, %v378
    %v394 = vpack.c.b16 %v381, %v380
    %v395 = vpack.c.b16 %v383, %v382
    %v396 = vpack.c.b16 %v385, %v384
    %v397 = vpack.c.b16 %v387, %v386
    %v398 = vpack.c.b16 %v389, %v388
    %v399 = vpack.c.b16 %v391, %v390
    %408 = vmatprep.subr.bf16.mxu0 0
    %409 = vmatpush1.bf16.msra.mxu0 %v399
    %410 = vmatprep.subr.bf16.mxu0 0
    %411 = vmatpush1.bf16.msra.mxu0 %v398
    %412 = vmatprep.subr.bf16.mxu0 0
    %413 = vmatpush1.bf16.msra.mxu0 %v397
    %414 = vmatprep.subr.bf16.mxu0 0
    %415 = vmatpush1.bf16.msra.mxu0 %v396
    %416 = vmatprep.subr.bf16.mxu0 0
    %417 = vmatpush1.bf16.msra.mxu0 %v395
    %418 = vmatprep.subr.bf16.mxu0 0
    %419 = vmatpush1.bf16.msra.mxu0 %v394
    %420 = vmatprep.subr.bf16.mxu0 0
    %421 = vmatpush1.bf16.msra.mxu0 %v393
    %422 = vmatprep.subr.bf16.mxu0 0
    %423 = vmatpush1.bf16.msra.mxu0 %v392
    %424 = vmatprep.subr.bf16.mxu0 0
    %425 = vmatpush2.bf16.msra.mxu0 0
    %426 = vmatprep.subr.bf16.mxu0 0
    %427 = vmatpush2.bf16.msra.mxu0 0
    %428 = vmatprep.subr.bf16.mxu0 0
    %429 = vmatpush2.bf16.msra.mxu0 0
    %430 = vmatprep.subr.bf16.mxu0 0
    %431 = vmatpush2.bf16.msra.mxu0 0
    %432 = vmatprep.subr.bf16.mxu0 0
    %433 = vmatpush2.bf16.msra.mxu0 0
    %434 = vmatprep.subr.bf16.mxu0 0
    %435 = vmatpush2.bf16.msra.mxu0 0
    %436 = vmatprep.subr.bf16.mxu0 0
    %437 = vmatpush2.bf16.msra.mxu0 0
    %438 = vmatprep.subr.bf16.mxu0 0
    %439 = vmatpush2.bf16.msra.mxu0 0
    %440 = vmatprep.mubr.bf16.mxu0 0
    %441 = vmatmul.mubr.bf16.gmra.mxu0 %v358
    %v442 = vpop.f32.mrf.mxu0
    %v443 = vadd.f32 %v352, %v442
    %v444 = vpop.f32.mrf.mxu0
    %v445 = vpop.f32.mrf.mxu0
    %v446 = vadd.f32 %v352, %v445
    %v447 = vpop.f32.mrf.mxu0
    %448 = vdwg.mxu0
    %v449 = vld [vmem:[#allocation8] sm:$0xf]
    %v450 = vld [vmem:[#allocation8 + $0x4] sm:$0xf]
    %v451 = vld [vmem:[#allocation8 + $0x8] sm:$0xf]
    %v452 = vld [vmem:[#allocation8 + $0xc] sm:$0xf]
    %v453 = vld [vmem:[#allocation8 + $0x10] sm:$0xf]
    %v454 = vld [vmem:[#allocation8 + $0x14] sm:$0xf]
    %v455 = vld [vmem:[#allocation8 + $0x18] sm:$0xf]
    %v456 = vld [vmem:[#allocation8 + $0x1c] sm:$0xf]
    %v457 = vld [vmem:[#allocation8 + $0x20] sm:$0xf]
    %v458 = vld [vmem:[#allocation8 + $0x24] sm:$0xf]
    %v459 = vld [vmem:[#allocation8 + $0x28] sm:$0xf]
    %v460 = vld [vmem:[#allocation8 + $0x2c] sm:$0xf]
    %v461 = vld [vmem:[#allocation8 + $0x30] sm:$0xf]
    %v462 = vld [vmem:[#allocation8 + $0x34] sm:$0xf]
    %v463 = vld [vmem:[#allocation8 + $0x38] sm:$0xf]
    %v464 = vld [vmem:[#allocation8 + $0x3c] sm:$0xf]
    %v465 = vld [vmem:[%s13] sm:$0x1]
    %v467 = vlaneseq
    %v468 = vshrl.u32 %v467, 7
    %v469 = vsub.s32 0, %v468
    %v470 = vrot.slane %v465, %v469
    %v488 = vunpack.c.l.b16 %v449
    %v489 = vunpack.c.l.b16 %v450
    %v490 = vunpack.c.l.b16 %v451
    %v491 = vunpack.c.l.b16 %v452
    %v492 = vunpack.c.l.b16 %v453
    %v493 = vunpack.c.l.b16 %v454
    %v494 = vunpack.c.l.b16 %v455
    %v495 = vunpack.c.l.b16 %v456
    %v496 = vunpack.c.l.b16 %v457
    %v497 = vunpack.c.l.b16 %v458
    %v498 = vunpack.c.l.b16 %v459
    %v499 = vunpack.c.l.b16 %v460
    %v500 = vunpack.c.l.b16 %v461
    %v501 = vunpack.c.l.b16 %v462
    %v502 = vunpack.c.l.b16 %v463
    %v503 = vunpack.c.l.b16 %v464
    %v504 = vpack.c.b16 %v489, %v488
    %v505 = vpack.c.b16 %v491, %v490
    %v506 = vpack.c.b16 %v493, %v492
    %v507 = vpack.c.b16 %v495, %v494
    %v508 = vpack.c.b16 %v497, %v496
    %v509 = vpack.c.b16 %v499, %v498
    %v510 = vpack.c.b16 %v501, %v500
    %v511 = vpack.c.b16 %v503, %v502
    %520 = vmatprep.subr.bf16.mxu0 0
    %521 = vmatpush1.bf16.msra.mxu0 %v511
    %522 = vmatprep.subr.bf16.mxu0 0
    %523 = vmatpush1.bf16.msra.mxu0 %v510
    %524 = vmatprep.subr.bf16.mxu0 0
    %525 = vmatpush1.bf16.msra.mxu0 %v509
    %526 = vmatprep.subr.bf16.mxu0 0
    %527 = vmatpush1.bf16.msra.mxu0 %v508
    %528 = vmatprep.subr.bf16.mxu0 0
    %529 = vmatpush1.bf16.msra.mxu0 %v507
    %530 = vmatprep.subr.bf16.mxu0 0
    %531 = vmatpush1.bf16.msra.mxu0 %v506
    %532 = vmatprep.subr.bf16.mxu0 0
    %533 = vmatpush1.bf16.msra.mxu0 %v505
    %534 = vmatprep.subr.bf16.mxu0 0
    %535 = vmatpush1.bf16.msra.mxu0 %v504
    %536 = vmatprep.subr.bf16.mxu0 0
    %537 = vmatpush2.bf16.msra.mxu0 0
    %538 = vmatprep.subr.bf16.mxu0 0
    %539 = vmatpush2.bf16.msra.mxu0 0
    %540 = vmatprep.subr.bf16.mxu0 0
    %541 = vmatpush2.bf16.msra.mxu0 0
    %542 = vmatprep.subr.bf16.mxu0 0
    %543 = vmatpush2.bf16.msra.mxu0 0
    %544 = vmatprep.subr.bf16.mxu0 0
    %545 = vmatpush2.bf16.msra.mxu0 0
    %546 = vmatprep.subr.bf16.mxu0 0
    %547 = vmatpush2.bf16.msra.mxu0 0
    %548 = vmatprep.subr.bf16.mxu0 0
    %549 = vmatpush2.bf16.msra.mxu0 0
    %550 = vmatprep.subr.bf16.mxu0 0
    %551 = vmatpush2.bf16.msra.mxu0 0
    %552 = vmatprep.mubr.bf16.mxu0 0
    %553 = vmatmul.mubr.bf16.gmra.mxu0 %v358
    %v554 = vpop.f32.mrf.mxu0
    %v555 = vadd.f32 %v470, %v554
    %v556 = vpop.f32.mrf.mxu0
    %v557 = vpop.f32.mrf.mxu0
    %v558 = vadd.f32 %v470, %v557
    %v559 = vpop.f32.mrf.mxu0
    %560 = vdwg.mxu0
    %v561 = vld [vmem:[#allocation10] sm:$0xf]
    %v562 = vld [vmem:[#allocation10 + $0x4] sm:$0xf]
    %v563 = vld [vmem:[#allocation10 + $0x8] sm:$0xf]
    %v564 = vld [vmem:[#allocation10 + $0xc] sm:$0xf]
    %v565 = vld [vmem:[#allocation10 + $0x10] sm:$0xf]
    %v566 = vld [vmem:[#allocation10 + $0x14] sm:$0xf]
    %v567 = vld [vmem:[#allocation10 + $0x18] sm:$0xf]
    %v568 = vld [vmem:[#allocation10 + $0x1c] sm:$0xf]
    %v569 = vld [vmem:[#allocation10 + $0x20] sm:$0xf]
    %v570 = vld [vmem:[#allocation10 + $0x24] sm:$0xf]
    %v571 = vld [vmem:[#allocation10 + $0x28] sm:$0xf]
    %v572 = vld [vmem:[#allocation10 + $0x2c] sm:$0xf]
    %v573 = vld [vmem:[#allocation10 + $0x30] sm:$0xf]
    %v574 = vld [vmem:[#allocation10 + $0x34] sm:$0xf]
    %v575 = vld [vmem:[#allocation10 + $0x38] sm:$0xf]
    %v576 = vld [vmem:[#allocation10 + $0x3c] sm:$0xf]
    %v577 = vld [vmem:[%s17] sm:$0x1]
    %v579 = vlaneseq
    %v580 = vshrl.u32 %v579, 7
    %v581 = vsub.s32 0, %v580
    %v582 = vrot.slane %v577, %v581
    %v600 = vunpack.c.l.b16 %v561
    %v601 = vunpack.c.l.b16 %v562
    %v602 = vunpack.c.l.b16 %v563
    %v603 = vunpack.c.l.b16 %v564
    %v604 = vunpack.c.l.b16 %v565
    %v605 = vunpack.c.l.b16 %v566
    %v606 = vunpack.c.l.b16 %v567
    %v607 = vunpack.c.l.b16 %v568
    %v608 = vunpack.c.l.b16 %v569
    %v609 = vunpack.c.l.b16 %v570
    %v610 = vunpack.c.l.b16 %v571
    %v611 = vunpack.c.l.b16 %v572
    %v612 = vunpack.c.l.b16 %v573
    %v613 = vunpack.c.l.b16 %v574
    %v614 = vunpack.c.l.b16 %v575
    %v615 = vunpack.c.l.b16 %v576
    %v616 = vpack.c.b16 %v601, %v600
    %v617 = vpack.c.b16 %v603, %v602
    %v618 = vpack.c.b16 %v605, %v604
    %v619 = vpack.c.b16 %v607, %v606
    %v620 = vpack.c.b16 %v609, %v608
    %v621 = vpack.c.b16 %v611, %v610
    %v622 = vpack.c.b16 %v613, %v612
    %v623 = vpack.c.b16 %v615, %v614
    %632 = vmatprep.subr.bf16.mxu0 0
    %633 = vmatpush1.bf16.msra.mxu0 %v623
    %634 = vmatprep.subr.bf16.mxu0 0
    %635 = vmatpush1.bf16.msra.mxu0 %v622
    %636 = vmatprep.subr.bf16.mxu0 0
    %637 = vmatpush1.bf16.msra.mxu0 %v621
    %638 = vmatprep.subr.bf16.mxu0 0
    %639 = vmatpush1.bf16.msra.mxu0 %v620
    %640 = vmatprep.subr.bf16.mxu0 0
    %641 = vmatpush1.bf16.msra.mxu0 %v619
    %642 = vmatprep.subr.bf16.mxu0 0
    %643 = vmatpush1.bf16.msra.mxu0 %v618
    %644 = vmatprep.subr.bf16.mxu0 0
    %645 = vmatpush1.bf16.msra.mxu0 %v617
    %646 = vmatprep.subr.bf16.mxu0 0
    %647 = vmatpush1.bf16.msra.mxu0 %v616
    %648 = vmatprep.subr.bf16.mxu0 0
    %649 = vmatpush2.bf16.msra.mxu0 0
    %650 = vmatprep.subr.bf16.mxu0 0
    %651 = vmatpush2.bf16.msra.mxu0 0
    %652 = vmatprep.subr.bf16.mxu0 0
    %653 = vmatpush2.bf16.msra.mxu0 0
    %654 = vmatprep.subr.bf16.mxu0 0
    %655 = vmatpush2.bf16.msra.mxu0 0
    %656 = vmatprep.subr.bf16.mxu0 0
    %657 = vmatpush2.bf16.msra.mxu0 0
    %658 = vmatprep.subr.bf16.mxu0 0
    %659 = vmatpush2.bf16.msra.mxu0 0
    %660 = vmatprep.subr.bf16.mxu0 0
    %661 = vmatpush2.bf16.msra.mxu0 0
    %662 = vmatprep.subr.bf16.mxu0 0
    %663 = vmatpush2.bf16.msra.mxu0 0
    %664 = vmatprep.mubr.bf16.mxu0 0
    %665 = vmatmul.mubr.bf16.gmra.mxu0 %v358
    %v666 = vpop.f32.mrf.mxu0
    %v667 = vadd.f32 %v582, %v666
    %v668 = vpop.f32.mrf.mxu0
    %v669 = vpop.f32.mrf.mxu0
    %v670 = vadd.f32 %v582, %v669
    %v671 = vpop.f32.mrf.mxu0
    %672 = vdwg.mxu0
    %v673 = vpack.c.bf16 %v446, %v443
    %675 = vrot.lane.b32.xlu0 %v673, 96
    %v676 = vpop.permute.xlu0 %675
    %677 = vrot.lane.b32.xlu0 %v673, 64
    %v678 = vpop.permute.xlu0 %677
    %679 = vrot.lane.b32.xlu0 %v673, 32
    %v680 = vpop.permute.xlu0 %679
    %v683 = vpack.i.b16 %v676, %v673
    %v685 = vshrl.u32 %v673, 16
    %v686 = vshrl.u32 %v676, 16
    %v687 = vpack.i.b16 %v686, %v685
    %v691 = vpack.i.b16 %v680, %v678
    %v693 = vshrl.u32 %v678, 16
    %v694 = vshrl.u32 %v680, 16
    %v695 = vpack.i.b16 %v694, %v693
    %v698 = vpack.i.b16 0, 0
    %v700 = vshrl.u32 0, 16
    %v701 = vpack.i.b16 %v700, %v700
    %v703 = vcombine.high %v683, %v698
    %v705 = vunpack.c.l.s4 1983009808
    %v706 = vunpack.c.0.s8 %v705
    %v707 = vlaneseq
    %v708 = vshrl.u32 %v707, 7
    %v709 = vsub.s32 %v706, %v708
    %v710 = vrot.slane %v683, %v709
    %v712 = vunpack.c.l.s4 1983009808
    %v713 = vunpack.c.0.s8 %v712
    %v714 = vlaneseq
    %v715 = vshrl.u32 %v714, 7
    %v716 = vsub.s32 %v713, %v715
    %v717 = vrot.slane %v703, %v716
    %v718 = vcombine.high %v691, %v698
    %v720 = vunpack.c.l.s4 1983009808
    %v721 = vunpack.c.0.s8 %v720
    %v722 = vlaneseq
    %v723 = vshrl.u32 %v722, 7
    %v724 = vsub.s32 %v721, %v723
    %v725 = vrot.slane %v691, %v724
    %v727 = vunpack.c.l.s4 1983009808
    %v728 = vunpack.c.0.s8 %v727
    %v729 = vlaneseq
    %v730 = vshrl.u32 %v729, 7
    %v731 = vsub.s32 %v728, %v730
    %v732 = vrot.slane %v718, %v731
    %v733 = vcombine.low %v710, %v725
    %v734 = vcombine.high %v710, %v725
    %v736 = vunpack.c.l.s4 1934713408
    %v737 = vunpack.c.0.s8 %v736
    %v738 = vlaneseq
    %v739 = vshrl.u32 %v738, 7
    %v740 = vsub.s32 %v737, %v739
    %v741 = vrot.slane %v733, %v740
    %v743 = vunpack.c.l.s4 1934713408
    %v744 = vunpack.c.0.s8 %v743
    %v745 = vlaneseq
    %v746 = vshrl.u32 %v745, 7
    %v747 = vsub.s32 %v744, %v746
    %v748 = vrot.slane %v734, %v747
    %v749 = vcombine.low %v717, %v732
    %v750 = vcombine.high %v717, %v732
    %v752 = vunpack.c.l.s4 1934713408
    %v753 = vunpack.c.0.s8 %v752
    %v754 = vlaneseq
    %v755 = vshrl.u32 %v754, 7
    %v756 = vsub.s32 %v753, %v755
    %v757 = vrot.slane %v749, %v756
    %v759 = vunpack.c.l.s4 1934713408
    %v760 = vunpack.c.0.s8 %v759
    %v761 = vlaneseq
    %v762 = vshrl.u32 %v761, 7
    %v763 = vsub.s32 %v760, %v762
    %v764 = vrot.slane %v750, %v763
    %v765 = vcombine.high %v741, 0
    %v766 = vcombine.high %v748, 0
    %v767 = vcombine.high %v757, 0
    %v768 = vcombine.high %v764, 0
    %v769 = vcombine.high %v687, %v701
    %v771 = vunpack.c.l.s4 1983009808
    %v772 = vunpack.c.0.s8 %v771
    %v773 = vlaneseq
    %v774 = vshrl.u32 %v773, 7
    %v775 = vsub.s32 %v772, %v774
    %v776 = vrot.slane %v687, %v775
    %v778 = vunpack.c.l.s4 1983009808
    %v779 = vunpack.c.0.s8 %v778
    %v780 = vlaneseq
    %v781 = vshrl.u32 %v780, 7
    %v782 = vsub.s32 %v779, %v781
    %v783 = vrot.slane %v769, %v782
    %v784 = vcombine.high %v695, %v701
    %v786 = vunpack.c.l.s4 1983009808
    %v787 = vunpack.c.0.s8 %v786
    %v788 = vlaneseq
    %v789 = vshrl.u32 %v788, 7
    %v790 = vsub.s32 %v787, %v789
    %v791 = vrot.slane %v695, %v790
    %v793 = vunpack.c.l.s4 1983009808
    %v794 = vunpack.c.0.s8 %v793
    %v795 = vlaneseq
    %v796 = vshrl.u32 %v795, 7
    %v797 = vsub.s32 %v794, %v796
    %v798 = vrot.slane %v784, %v797
    %v799 = vcombine.low %v776, %v791
    %v800 = vcombine.high %v776, %v791
    %v802 = vunpack.c.l.s4 1934713408
    %v803 = vunpack.c.0.s8 %v802
    %v804 = vlaneseq
    %v805 = vshrl.u32 %v804, 7
    %v806 = vsub.s32 %v803, %v805
    %v807 = vrot.slane %v799, %v806
    %v809 = vunpack.c.l.s4 1934713408
    %v810 = vunpack.c.0.s8 %v809
    %v811 = vlaneseq
    %v812 = vshrl.u32 %v811, 7
    %v813 = vsub.s32 %v810, %v812
    %v814 = vrot.slane %v800, %v813
    %v815 = vcombine.low %v783, %v798
    %v816 = vcombine.high %v783, %v798
    %v818 = vunpack.c.l.s4 1934713408
    %v819 = vunpack.c.0.s8 %v818
    %v820 = vlaneseq
    %v821 = vshrl.u32 %v820, 7
    %v822 = vsub.s32 %v819, %v821
    %v823 = vrot.slane %v815, %v822
    %v825 = vunpack.c.l.s4 1934713408
    %v826 = vunpack.c.0.s8 %v825
    %v827 = vlaneseq
    %v828 = vshrl.u32 %v827, 7
    %v829 = vsub.s32 %v826, %v828
    %v830 = vrot.slane %v816, %v829
    %v831 = vcombine.high %v807, 0
    %v832 = vcombine.high %v814, 0
    %v833 = vcombine.high %v823, 0
    %v834 = vcombine.high %v830, 0
    %v835 = vcombine.low %v741, %v748
    %v837 = vunpack.c.l.s4 1983009808
    %v838 = vunpack.c.0.s8 %v837
    %v839 = vlaneseq
    %v840 = vshrl.u32 %v839, 7
    %v841 = vsub.s32 %v838, %v840
    %v842 = vrot.slane %v835, %v841
    %v843 = vcombine.low %v765, %v766
    %v845 = vunpack.c.l.s4 1983009808
    %v846 = vunpack.c.0.s8 %v845
    %v847 = vlaneseq
    %v848 = vshrl.u32 %v847, 7
    %v849 = vsub.s32 %v846, %v848
    %v850 = vrot.slane %v843, %v849
    %v851 = vcombine.low %v842, %v850
    %v853 = vunpack.c.l.s4 1934713408
    %v854 = vunpack.c.0.s8 %v853
    %v855 = vlaneseq
    %v856 = vshrl.u32 %v855, 7
    %v857 = vsub.s32 %v854, %v856
    %v858 = vrot.slane %v851, %v857
    %v859 = vcombine.high %v858, 0
    %v860 = vcombine.low %v807, %v814
    %v862 = vunpack.c.l.s4 1983009808
    %v863 = vunpack.c.0.s8 %v862
    %v864 = vlaneseq
    %v865 = vshrl.u32 %v864, 7
    %v866 = vsub.s32 %v863, %v865
    %v867 = vrot.slane %v860, %v866
    %v868 = vcombine.low %v831, %v832
    %v870 = vunpack.c.l.s4 1983009808
    %v871 = vunpack.c.0.s8 %v870
    %v872 = vlaneseq
    %v873 = vshrl.u32 %v872, 7
    %v874 = vsub.s32 %v871, %v873
    %v875 = vrot.slane %v868, %v874
    %v876 = vcombine.low %v867, %v875
    %v878 = vunpack.c.l.s4 1934713408
    %v879 = vunpack.c.0.s8 %v878
    %v880 = vlaneseq
    %v881 = vshrl.u32 %v880, 7
    %v882 = vsub.s32 %v879, %v881
    %v883 = vrot.slane %v876, %v882
    %v884 = vcombine.high %v883, 0
    %v885 = vcombine.low %v757, %v764
    %v887 = vunpack.c.l.s4 1983009808
    %v888 = vunpack.c.0.s8 %v887
    %v889 = vlaneseq
    %v890 = vshrl.u32 %v889, 7
    %v891 = vsub.s32 %v888, %v890
    %v892 = vrot.slane %v885, %v891
    %v893 = vcombine.low %v767, %v768
    %v895 = vunpack.c.l.s4 1983009808
    %v896 = vunpack.c.0.s8 %v895
    %v897 = vlaneseq
    %v898 = vshrl.u32 %v897, 7
    %v899 = vsub.s32 %v896, %v898
    %v900 = vrot.slane %v893, %v899
    %v901 = vcombine.low %v892, %v900
    %v903 = vunpack.c.l.s4 1934713408
    %v904 = vunpack.c.0.s8 %v903
    %v905 = vlaneseq
    %v906 = vshrl.u32 %v905, 7
    %v907 = vsub.s32 %v904, %v906
    %v908 = vrot.slane %v901, %v907
    %v909 = vcombine.high %v908, 0
    %v910 = vcombine.low %v823, %v830
    %v912 = vunpack.c.l.s4 1983009808
    %v913 = vunpack.c.0.s8 %v912
    %v914 = vlaneseq
    %v915 = vshrl.u32 %v914, 7
    %v916 = vsub.s32 %v913, %v915
    %v917 = vrot.slane %v910, %v916
    %v918 = vcombine.low %v833, %v834
    %v920 = vunpack.c.l.s4 1983009808
    %v921 = vunpack.c.0.s8 %v920
    %v922 = vlaneseq
    %v923 = vshrl.u32 %v922, 7
    %v924 = vsub.s32 %v921, %v923
    %v925 = vrot.slane %v918, %v924
    %v926 = vcombine.low %v917, %v925
    %v928 = vunpack.c.l.s4 1934713408
    %v929 = vunpack.c.0.s8 %v928
    %v930 = vlaneseq
    %v931 = vshrl.u32 %v930, 7
    %v932 = vsub.s32 %v929, %v931
    %v933 = vrot.slane %v926, %v932
    %v934 = vcombine.high %v933, 0
    %v937 = vpack.i.b16 %v883, %v858
    %v938 = vshrl.u32 %v858, 16
    %v939 = vshrl.u32 %v883, 16
    %v940 = vpack.i.b16 %v939, %v938
    %v943 = vpack.i.b16 %v884, %v859
    %v944 = vshrl.u32 %v859, 16
    %v945 = vshrl.u32 %v884, 16
    %v946 = vpack.i.b16 %v945, %v944
    %v949 = vpack.i.b16 %v933, %v908
    %v950 = vshrl.u32 %v908, 16
    %v951 = vshrl.u32 %v933, 16
    %v952 = vpack.i.b16 %v951, %v950
    %v955 = vpack.i.b16 %v934, %v909
    %v956 = vshrl.u32 %v909, 16
    %v957 = vshrl.u32 %v934, 16
    %v958 = vpack.i.b16 %v957, %v956
    %v959 = vpack.c.bf16 %v558, %v555
    %961 = vrot.lane.b32.xlu0 %v959, 96
    %v962 = vpop.permute.xlu0 %961
    %963 = vrot.lane.b32.xlu0 %v959, 64
    %v964 = vpop.permute.xlu0 %963
    %965 = vrot.lane.b32.xlu0 %v959, 32
    %v966 = vpop.permute.xlu0 %965
    %v969 = vpack.i.b16 %v962, %v959
    %v971 = vshrl.u32 %v959, 16
    %v972 = vshrl.u32 %v962, 16
    %v973 = vpack.i.b16 %v972, %v971
    %v977 = vpack.i.b16 %v966, %v964
    %v979 = vshrl.u32 %v964, 16
    %v980 = vshrl.u32 %v966, 16
    %v981 = vpack.i.b16 %v980, %v979
    %v983 = vcombine.high %v969, %v698
    %v985 = vunpack.c.l.s4 1983009808
    %v986 = vunpack.c.0.s8 %v985
    %v987 = vlaneseq
    %v988 = vshrl.u32 %v987, 7
    %v989 = vsub.s32 %v986, %v988
    %v990 = vrot.slane %v969, %v989
    %v992 = vunpack.c.l.s4 1983009808
    %v993 = vunpack.c.0.s8 %v992
    %v994 = vlaneseq
    %v995 = vshrl.u32 %v994, 7
    %v996 = vsub.s32 %v993, %v995
    %v997 = vrot.slane %v983, %v996
    %v998 = vcombine.high %v977, %v698
    %v1000 = vunpack.c.l.s4 1983009808
    %v1001 = vunpack.c.0.s8 %v1000
    %v1002 = vlaneseq
    %v1003 = vshrl.u32 %v1002, 7
    %v1004 = vsub.s32 %v1001, %v1003
    %v1005 = vrot.slane %v977, %v1004
    %v1007 = vunpack.c.l.s4 1983009808
    %v1008 = vunpack.c.0.s8 %v1007
    %v1009 = vlaneseq
    %v1010 = vshrl.u32 %v1009, 7
    %v1011 = vsub.s32 %v1008, %v1010
    %v1012 = vrot.slane %v998, %v1011
    %v1013 = vcombine.low %v990, %v1005
    %v1014 = vcombine.high %v990, %v1005
    %v1016 = vunpack.c.l.s4 1934713408
    %v1017 = vunpack.c.0.s8 %v1016
    %v1018 = vlaneseq
    %v1019 = vshrl.u32 %v1018, 7
    %v1020 = vsub.s32 %v1017, %v1019
    %v1021 = vrot.slane %v1013, %v1020
    %v1023 = vunpack.c.l.s4 1934713408
    %v1024 = vunpack.c.0.s8 %v1023
    %v1025 = vlaneseq
    %v1026 = vshrl.u32 %v1025, 7
    %v1027 = vsub.s32 %v1024, %v1026
    %v1028 = vrot.slane %v1014, %v1027
    %v1029 = vcombine.low %v997, %v1012
    %v1030 = vcombine.high %v997, %v1012
    %v1032 = vunpack.c.l.s4 1934713408
    %v1033 = vunpack.c.0.s8 %v1032
    %v1034 = vlaneseq
    %v1035 = vshrl.u32 %v1034, 7
    %v1036 = vsub.s32 %v1033, %v1035
    %v1037 = vrot.slane %v1029, %v1036
    %v1039 = vunpack.c.l.s4 1934713408
    %v1040 = vunpack.c.0.s8 %v1039
    %v1041 = vlaneseq
    %v1042 = vshrl.u32 %v1041, 7
    %v1043 = vsub.s32 %v1040, %v1042
    %v1044 = vrot.slane %v1030, %v1043
    %v1045 = vcombine.high %v1021, 0
    %v1046 = vcombine.high %v1028, 0
    %v1047 = vcombine.high %v1037, 0
    %v1048 = vcombine.high %v1044, 0
    %v1049 = vcombine.high %v973, %v701
    %v1051 = vunpack.c.l.s4 1983009808
    %v1052 = vunpack.c.0.s8 %v1051
    %v1053 = vlaneseq
    %v1054 = vshrl.u32 %v1053, 7
    %v1055 = vsub.s32 %v1052, %v1054
    %v1056 = vrot.slane %v973, %v1055
    %v1058 = vunpack.c.l.s4 1983009808
    %v1059 = vunpack.c.0.s8 %v1058
    %v1060 = vlaneseq
    %v1061 = vshrl.u32 %v1060, 7
    %v1062 = vsub.s32 %v1059, %v1061
    %v1063 = vrot.slane %v1049, %v1062
    %v1064 = vcombine.high %v981, %v701
    %v1066 = vunpack.c.l.s4 1983009808
    %v1067 = vunpack.c.0.s8 %v1066
    %v1068 = vlaneseq
    %v1069 = vshrl.u32 %v1068, 7
    %v1070 = vsub.s32 %v1067, %v1069
    %v1071 = vrot.slane %v981, %v1070
    %v1073 = vunpack.c.l.s4 1983009808
    %v1074 = vunpack.c.0.s8 %v1073
    %v1075 = vlaneseq
    %v1076 = vshrl.u32 %v1075, 7
    %v1077 = vsub.s32 %v1074, %v1076
    %v1078 = vrot.slane %v1064, %v1077
    %v1079 = vcombine.low %v1056, %v1071
    %v1080 = vcombine.high %v1056, %v1071
    %v1082 = vunpack.c.l.s4 1934713408
    %v1083 = vunpack.c.0.s8 %v1082
    %v1084 = vlaneseq
    %v1085 = vshrl.u32 %v1084, 7
    %v1086 = vsub.s32 %v1083, %v1085
    %v1087 = vrot.slane %v1079, %v1086
    %v1089 = vunpack.c.l.s4 1934713408
    %v1090 = vunpack.c.0.s8 %v1089
    %v1091 = vlaneseq
    %v1092 = vshrl.u32 %v1091, 7
    %v1093 = vsub.s32 %v1090, %v1092
    %v1094 = vrot.slane %v1080, %v1093
    %v1095 = vcombine.low %v1063, %v1078
    %v1096 = vcombine.high %v1063, %v1078
    %v1098 = vunpack.c.l.s4 1934713408
    %v1099 = vunpack.c.0.s8 %v1098
    %v1100 = vlaneseq
    %v1101 = vshrl.u32 %v1100, 7
    %v1102 = vsub.s32 %v1099, %v1101
    %v1103 = vrot.slane %v1095, %v1102
    %v1105 = vunpack.c.l.s4 1934713408
    %v1106 = vunpack.c.0.s8 %v1105
    %v1107 = vlaneseq
    %v1108 = vshrl.u32 %v1107, 7
    %v1109 = vsub.s32 %v1106, %v1108
    %v1110 = vrot.slane %v1096, %v1109
    %v1111 = vcombine.high %v1087, 0
    %v1112 = vcombine.high %v1094, 0
    %v1113 = vcombine.high %v1103, 0
    %v1114 = vcombine.high %v1110, 0
    %v1115 = vcombine.low %v1021, %v1028
    %v1117 = vunpack.c.l.s4 1983009808
    %v1118 = vunpack.c.0.s8 %v1117
    %v1119 = vlaneseq
    %v1120 = vshrl.u32 %v1119, 7
    %v1121 = vsub.s32 %v1118, %v1120
    %v1122 = vrot.slane %v1115, %v1121
    %v1123 = vcombine.low %v1045, %v1046
    %v1125 = vunpack.c.l.s4 1983009808
    %v1126 = vunpack.c.0.s8 %v1125
    %v1127 = vlaneseq
    %v1128 = vshrl.u32 %v1127, 7
    %v1129 = vsub.s32 %v1126, %v1128
    %v1130 = vrot.slane %v1123, %v1129
    %v1131 = vcombine.low %v1122, %v1130
    %v1133 = vunpack.c.l.s4 1934713408
    %v1134 = vunpack.c.0.s8 %v1133
    %v1135 = vlaneseq
    %v1136 = vshrl.u32 %v1135, 7
    %v1137 = vsub.s32 %v1134, %v1136
    %v1138 = vrot.slane %v1131, %v1137
    %v1139 = vcombine.high %v1138, 0
    %v1140 = vcombine.low %v1087, %v1094
    %v1142 = vunpack.c.l.s4 1983009808
    %v1143 = vunpack.c.0.s8 %v1142
    %v1144 = vlaneseq
    %v1145 = vshrl.u32 %v1144, 7
    %v1146 = vsub.s32 %v1143, %v1145
    %v1147 = vrot.slane %v1140, %v1146
    %v1148 = vcombine.low %v1111, %v1112
    %v1150 = vunpack.c.l.s4 1983009808
    %v1151 = vunpack.c.0.s8 %v1150
    %v1152 = vlaneseq
    %v1153 = vshrl.u32 %v1152, 7
    %v1154 = vsub.s32 %v1151, %v1153
    %v1155 = vrot.slane %v1148, %v1154
    %v1156 = vcombine.low %v1147, %v1155
    %v1158 = vunpack.c.l.s4 1934713408
    %v1159 = vunpack.c.0.s8 %v1158
    %v1160 = vlaneseq
    %v1161 = vshrl.u32 %v1160, 7
    %v1162 = vsub.s32 %v1159, %v1161
    %v1163 = vrot.slane %v1156, %v1162
    %v1164 = vcombine.high %v1163, 0
    %v1165 = vcombine.low %v1037, %v1044
    %v1167 = vunpack.c.l.s4 1983009808
    %v1168 = vunpack.c.0.s8 %v1167
    %v1169 = vlaneseq
    %v1170 = vshrl.u32 %v1169, 7
    %v1171 = vsub.s32 %v1168, %v1170
    %v1172 = vrot.slane %v1165, %v1171
    %v1173 = vcombine.low %v1047, %v1048
    %v1175 = vunpack.c.l.s4 1983009808
    %v1176 = vunpack.c.0.s8 %v1175
    %v1177 = vlaneseq
    %v1178 = vshrl.u32 %v1177, 7
    %v1179 = vsub.s32 %v1176, %v1178
    %v1180 = vrot.slane %v1173, %v1179
    %v1181 = vcombine.low %v1172, %v1180
    %v1183 = vunpack.c.l.s4 1934713408
    %v1184 = vunpack.c.0.s8 %v1183
    %v1185 = vlaneseq
    %v1186 = vshrl.u32 %v1185, 7
    %v1187 = vsub.s32 %v1184, %v1186
    %v1188 = vrot.slane %v1181, %v1187
    %v1189 = vcombine.high %v1188, 0
    %v1190 = vcombine.low %v1103, %v1110
    %v1192 = vunpack.c.l.s4 1983009808
    %v1193 = vunpack.c.0.s8 %v1192
    %v1194 = vlaneseq
    %v1195 = vshrl.u32 %v1194, 7
    %v1196 = vsub.s32 %v1193, %v1195
    %v1197 = vrot.slane %v1190, %v1196
    %v1198 = vcombine.low %v1113, %v1114
    %v1200 = vunpack.c.l.s4 1983009808
    %v1201 = vunpack.c.0.s8 %v1200
    %v1202 = vlaneseq
    %v1203 = vshrl.u32 %v1202, 7
    %v1204 = vsub.s32 %v1201, %v1203
    %v1205 = vrot.slane %v1198, %v1204
    %v1206 = vcombine.low %v1197, %v1205
    %v1208 = vunpack.c.l.s4 1934713408
    %v1209 = vunpack.c.0.s8 %v1208
    %v1210 = vlaneseq
    %v1211 = vshrl.u32 %v1210, 7
    %v1212 = vsub.s32 %v1209, %v1211
    %v1213 = vrot.slane %v1206, %v1212
    %v1214 = vcombine.high %v1213, 0
    %v1217 = vpack.i.b16 %v1163, %v1138
    %v1218 = vshrl.u32 %v1138, 16
    %v1219 = vshrl.u32 %v1163, 16
    %v1220 = vpack.i.b16 %v1219, %v1218
    %v1223 = vpack.i.b16 %v1164, %v1139
    %v1224 = vshrl.u32 %v1139, 16
    %v1225 = vshrl.u32 %v1164, 16
    %v1226 = vpack.i.b16 %v1225, %v1224
    %v1229 = vpack.i.b16 %v1213, %v1188
    %v1230 = vshrl.u32 %v1188, 16
    %v1231 = vshrl.u32 %v1213, 16
    %v1232 = vpack.i.b16 %v1231, %v1230
    %v1235 = vpack.i.b16 %v1214, %v1189
    %v1236 = vshrl.u32 %v1189, 16
    %v1237 = vshrl.u32 %v1214, 16
    %v1238 = vpack.i.b16 %v1237, %v1236
    %v1239 = vpack.c.bf16 %v670, %v667
    %1241 = vrot.lane.b32.xlu0 %v1239, 96
    %v1242 = vpop.permute.xlu0 %1241
    %1243 = vrot.lane.b32.xlu0 %v1239, 64
    %v1244 = vpop.permute.xlu0 %1243
    %1245 = vrot.lane.b32.xlu0 %v1239, 32
    %v1246 = vpop.permute.xlu0 %1245
    %v1249 = vpack.i.b16 %v1242, %v1239
    %v1251 = vshrl.u32 %v1239, 16
    %v1252 = vshrl.u32 %v1242, 16
    %v1253 = vpack.i.b16 %v1252, %v1251
    %v1257 = vpack.i.b16 %v1246, %v1244
    %v1259 = vshrl.u32 %v1244, 16
    %v1260 = vshrl.u32 %v1246, 16
    %v1261 = vpack.i.b16 %v1260, %v1259
    %v1263 = vcombine.high %v1249, %v698
    %v1265 = vunpack.c.l.s4 1983009808
    %v1266 = vunpack.c.0.s8 %v1265
    %v1267 = vlaneseq
    %v1268 = vshrl.u32 %v1267, 7
    %v1269 = vsub.s32 %v1266, %v1268
    %v1270 = vrot.slane %v1249, %v1269
    %v1272 = vunpack.c.l.s4 1983009808
    %v1273 = vunpack.c.0.s8 %v1272
    %v1274 = vlaneseq
    %v1275 = vshrl.u32 %v1274, 7
    %v1276 = vsub.s32 %v1273, %v1275
    %v1277 = vrot.slane %v1263, %v1276
    %v1278 = vcombine.high %v1257, %v698
    %v1280 = vunpack.c.l.s4 1983009808
    %v1281 = vunpack.c.0.s8 %v1280
    %v1282 = vlaneseq
    %v1283 = vshrl.u32 %v1282, 7
    %v1284 = vsub.s32 %v1281, %v1283
    %v1285 = vrot.slane %v1257, %v1284
    %v1287 = vunpack.c.l.s4 1983009808
    %v1288 = vunpack.c.0.s8 %v1287
    %v1289 = vlaneseq
    %v1290 = vshrl.u32 %v1289, 7
    %v1291 = vsub.s32 %v1288, %v1290
    %v1292 = vrot.slane %v1278, %v1291
    %v1293 = vcombine.low %v1270, %v1285
    %v1294 = vcombine.high %v1270, %v1285
    %v1296 = vunpack.c.l.s4 1934713408
    %v1297 = vunpack.c.0.s8 %v1296
    %v1298 = vlaneseq
    %v1299 = vshrl.u32 %v1298, 7
    %v1300 = vsub.s32 %v1297, %v1299
    %v1301 = vrot.slane %v1293, %v1300
    %v1303 = vunpack.c.l.s4 1934713408
    %v1304 = vunpack.c.0.s8 %v1303
    %v1305 = vlaneseq
    %v1306 = vshrl.u32 %v1305, 7
    %v1307 = vsub.s32 %v1304, %v1306
    %v1308 = vrot.slane %v1294, %v1307
    %v1309 = vcombine.low %v1277, %v1292
    %v1310 = vcombine.high %v1277, %v1292
    %v1312 = vunpack.c.l.s4 1934713408
    %v1313 = vunpack.c.0.s8 %v1312
    %v1314 = vlaneseq
    %v1315 = vshrl.u32 %v1314, 7
    %v1316 = vsub.s32 %v1313, %v1315
    %v1317 = vrot.slane %v1309, %v1316
    %v1319 = vunpack.c.l.s4 1934713408
    %v1320 = vunpack.c.0.s8 %v1319
    %v1321 = vlaneseq
    %v1322 = vshrl.u32 %v1321, 7
    %v1323 = vsub.s32 %v1320, %v1322
    %v1324 = vrot.slane %v1310, %v1323
    %v1325 = vcombine.high %v1301, 0
    %v1326 = vcombine.high %v1308, 0
    %v1327 = vcombine.high %v1317, 0
    %v1328 = vcombine.high %v1324, 0
    %v1329 = vcombine.high %v1253, %v701
    %v1331 = vunpack.c.l.s4 1983009808
    %v1332 = vunpack.c.0.s8 %v1331
    %v1333 = vlaneseq
    %v1334 = vshrl.u32 %v1333, 7
    %v1335 = vsub.s32 %v1332, %v1334
    %v1336 = vrot.slane %v1253, %v1335
    %v1338 = vunpack.c.l.s4 1983009808
    %v1339 = vunpack.c.0.s8 %v1338
    %v1340 = vlaneseq
    %v1341 = vshrl.u32 %v1340, 7
    %v1342 = vsub.s32 %v1339, %v1341
    %v1343 = vrot.slane %v1329, %v1342
    %v1344 = vcombine.high %v1261, %v701
    %v1346 = vunpack.c.l.s4 1983009808
    %v1347 = vunpack.c.0.s8 %v1346
    %v1348 = vlaneseq
    %v1349 = vshrl.u32 %v1348, 7
    %v1350 = vsub.s32 %v1347, %v1349
    %v1351 = vrot.slane %v1261, %v1350
    %v1353 = vunpack.c.l.s4 1983009808
    %v1354 = vunpack.c.0.s8 %v1353
    %v1355 = vlaneseq
    %v1356 = vshrl.u32 %v1355, 7
    %v1357 = vsub.s32 %v1354, %v1356
    %v1358 = vrot.slane %v1344, %v1357
    %v1359 = vcombine.low %v1336, %v1351
    %v1360 = vcombine.high %v1336, %v1351
    %v1362 = vunpack.c.l.s4 1934713408
    %v1363 = vunpack.c.0.s8 %v1362
    %v1364 = vlaneseq
    %v1365 = vshrl.u32 %v1364, 7
    %v1366 = vsub.s32 %v1363, %v1365
    %v1367 = vrot.slane %v1359, %v1366
    %v1369 = vunpack.c.l.s4 1934713408
    %v1370 = vunpack.c.0.s8 %v1369
    %v1371 = vlaneseq
    %v1372 = vshrl.u32 %v1371, 7
    %v1373 = vsub.s32 %v1370, %v1372
    %v1374 = vrot.slane %v1360, %v1373
    %v1375 = vcombine.low %v1343, %v1358
    %v1376 = vcombine.high %v1343, %v1358
    %v1378 = vunpack.c.l.s4 1934713408
    %v1379 = vunpack.c.0.s8 %v1378
    %v1380 = vlaneseq
    %v1381 = vshrl.u32 %v1380, 7
    %v1382 = vsub.s32 %v1379, %v1381
    %v1383 = vrot.slane %v1375, %v1382
    %v1385 = vunpack.c.l.s4 1934713408
    %v1386 = vunpack.c.0.s8 %v1385
    %v1387 = vlaneseq
    %v1388 = vshrl.u32 %v1387, 7
    %v1389 = vsub.s32 %v1386, %v1388
    %v1390 = vrot.slane %v1376, %v1389
    %v1391 = vcombine.high %v1367, 0
    %v1392 = vcombine.high %v1374, 0
    %v1393 = vcombine.high %v1383, 0
    %v1394 = vcombine.high %v1390, 0
    %v1395 = vcombine.low %v1301, %v1308
    %v1397 = vunpack.c.l.s4 1983009808
    %v1398 = vunpack.c.0.s8 %v1397
    %v1399 = vlaneseq
    %v1400 = vshrl.u32 %v1399, 7
    %v1401 = vsub.s32 %v1398, %v1400
    %v1402 = vrot.slane %v1395, %v1401
    %v1403 = vcombine.low %v1325, %v1326
    %v1405 = vunpack.c.l.s4 1983009808
    %v1406 = vunpack.c.0.s8 %v1405
    %v1407 = vlaneseq
    %v1408 = vshrl.u32 %v1407, 7
    %v1409 = vsub.s32 %v1406, %v1408
    %v1410 = vrot.slane %v1403, %v1409
    %v1411 = vcombine.low %v1402, %v1410
    %v1413 = vunpack.c.l.s4 1934713408
    %v1414 = vunpack.c.0.s8 %v1413
    %v1415 = vlaneseq
    %v1416 = vshrl.u32 %v1415, 7
    %v1417 = vsub.s32 %v1414, %v1416
    %v1418 = vrot.slane %v1411, %v1417
    %v1419 = vcombine.high %v1418, 0
    %v1420 = vcombine.low %v1367, %v1374
    %v1422 = vunpack.c.l.s4 1983009808
    %v1423 = vunpack.c.0.s8 %v1422
    %v1424 = vlaneseq
    %v1425 = vshrl.u32 %v1424, 7
    %v1426 = vsub.s32 %v1423, %v1425
    %v1427 = vrot.slane %v1420, %v1426
    %v1428 = vcombine.low %v1391, %v1392
    %v1430 = vunpack.c.l.s4 1983009808
    %v1431 = vunpack.c.0.s8 %v1430
    %v1432 = vlaneseq
    %v1433 = vshrl.u32 %v1432, 7
    %v1434 = vsub.s32 %v1431, %v1433
    %v1435 = vrot.slane %v1428, %v1434
    %v1436 = vcombine.low %v1427, %v1435
    %v1438 = vunpack.c.l.s4 1934713408
    %v1439 = vunpack.c.0.s8 %v1438
    %v1440 = vlaneseq
    %v1441 = vshrl.u32 %v1440, 7
    %v1442 = vsub.s32 %v1439, %v1441
    %v1443 = vrot.slane %v1436, %v1442
    %v1444 = vcombine.high %v1443, 0
    %v1445 = vcombine.low %v1317, %v1324
    %v1447 = vunpack.c.l.s4 1983009808
    %v1448 = vunpack.c.0.s8 %v1447
    %v1449 = vlaneseq
    %v1450 = vshrl.u32 %v1449, 7
    %v1451 = vsub.s32 %v1448, %v1450
    %v1452 = vrot.slane %v1445, %v1451
    %v1453 = vcombine.low %v1327, %v1328
    %v1455 = vunpack.c.l.s4 1983009808
    %v1456 = vunpack.c.0.s8 %v1455
    %v1457 = vlaneseq
    %v1458 = vshrl.u32 %v1457, 7
    %v1459 = vsub.s32 %v1456, %v1458
    %v1460 = vrot.slane %v1453, %v1459
    %v1461 = vcombine.low %v1452, %v1460
    %v1463 = vunpack.c.l.s4 1934713408
    %v1464 = vunpack.c.0.s8 %v1463
    %v1465 = vlaneseq
    %v1466 = vshrl.u32 %v1465, 7
    %v1467 = vsub.s32 %v1464, %v1466
    %v1468 = vrot.slane %v1461, %v1467
    %v1469 = vcombine.high %v1468, 0
    %v1470 = vcombine.low %v1383, %v1390
    %v1472 = vunpack.c.l.s4 1983009808
    %v1473 = vunpack.c.0.s8 %v1472
    %v1474 = vlaneseq
    %v1475 = vshrl.u32 %v1474, 7
    %v1476 = vsub.s32 %v1473, %v1475
    %v1477 = vrot.slane %v1470, %v1476
    %v1478 = vcombine.low %v1393, %v1394
    %v1480 = vunpack.c.l.s4 1983009808
    %v1481 = vunpack.c.0.s8 %v1480
    %v1482 = vlaneseq
    %v1483 = vshrl.u32 %v1482, 7
    %v1484 = vsub.s32 %v1481, %v1483
    %v1485 = vrot.slane %v1478, %v1484
    %v1486 = vcombine.low %v1477, %v1485
    %v1488 = vunpack.c.l.s4 1934713408
    %v1489 = vunpack.c.0.s8 %v1488
    %v1490 = vlaneseq
    %v1491 = vshrl.u32 %v1490, 7
    %v1492 = vsub.s32 %v1489, %v1491
    %v1493 = vrot.slane %v1486, %v1492
    %v1494 = vcombine.high %v1493, 0
    %v1497 = vpack.i.b16 %v1443, %v1418
    %v1498 = vshrl.u32 %v1418, 16
    %v1499 = vshrl.u32 %v1443, 16
    %v1500 = vpack.i.b16 %v1499, %v1498
    %v1503 = vpack.i.b16 %v1444, %v1419
    %v1504 = vshrl.u32 %v1419, 16
    %v1505 = vshrl.u32 %v1444, 16
    %v1506 = vpack.i.b16 %v1505, %v1504
    %v1509 = vpack.i.b16 %v1493, %v1468
    %v1510 = vshrl.u32 %v1468, 16
    %v1511 = vshrl.u32 %v1493, 16
    %v1512 = vpack.i.b16 %v1511, %v1510
    %v1515 = vpack.i.b16 %v1494, %v1469
    %v1516 = vshrl.u32 %v1469, 16
    %v1517 = vshrl.u32 %v1494, 16
    %v1518 = vpack.i.b16 %v1517, %v1516
    %vm1519 = vcmask 261120
    %v1521 = vsel %vm1519, %v937, 0
    %v1524 = vsel %vm1519, %v1217, 0
    %1526 = vmatprep.subr.bf16.mxu0 0
    %1527 = vmatpush1.bf16.xpose.msra.mxu0 0
    %1528 = vmatprep.subr.bf16.mxu0 0
    %1529 = vmatpush1.bf16.xpose.msra.mxu0 0
    %1530 = vmatprep.subr.bf16.mxu0 0
    %1531 = vmatpush1.bf16.xpose.msra.mxu0 0
    %1532 = vmatprep.subr.bf16.mxu0 0
    %1533 = vmatpush1.bf16.xpose.msra.mxu0 0
    %1534 = vmatprep.subr.bf16.mxu0 0
    %1535 = vmatpush1.bf16.xpose.msra.mxu0 0
    %1536 = vmatprep.subr.bf16.mxu0 0
    %1537 = vmatpush1.bf16.xpose.msra.mxu0 0
    %1538 = vmatprep.subr.bf16.mxu0 0
    %1539 = vmatpush1.bf16.xpose.msra.mxu0 0
    %1540 = vmatprep.subr.bf16.mxu0 0
    %1541 = vmatpush1.bf16.xpose.msra.mxu0 %v1524
    %1542 = vmatprep.subr.bf16.mxu0 0
    %1543 = vmatpush2.bf16.xpose.msra.mxu0 0
    %1544 = vmatprep.subr.bf16.mxu0 0
    %1545 = vmatpush2.bf16.xpose.msra.mxu0 0
    %1546 = vmatprep.subr.bf16.mxu0 0
    %1547 = vmatpush2.bf16.xpose.msra.mxu0 0
    %1548 = vmatprep.subr.bf16.mxu0 0
    %1549 = vmatpush2.bf16.xpose.msra.mxu0 0
    %1550 = vmatprep.subr.bf16.mxu0 0
    %1551 = vmatpush2.bf16.xpose.msra.mxu0 0
    %1552 = vmatprep.subr.bf16.mxu0 0
    %1553 = vmatpush2.bf16.xpose.msra.mxu0 0
    %1554 = vmatprep.subr.bf16.mxu0 0
    %1555 = vmatpush2.bf16.xpose.msra.mxu0 0
    %1556 = vmatprep.subr.bf16.mxu0 0
    %1557 = vmatpush2.bf16.xpose.msra.mxu0 0
    %1558 = vmatprep.mubr.bf16.mxu0 0
    %1559 = vmatmul.mubr.bf16.gmra.mxu0 %v1521
    %v1560 = vpop.f32.mrf.mxu0
    %v1561 = vadd.f32 0.0, %v1560
    %v1562 = vpop.f32.mrf.mxu0
    %v1563 = vpop.f32.mrf.mxu0
    %v1564 = vpop.f32.mrf.mxu0
    %1565 = vdwg.mxu0
    %v1567 = vsel %vm1519, %v940, 0
    %v1570 = vsel %vm1519, %v1220, 0
    %1572 = vmatprep.subr.bf16.mxu0 0
    %1573 = vmatpush1.bf16.xpose.msra.mxu0 0
    %1574 = vmatprep.subr.bf16.mxu0 0
    %1575 = vmatpush1.bf16.xpose.msra.mxu0 0
    %1576 = vmatprep.subr.bf16.mxu0 0
    %1577 = vmatpush1.bf16.xpose.msra.mxu0 0
    %1578 = vmatprep.subr.bf16.mxu0 0
    %1579 = vmatpush1.bf16.xpose.msra.mxu0 0
    %1580 = vmatprep.subr.bf16.mxu0 0
    %1581 = vmatpush1.bf16.xpose.msra.mxu0 0
    %1582 = vmatprep.subr.bf16.mxu0 0
    %1583 = vmatpush1.bf16.xpose.msra.mxu0 0
    %1584 = vmatprep.subr.bf16.mxu0 0
    %1585 = vmatpush1.bf16.xpose.msra.mxu0 0
    %1586 = vmatprep.subr.bf16.mxu0 0
    %1587 = vmatpush1.bf16.xpose.msra.mxu0 %v1570
    %1588 = vmatprep.subr.bf16.mxu0 0
    %1589 = vmatpush2.bf16.xpose.msra.mxu0 0
    %1590 = vmatprep.subr.bf16.mxu0 0
    %1591 = vmatpush2.bf16.xpose.msra.mxu0 0
    %1592 = vmatprep.subr.bf16.mxu0 0
    %1593 = vmatpush2.bf16.xpose.msra.mxu0 0
    %1594 = vmatprep.subr.bf16.mxu0 0
    %1595 = vmatpush2.bf16.xpose.msra.mxu0 0
    %1596 = vmatprep.subr.bf16.mxu0 0
    %1597 = vmatpush2.bf16.xpose.msra.mxu0 0
    %1598 = vmatprep.subr.bf16.mxu0 0
    %1599 = vmatpush2.bf16.xpose.msra.mxu0 0
    %1600 = vmatprep.subr.bf16.mxu0 0
    %1601 = vmatpush2.bf16.xpose.msra.mxu0 0
    %1602 = vmatprep.subr.bf16.mxu0 0
    %1603 = vmatpush2.bf16.xpose.msra.mxu0 0
    %1604 = vmatprep.mubr.bf16.mxu0 0
    %1605 = vmatmul.mubr.bf16.gmra.mxu0 %v1567
    %v1606 = vpop.f32.mrf.mxu0
    %v1607 = vadd.f32 0.0, %v1606
    %v1608 = vpop.f32.mrf.mxu0
    %v1609 = vpop.f32.mrf.mxu0
    %v1610 = vpop.f32.mrf.mxu0
    %1611 = vdwg.mxu0
    %v1613 = vsel %vm1519, %v943, 0
    %v1616 = vsel %vm1519, %v1223, 0
    %1618 = vmatprep.subr.bf16.mxu0 0
    %1619 = vmatpush1.bf16.xpose.msra.mxu0 0
    %1620 = vmatprep.subr.bf16.mxu0 0
    %1621 = vmatpush1.bf16.xpose.msra.mxu0 0
    %1622 = vmatprep.subr.bf16.mxu0 0
    %1623 = vmatpush1.bf16.xpose.msra.mxu0 0
    %1624 = vmatprep.subr.bf16.mxu0 0
    %1625 = vmatpush1.bf16.xpose.msra.mxu0 0
    %1626 = vmatprep.subr.bf16.mxu0 0
    %1627 = vmatpush1.bf16.xpose.msra.mxu0 0
    %1628 = vmatprep.subr.bf16.mxu0 0
    %1629 = vmatpush1.bf16.xpose.msra.mxu0 0
    %1630 = vmatprep.subr.bf16.mxu0 0
    %1631 = vmatpush1.bf16.xpose.msra.mxu0 0
    %1632 = vmatprep.subr.bf16.mxu0 0
    %1633 = vmatpush1.bf16.xpose.msra.mxu0 %v1616
    %1634 = vmatprep.subr.bf16.mxu0 0
    %1635 = vmatpush2.bf16.xpose.msra.mxu0 0
    %1636 = vmatprep.subr.bf16.mxu0 0
    %1637 = vmatpush2.bf16.xpose.msra.mxu0 0
    %1638 = vmatprep.subr.bf16.mxu0 0
    %1639 = vmatpush2.bf16.xpose.msra.mxu0 0
    %1640 = vmatprep.subr.bf16.mxu0 0
    %1641 = vmatpush2.bf16.xpose.msra.mxu0 0
    %1642 = vmatprep.subr.bf16.mxu0 0
    %1643 = vmatpush2.bf16.xpose.msra.mxu0 0
    %1644 = vmatprep.subr.bf16.mxu0 0
    %1645 = vmatpush2.bf16.xpose.msra.mxu0 0
    %1646 = vmatprep.subr.bf16.mxu0 0
    %1647 = vmatpush2.bf16.xpose.msra.mxu0 0
    %1648 = vmatprep.subr.bf16.mxu0 0
    %1649 = vmatpush2.bf16.xpose.msra.mxu0 0
    %1650 = vmatprep.mubr.bf16.mxu0 0
    %1651 = vmatmul.mubr.bf16.gmra.mxu0 %v1613
    %v1652 = vpop.f32.mrf.mxu0
    %v1653 = vadd.f32 0.0, %v1652
    %v1654 = vpop.f32.mrf.mxu0
    %v1655 = vpop.f32.mrf.mxu0
    %v1656 = vpop.f32.mrf.mxu0
    %1657 = vdwg.mxu0
    %v1659 = vsel %vm1519, %v946, 0
    %v1662 = vsel %vm1519, %v1226, 0
    %1664 = vmatprep.subr.bf16.mxu0 0
    %1665 = vmatpush1.bf16.xpose.msra.mxu0 0
    %1666 = vmatprep.subr.bf16.mxu0 0
    %1667 = vmatpush1.bf16.xpose.msra.mxu0 0
    %1668 = vmatprep.subr.bf16.mxu0 0
    %1669 = vmatpush1.bf16.xpose.msra.mxu0 0
    %1670 = vmatprep.subr.bf16.mxu0 0
    %1671 = vmatpush1.bf16.xpose.msra.mxu0 0
    %1672 = vmatprep.subr.bf16.mxu0 0
    %1673 = vmatpush1.bf16.xpose.msra.mxu0 0
    %1674 = vmatprep.subr.bf16.mxu0 0
    %1675 = vmatpush1.bf16.xpose.msra.mxu0 0
    %1676 = vmatprep.subr.bf16.mxu0 0
    %1677 = vmatpush1.bf16.xpose.msra.mxu0 0
    %1678 = vmatprep.subr.bf16.mxu0 0
    %1679 = vmatpush1.bf16.xpose.msra.mxu0 %v1662
    %1680 = vmatprep.subr.bf16.mxu0 0
    %1681 = vmatpush2.bf16.xpose.msra.mxu0 0
    %1682 = vmatprep.subr.bf16.mxu0 0
    %1683 = vmatpush2.bf16.xpose.msra.mxu0 0
    %1684 = vmatprep.subr.bf16.mxu0 0
    %1685 = vmatpush2.bf16.xpose.msra.mxu0 0
    %1686 = vmatprep.subr.bf16.mxu0 0
    %1687 = vmatpush2.bf16.xpose.msra.mxu0 0
    %1688 = vmatprep.subr.bf16.mxu0 0
    %1689 = vmatpush2.bf16.xpose.msra.mxu0 0
    %1690 = vmatprep.subr.bf16.mxu0 0
    %1691 = vmatpush2.bf16.xpose.msra.mxu0 0
    %1692 = vmatprep.subr.bf16.mxu0 0
    %1693 = vmatpush2.bf16.xpose.msra.mxu0 0
    %1694 = vmatprep.subr.bf16.mxu0 0
    %1695 = vmatpush2.bf16.xpose.msra.mxu0 0
    %1696 = vmatprep.mubr.bf16.mxu0 0
    %1697 = vmatmul.mubr.bf16.gmra.mxu0 %v1659
    %v1698 = vpop.f32.mrf.mxu0
    %v1699 = vadd.f32 0.0, %v1698
    %v1700 = vpop.f32.mrf.mxu0
    %v1701 = vpop.f32.mrf.mxu0
    %v1702 = vpop.f32.mrf.mxu0
    %1703 = vdwg.mxu0
    %v1705 = vsel %vm1519, %v949, 0
    %v1708 = vsel %vm1519, %v1229, 0
    %1710 = vmatprep.subr.bf16.mxu0 0
    %1711 = vmatpush1.bf16.xpose.msra.mxu0 0
    %1712 = vmatprep.subr.bf16.mxu0 0
    %1713 = vmatpush1.bf16.xpose.msra.mxu0 0
    %1714 = vmatprep.subr.bf16.mxu0 0
    %1715 = vmatpush1.bf16.xpose.msra.mxu0 0
    %1716 = vmatprep.subr.bf16.mxu0 0
    %1717 = vmatpush1.bf16.xpose.msra.mxu0 0
    %1718 = vmatprep.subr.bf16.mxu0 0
    %1719 = vmatpush1.bf16.xpose.msra.mxu0 0
    %1720 = vmatprep.subr.bf16.mxu0 0
    %1721 = vmatpush1.bf16.xpose.msra.mxu0 0
    %1722 = vmatprep.subr.bf16.mxu0 0
    %1723 = vmatpush1.bf16.xpose.msra.mxu0 0
    %1724 = vmatprep.subr.bf16.mxu0 0
    %1725 = vmatpush1.bf16.xpose.msra.mxu0 %v1708
    %1726 = vmatprep.subr.bf16.mxu0 0
    %1727 = vmatpush2.bf16.xpose.msra.mxu0 0
    %1728 = vmatprep.subr.bf16.mxu0 0
    %1729 = vmatpush2.bf16.xpose.msra.mxu0 0
    %1730 = vmatprep.subr.bf16.mxu0 0
    %1731 = vmatpush2.bf16.xpose.msra.mxu0 0
    %1732 = vmatprep.subr.bf16.mxu0 0
    %1733 = vmatpush2.bf16.xpose.msra.mxu0 0
    %1734 = vmatprep.subr.bf16.mxu0 0
    %1735 = vmatpush2.bf16.xpose.msra.mxu0 0
    %1736 = vmatprep.subr.bf16.mxu0 0
    %1737 = vmatpush2.bf16.xpose.msra.mxu0 0
    %1738 = vmatprep.subr.bf16.mxu0 0
    %1739 = vmatpush2.bf16.xpose.msra.mxu0 0
    %1740 = vmatprep.subr.bf16.mxu0 0
    %1741 = vmatpush2.bf16.xpose.msra.mxu0 0
    %1742 = vmatprep.mubr.bf16.mxu0 0
    %1743 = vmatmul.mubr.bf16.gmra.mxu0 %v1705
    %v1744 = vpop.f32.mrf.mxu0
    %v1745 = vadd.f32 0.0, %v1744
    %v1746 = vpop.f32.mrf.mxu0
    %v1747 = vpop.f32.mrf.mxu0
    %v1748 = vpop.f32.mrf.mxu0
    %1749 = vdwg.mxu0
    %v1751 = vsel %vm1519, %v952, 0
    %v1754 = vsel %vm1519, %v1232, 0
    %1756 = vmatprep.subr.bf16.mxu0 0
    %1757 = vmatpush1.bf16.xpose.msra.mxu0 0
    %1758 = vmatprep.subr.bf16.mxu0 0
    %1759 = vmatpush1.bf16.xpose.msra.mxu0 0
    %1760 = vmatprep.subr.bf16.mxu0 0
    %1761 = vmatpush1.bf16.xpose.msra.mxu0 0
    %1762 = vmatprep.subr.bf16.mxu0 0
    %1763 = vmatpush1.bf16.xpose.msra.mxu0 0
    %1764 = vmatprep.subr.bf16.mxu0 0
    %1765 = vmatpush1.bf16.xpose.msra.mxu0 0
    %1766 = vmatprep.subr.bf16.mxu0 0
    %1767 = vmatpush1.bf16.xpose.msra.mxu0 0
    %1768 = vmatprep.subr.bf16.mxu0 0
    %1769 = vmatpush1.bf16.xpose.msra.mxu0 0
    %1770 = vmatprep.subr.bf16.mxu0 0
    %1771 = vmatpush1.bf16.xpose.msra.mxu0 %v1754
    %1772 = vmatprep.subr.bf16.mxu0 0
    %1773 = vmatpush2.bf16.xpose.msra.mxu0 0
    %1774 = vmatprep.subr.bf16.mxu0 0
    %1775 = vmatpush2.bf16.xpose.msra.mxu0 0
    %1776 = vmatprep.subr.bf16.mxu0 0
    %1777 = vmatpush2.bf16.xpose.msra.mxu0 0
    %1778 = vmatprep.subr.bf16.mxu0 0
    %1779 = vmatpush2.bf16.xpose.msra.mxu0 0
    %1780 = vmatprep.subr.bf16.mxu0 0
    %1781 = vmatpush2.bf16.xpose.msra.mxu0 0
    %1782 = vmatprep.subr.bf16.mxu0 0
    %1783 = vmatpush2.bf16.xpose.msra.mxu0 0
    %1784 = vmatprep.subr.bf16.mxu0 0
    %1785 = vmatpush2.bf16.xpose.msra.mxu0 0
    %1786 = vmatprep.subr.bf16.mxu0 0
    %1787 = vmatpush2.bf16.xpose.msra.mxu0 0
    %1788 = vmatprep.mubr.bf16.mxu0 0
    %1789 = vmatmul.mubr.bf16.gmra.mxu0 %v1751
    %v1790 = vpop.f32.mrf.mxu0
    %v1791 = vadd.f32 0.0, %v1790
    %v1792 = vpop.f32.mrf.mxu0
    %v1793 = vpop.f32.mrf.mxu0
    %v1794 = vpop.f32.mrf.mxu0
    %1795 = vdwg.mxu0
    %v1797 = vsel %vm1519, %v955, 0
    %v1800 = vsel %vm1519, %v1235, 0
    %1802 = vmatprep.subr.bf16.mxu0 0
    %1803 = vmatpush1.bf16.xpose.msra.mxu0 0
    %1804 = vmatprep.subr.bf16.mxu0 0
    %1805 = vmatpush1.bf16.xpose.msra.mxu0 0
    %1806 = vmatprep.subr.bf16.mxu0 0
    %1807 = vmatpush1.bf16.xpose.msra.mxu0 0
    %1808 = vmatprep.subr.bf16.mxu0 0
    %1809 = vmatpush1.bf16.xpose.msra.mxu0 0
    %1810 = vmatprep.subr.bf16.mxu0 0
    %1811 = vmatpush1.bf16.xpose.msra.mxu0 0
    %1812 = vmatprep.subr.bf16.mxu0 0
    %1813 = vmatpush1.bf16.xpose.msra.mxu0 0
    %1814 = vmatprep.subr.bf16.mxu0 0
    %1815 = vmatpush1.bf16.xpose.msra.mxu0 0
    %1816 = vmatprep.subr.bf16.mxu0 0
    %1817 = vmatpush1.bf16.xpose.msra.mxu0 %v1800
    %1818 = vmatprep.subr.bf16.mxu0 0
    %1819 = vmatpush2.bf16.xpose.msra.mxu0 0
    %1820 = vmatprep.subr.bf16.mxu0 0
    %1821 = vmatpush2.bf16.xpose.msra.mxu0 0
    %1822 = vmatprep.subr.bf16.mxu0 0
    %1823 = vmatpush2.bf16.xpose.msra.mxu0 0
    %1824 = vmatprep.subr.bf16.mxu0 0
    %1825 = vmatpush2.bf16.xpose.msra.mxu0 0
    %1826 = vmatprep.subr.bf16.mxu0 0
    %1827 = vmatpush2.bf16.xpose.msra.mxu0 0
    %1828 = vmatprep.subr.bf16.mxu0 0
    %1829 = vmatpush2.bf16.xpose.msra.mxu0 0
    %1830 = vmatprep.subr.bf16.mxu0 0
    %1831 = vmatpush2.bf16.xpose.msra.mxu0 0
    %1832 = vmatprep.subr.bf16.mxu0 0
    %1833 = vmatpush2.bf16.xpose.msra.mxu0 0
    %1834 = vmatprep.mubr.bf16.mxu0 0
    %1835 = vmatmul.mubr.bf16.gmra.mxu0 %v1797
    %v1836 = vpop.f32.mrf.mxu0
    %v1837 = vadd.f32 0.0, %v1836
    %v1838 = vpop.f32.mrf.mxu0
    %v1839 = vpop.f32.mrf.mxu0
    %v1840 = vpop.f32.mrf.mxu0
    %1841 = vdwg.mxu0
    %v1843 = vsel %vm1519, %v958, 0
    %v1846 = vsel %vm1519, %v1238, 0
    %1848 = vmatprep.subr.bf16.mxu0 0
    %1849 = vmatpush1.bf16.xpose.msra.mxu0 0
    %1850 = vmatprep.subr.bf16.mxu0 0
    %1851 = vmatpush1.bf16.xpose.msra.mxu0 0
    %1852 = vmatprep.subr.bf16.mxu0 0
    %1853 = vmatpush1.bf16.xpose.msra.mxu0 0
    %1854 = vmatprep.subr.bf16.mxu0 0
    %1855 = vmatpush1.bf16.xpose.msra.mxu0 0
    %1856 = vmatprep.subr.bf16.mxu0 0
    %1857 = vmatpush1.bf16.xpose.msra.mxu0 0
    %1858 = vmatprep.subr.bf16.mxu0 0
    %1859 = vmatpush1.bf16.xpose.msra.mxu0 0
    %1860 = vmatprep.subr.bf16.mxu0 0
    %1861 = vmatpush1.bf16.xpose.msra.mxu0 0
    %1862 = vmatprep.subr.bf16.mxu0 0
    %1863 = vmatpush1.bf16.xpose.msra.mxu0 %v1846
    %1864 = vmatprep.subr.bf16.mxu0 0
    %1865 = vmatpush2.bf16.xpose.msra.mxu0 0
    %1866 = vmatprep.subr.bf16.mxu0 0
    %1867 = vmatpush2.bf16.xpose.msra.mxu0 0
    %1868 = vmatprep.subr.bf16.mxu0 0
    %1869 = vmatpush2.bf16.xpose.msra.mxu0 0
    %1870 = vmatprep.subr.bf16.mxu0 0
    %1871 = vmatpush2.bf16.xpose.msra.mxu0 0
    %1872 = vmatprep.subr.bf16.mxu0 0
    %1873 = vmatpush2.bf16.xpose.msra.mxu0 0
    %1874 = vmatprep.subr.bf16.mxu0 0
    %1875 = vmatpush2.bf16.xpose.msra.mxu0 0
    %1876 = vmatprep.subr.bf16.mxu0 0
    %1877 = vmatpush2.bf16.xpose.msra.mxu0 0
    %1878 = vmatprep.subr.bf16.mxu0 0
    %1879 = vmatpush2.bf16.xpose.msra.mxu0 0
    %1880 = vmatprep.mubr.bf16.mxu0 0
    %1881 = vmatmul.mubr.bf16.gmra.mxu0 %v1843
    %v1882 = vpop.f32.mrf.mxu0
    %v1883 = vadd.f32 0.0, %v1882
    %v1884 = vpop.f32.mrf.mxu0
    %v1885 = vpop.f32.mrf.mxu0
    %v1886 = vpop.f32.mrf.mxu0
    %1887 = vdwg.mxu0
    %v1888 = vmul.f32 %v1561, 0.17677669
    %v1889 = vmul.f32 %v1607, 0.17677669
    %v1890 = vmul.f32 %v1653, 0.17677669
    %v1891 = vmul.f32 %v1699, 0.17677669
    %v1892 = vmul.f32 %v1745, 0.17677669
    %v1893 = vmul.f32 %v1791, 0.17677669
    %v1894 = vmul.f32 %v1837, 0.17677669
    %v1895 = vmul.f32 %v1883, 0.17677669
    %v1896 = vadd.f32 %v1888, %v296
    %v1897 = vadd.f32 %v1889, %v296
    %v1898 = vadd.f32 %v1890, %v296
    %v1899 = vadd.f32 %v1891, %v296
    %v1900 = vadd.f32 %v1892, %v296
    %v1901 = vadd.f32 %v1893, %v296
    %v1902 = vadd.f32 %v1894, %v296
    %v1903 = vadd.f32 %v1895, %v296
    %vm1904 = vcmask 64512
    %v1905 = vsel %vm1904, %v1896, -inf
    %1906 = vmax.xlane.f32.xlu0 %v1905
    %v1907 = vpop.xlane.xlu0 %1906
    %v1908 = vsel %vm1904, %v1897, -inf
    %1909 = vmax.xlane.f32.xlu0 %v1908
    %v1910 = vpop.xlane.xlu0 %1909
    %v1911 = vsel %vm1904, %v1898, -inf
    %1912 = vmax.xlane.f32.xlu0 %v1911
    %v1913 = vpop.xlane.xlu0 %1912
    %v1914 = vsel %vm1904, %v1899, -inf
    %1915 = vmax.xlane.f32.xlu0 %v1914
    %v1916 = vpop.xlane.xlu0 %1915
    %v1917 = vsel %vm1904, %v1900, -inf
    %1918 = vmax.xlane.f32.xlu0 %v1917
    %v1919 = vpop.xlane.xlu0 %1918
    %v1920 = vsel %vm1904, %v1901, -inf
    %1921 = vmax.xlane.f32.xlu0 %v1920
    %v1922 = vpop.xlane.xlu0 %1921
    %v1923 = vsel %vm1904, %v1902, -inf
    %1924 = vmax.xlane.f32.xlu0 %v1923
    %v1925 = vpop.xlane.xlu0 %1924
    %v1926 = vsel %vm1904, %v1903, -inf
    %1927 = vmax.xlane.f32.xlu0 %v1926
    %v1928 = vpop.xlane.xlu0 %1927
    %v1929 = vsub.f32 %v1896, %v1907
    %v1930 = vsub.f32 %v1897, %v1910
    %v1931 = vsub.f32 %v1898, %v1913
    %v1932 = vsub.f32 %v1899, %v1916
    %v1933 = vsub.f32 %v1900, %v1919
    %v1934 = vsub.f32 %v1901, %v1922
    %v1935 = vsub.f32 %v1902, %v1925
    %v1936 = vsub.f32 %v1903, %v1928
    %v1937 = vmul.f32 %v1929, 1.442695
    %v1938 = vpow.pop %v1937
    %v1939 = vmul.f32 %v1930, 1.442695
    %v1940 = vpow.pop %v1939
    %v1941 = vmul.f32 %v1931, 1.442695
    %v1942 = vpow.pop %v1941
    %v1943 = vmul.f32 %v1932, 1.442695
    %v1944 = vpow.pop %v1943
    %v1945 = vmul.f32 %v1933, 1.442695
    %v1946 = vpow.pop %v1945
    %v1947 = vmul.f32 %v1934, 1.442695
    %v1948 = vpow.pop %v1947
    %v1949 = vmul.f32 %v1935, 1.442695
    %v1950 = vpow.pop %v1949
    %v1951 = vmul.f32 %v1936, 1.442695
    %v1952 = vpow.pop %v1951
    %v1953 = vsel %vm1904, %v1938, 0.0
    %1954 = vadd.xlane.f32.xlu0 %v1953
    %v1955 = vpop.xlane.xlu0 %1954
    %v1956 = vsel %vm1904, %v1940, 0.0
    %1957 = vadd.xlane.f32.xlu0 %v1956
    %v1958 = vpop.xlane.xlu0 %1957
    %v1959 = vsel %vm1904, %v1942, 0.0
    %1960 = vadd.xlane.f32.xlu0 %v1959
    %v1961 = vpop.xlane.xlu0 %1960
    %v1962 = vsel %vm1904, %v1944, 0.0
    %1963 = vadd.xlane.f32.xlu0 %v1962
    %v1964 = vpop.xlane.xlu0 %1963
    %v1965 = vsel %vm1904, %v1946, 0.0
    %1966 = vadd.xlane.f32.xlu0 %v1965
    %v1967 = vpop.xlane.xlu0 %1966
    %v1968 = vsel %vm1904, %v1948, 0.0
    %1969 = vadd.xlane.f32.xlu0 %v1968
    %v1970 = vpop.xlane.xlu0 %1969
    %v1971 = vsel %vm1904, %v1950, 0.0
    %1972 = vadd.xlane.f32.xlu0 %v1971
    %v1973 = vpop.xlane.xlu0 %1972
    %v1974 = vsel %vm1904, %v1952, 0.0
    %1975 = vadd.xlane.f32.xlu0 %v1974
    %v1976 = vpop.xlane.xlu0 %1975
    %v1977 = vrcp.pop %v1955
    %v1978 = vrcp.pop %v1958
    %v1979 = vrcp.pop %v1961
    %v1980 = vrcp.pop %v1964
    %v1981 = vrcp.pop %v1967
    %v1982 = vrcp.pop %v1970
    %v1983 = vrcp.pop %v1973
    %v1984 = vrcp.pop %v1976
    %v1985 = vmul.f32 %v1938, %v1977
    %v1986 = vmul.f32 %v1940, %v1978
    %v1987 = vmul.f32 %v1942, %v1979
    %v1988 = vmul.f32 %v1944, %v1980
    %v1989 = vmul.f32 %v1946, %v1981
    %v1990 = vmul.f32 %v1948, %v1982
    %v1991 = vmul.f32 %v1950, %v1983
    %v1992 = vmul.f32 %v1952, %v1984
    %v1993 = vpack.c.bf16 %v1985, %v1985
    %v1994 = vpack.c.bf16 %v1986, %v1986
    %v1995 = vpack.c.bf16 %v1987, %v1987
    %v1996 = vpack.c.bf16 %v1988, %v1988
    %v1997 = vpack.c.bf16 %v1989, %v1989
    %v1998 = vpack.c.bf16 %v1990, %v1990
    %v1999 = vpack.c.bf16 %v1991, %v1991
    %v2000 = vpack.c.bf16 %v1992, %v1992
    %v2002 = vsel %vm1904, %v1993, 0
    %vm2004 = vcmask 1043456
    %v2006 = vsel %vm2004, %v1497, 0
    %2008 = vmatprep.subr.bf16.mxu0 0
    %2009 = vmatpush1.bf16.msra.mxu0 0
    %2010 = vmatprep.subr.bf16.mxu0 0
    %2011 = vmatpush1.bf16.msra.mxu0 0
    %2012 = vmatprep.subr.bf16.mxu0 0
    %2013 = vmatpush1.bf16.msra.mxu0 0
    %2014 = vmatprep.subr.bf16.mxu0 0
    %2015 = vmatpush1.bf16.msra.mxu0 0
    %2016 = vmatprep.subr.bf16.mxu0 0
    %2017 = vmatpush1.bf16.msra.mxu0 0
    %2018 = vmatprep.subr.bf16.mxu0 0
    %2019 = vmatpush1.bf16.msra.mxu0 0
    %2020 = vmatprep.subr.bf16.mxu0 0
    %2021 = vmatpush1.bf16.msra.mxu0 0
    %2022 = vmatprep.subr.bf16.mxu0 0
    %2023 = vmatpush1.bf16.msra.mxu0 %v2006
    %2024 = vmatprep.subr.bf16.mxu0 0
    %2025 = vmatpush2.bf16.msra.mxu0 0
    %2026 = vmatprep.subr.bf16.mxu0 0
    %2027 = vmatpush2.bf16.msra.mxu0 0
    %2028 = vmatprep.subr.bf16.mxu0 0
    %2029 = vmatpush2.bf16.msra.mxu0 0
    %2030 = vmatprep.subr.bf16.mxu0 0
    %2031 = vmatpush2.bf16.msra.mxu0 0
    %2032 = vmatprep.subr.bf16.mxu0 0
    %2033 = vmatpush2.bf16.msra.mxu0 0
    %2034 = vmatprep.subr.bf16.mxu0 0
    %2035 = vmatpush2.bf16.msra.mxu0 0
    %2036 = vmatprep.subr.bf16.mxu0 0
    %2037 = vmatpush2.bf16.msra.mxu0 0
    %2038 = vmatprep.subr.bf16.mxu0 0
    %2039 = vmatpush2.bf16.msra.mxu0 0
    %2040 = vmatprep.mubr.bf16.mxu0 0
    %2041 = vmatmul.mubr.bf16.gmra.mxu0 %v2002
    %v2042 = vpop.f32.mrf.mxu0
    %v2043 = vadd.f32 0.0, %v2042
    %v2044 = vpop.f32.mrf.mxu0
    %v2045 = vpop.f32.mrf.mxu0
    %v2046 = vpop.f32.mrf.mxu0
    %2047 = vdwg.mxu0
    %v2049 = vsel %vm1904, %v1994, 0
    %v2052 = vsel %vm2004, %v1500, 0
    %2054 = vmatprep.subr.bf16.mxu0 0
    %2055 = vmatpush1.bf16.msra.mxu0 0
    %2056 = vmatprep.subr.bf16.mxu0 0
    %2057 = vmatpush1.bf16.msra.mxu0 0
    %2058 = vmatprep.subr.bf16.mxu0 0
    %2059 = vmatpush1.bf16.msra.mxu0 0
    %2060 = vmatprep.subr.bf16.mxu0 0
    %2061 = vmatpush1.bf16.msra.mxu0 0
    %2062 = vmatprep.subr.bf16.mxu0 0
    %2063 = vmatpush1.bf16.msra.mxu0 0
    %2064 = vmatprep.subr.bf16.mxu0 0
    %2065 = vmatpush1.bf16.msra.mxu0 0
    %2066 = vmatprep.subr.bf16.mxu0 0
    %2067 = vmatpush1.bf16.msra.mxu0 0
    %2068 = vmatprep.subr.bf16.mxu0 0
    %2069 = vmatpush1.bf16.msra.mxu0 %v2052
    %2070 = vmatprep.subr.bf16.mxu0 0
    %2071 = vmatpush2.bf16.msra.mxu0 0
    %2072 = vmatprep.subr.bf16.mxu0 0
    %2073 = vmatpush2.bf16.msra.mxu0 0
    %2074 = vmatprep.subr.bf16.mxu0 0
    %2075 = vmatpush2.bf16.msra.mxu0 0
    %2076 = vmatprep.subr.bf16.mxu0 0
    %2077 = vmatpush2.bf16.msra.mxu0 0
    %2078 = vmatprep.subr.bf16.mxu0 0
    %2079 = vmatpush2.bf16.msra.mxu0 0
    %2080 = vmatprep.subr.bf16.mxu0 0
    %2081 = vmatpush2.bf16.msra.mxu0 0
    %2082 = vmatprep.subr.bf16.mxu0 0
    %2083 = vmatpush2.bf16.msra.mxu0 0
    %2084 = vmatprep.subr.bf16.mxu0 0
    %2085 = vmatpush2.bf16.msra.mxu0 0
    %2086 = vmatprep.mubr.bf16.mxu0 0
    %2087 = vmatmul.mubr.bf16.gmra.mxu0 %v2049
    %v2088 = vpop.f32.mrf.mxu0
    %v2089 = vadd.f32 0.0, %v2088
    %v2090 = vpop.f32.mrf.mxu0
    %v2091 = vpop.f32.mrf.mxu0
    %v2092 = vpop.f32.mrf.mxu0
    %2093 = vdwg.mxu0
    %v2095 = vsel %vm1904, %v1995, 0
    %v2098 = vsel %vm2004, %v1503, 0
    %2100 = vmatprep.subr.bf16.mxu0 0
    %2101 = vmatpush1.bf16.msra.mxu0 0
    %2102 = vmatprep.subr.bf16.mxu0 0
    %2103 = vmatpush1.bf16.msra.mxu0 0
    %2104 = vmatprep.subr.bf16.mxu0 0
    %2105 = vmatpush1.bf16.msra.mxu0 0
    %2106 = vmatprep.subr.bf16.mxu0 0
    %2107 = vmatpush1.bf16.msra.mxu0 0
    %2108 = vmatprep.subr.bf16.mxu0 0
    %2109 = vmatpush1.bf16.msra.mxu0 0
    %2110 = vmatprep.subr.bf16.mxu0 0
    %2111 = vmatpush1.bf16.msra.mxu0 0
    %2112 = vmatprep.subr.bf16.mxu0 0
    %2113 = vmatpush1.bf16.msra.mxu0 0
    %2114 = vmatprep.subr.bf16.mxu0 0
    %2115 = vmatpush1.bf16.msra.mxu0 %v2098
    %2116 = vmatprep.subr.bf16.mxu0 0
    %2117 = vmatpush2.bf16.msra.mxu0 0
    %2118 = vmatprep.subr.bf16.mxu0 0
    %2119 = vmatpush2.bf16.msra.mxu0 0
    %2120 = vmatprep.subr.bf16.mxu0 0
    %2121 = vmatpush2.bf16.msra.mxu0 0
    %2122 = vmatprep.subr.bf16.mxu0 0
    %2123 = vmatpush2.bf16.msra.mxu0 0
    %2124 = vmatprep.subr.bf16.mxu0 0
    %2125 = vmatpush2.bf16.msra.mxu0 0
    %2126 = vmatprep.subr.bf16.mxu0 0
    %2127 = vmatpush2.bf16.msra.mxu0 0
    %2128 = vmatprep.subr.bf16.mxu0 0
    %2129 = vmatpush2.bf16.msra.mxu0 0
    %2130 = vmatprep.subr.bf16.mxu0 0
    %2131 = vmatpush2.bf16.msra.mxu0 0
    %2132 = vmatprep.mubr.bf16.mxu0 0
    %2133 = vmatmul.mubr.bf16.gmra.mxu0 %v2095
    %v2134 = vpop.f32.mrf.mxu0
    %v2135 = vadd.f32 0.0, %v2134
    %v2136 = vpop.f32.mrf.mxu0
    %v2137 = vpop.f32.mrf.mxu0
    %v2138 = vpop.f32.mrf.mxu0
    %2139 = vdwg.mxu0
    %v2141 = vsel %vm1904, %v1996, 0
    %v2144 = vsel %vm2004, %v1506, 0
    %2146 = vmatprep.subr.bf16.mxu0 0
    %2147 = vmatpush1.bf16.msra.mxu0 0
    %2148 = vmatprep.subr.bf16.mxu0 0
    %2149 = vmatpush1.bf16.msra.mxu0 0
    %2150 = vmatprep.subr.bf16.mxu0 0
    %2151 = vmatpush1.bf16.msra.mxu0 0
    %2152 = vmatprep.subr.bf16.mxu0 0
    %2153 = vmatpush1.bf16.msra.mxu0 0
    %2154 = vmatprep.subr.bf16.mxu0 0
    %2155 = vmatpush1.bf16.msra.mxu0 0
    %2156 = vmatprep.subr.bf16.mxu0 0
    %2157 = vmatpush1.bf16.msra.mxu0 0
    %2158 = vmatprep.subr.bf16.mxu0 0
    %2159 = vmatpush1.bf16.msra.mxu0 0
    %2160 = vmatprep.subr.bf16.mxu0 0
    %2161 = vmatpush1.bf16.msra.mxu0 %v2144
    %2162 = vmatprep.subr.bf16.mxu0 0
    %2163 = vmatpush2.bf16.msra.mxu0 0
    %2164 = vmatprep.subr.bf16.mxu0 0
    %2165 = vmatpush2.bf16.msra.mxu0 0
    %2166 = vmatprep.subr.bf16.mxu0 0
    %2167 = vmatpush2.bf16.msra.mxu0 0
    %2168 = vmatprep.subr.bf16.mxu0 0
    %2169 = vmatpush2.bf16.msra.mxu0 0
    %2170 = vmatprep.subr.bf16.mxu0 0
    %2171 = vmatpush2.bf16.msra.mxu0 0
    %2172 = vmatprep.subr.bf16.mxu0 0
    %2173 = vmatpush2.bf16.msra.mxu0 0
    %2174 = vmatprep.subr.bf16.mxu0 0
    %2175 = vmatpush2.bf16.msra.mxu0 0
    %2176 = vmatprep.subr.bf16.mxu0 0
    %2177 = vmatpush2.bf16.msra.mxu0 0
    %2178 = vmatprep.mubr.bf16.mxu0 0
    %2179 = vmatmul.mubr.bf16.gmra.mxu0 %v2141
    %v2180 = vpop.f32.mrf.mxu0
    %v2181 = vadd.f32 0.0, %v2180
    %v2182 = vpop.f32.mrf.mxu0
    %v2183 = vpop.f32.mrf.mxu0
    %v2184 = vpop.f32.mrf.mxu0
    %2185 = vdwg.mxu0
    %v2187 = vsel %vm1904, %v1997, 0
    %v2190 = vsel %vm2004, %v1509, 0
    %2192 = vmatprep.subr.bf16.mxu0 0
    %2193 = vmatpush1.bf16.msra.mxu0 0
    %2194 = vmatprep.subr.bf16.mxu0 0
    %2195 = vmatpush1.bf16.msra.mxu0 0
    %2196 = vmatprep.subr.bf16.mxu0 0
    %2197 = vmatpush1.bf16.msra.mxu0 0
    %2198 = vmatprep.subr.bf16.mxu0 0
    %2199 = vmatpush1.bf16.msra.mxu0 0
    %2200 = vmatprep.subr.bf16.mxu0 0
    %2201 = vmatpush1.bf16.msra.mxu0 0
    %2202 = vmatprep.subr.bf16.mxu0 0
    %2203 = vmatpush1.bf16.msra.mxu0 0
    %2204 = vmatprep.subr.bf16.mxu0 0
    %2205 = vmatpush1.bf16.msra.mxu0 0
    %2206 = vmatprep.subr.bf16.mxu0 0
    %2207 = vmatpush1.bf16.msra.mxu0 %v2190
    %2208 = vmatprep.subr.bf16.mxu0 0
    %2209 = vmatpush2.bf16.msra.mxu0 0
    %2210 = vmatprep.subr.bf16.mxu0 0
    %2211 = vmatpush2.bf16.msra.mxu0 0
    %2212 = vmatprep.subr.bf16.mxu0 0
    %2213 = vmatpush2.bf16.msra.mxu0 0
    %2214 = vmatprep.subr.bf16.mxu0 0
    %2215 = vmatpush2.bf16.msra.mxu0 0
    %2216 = vmatprep.subr.bf16.mxu0 0
    %2217 = vmatpush2.bf16.msra.mxu0 0
    %2218 = vmatprep.subr.bf16.mxu0 0
    %2219 = vmatpush2.bf16.msra.mxu0 0
    %2220 = vmatprep.subr.bf16.mxu0 0
    %2221 = vmatpush2.bf16.msra.mxu0 0
    %2222 = vmatprep.subr.bf16.mxu0 0
    %2223 = vmatpush2.bf16.msra.mxu0 0
    %2224 = vmatprep.mubr.bf16.mxu0 0
    %2225 = vmatmul.mubr.bf16.gmra.mxu0 %v2187
    %v2226 = vpop.f32.mrf.mxu0
    %v2227 = vadd.f32 0.0, %v2226
    %v2228 = vpop.f32.mrf.mxu0
    %v2229 = vpop.f32.mrf.mxu0
    %v2230 = vpop.f32.mrf.mxu0
    %2231 = vdwg.mxu0
    %v2233 = vsel %vm1904, %v1998, 0
    %v2236 = vsel %vm2004, %v1512, 0
    %2238 = vmatprep.subr.bf16.mxu0 0
    %2239 = vmatpush1.bf16.msra.mxu0 0
    %2240 = vmatprep.subr.bf16.mxu0 0
    %2241 = vmatpush1.bf16.msra.mxu0 0
    %2242 = vmatprep.subr.bf16.mxu0 0
    %2243 = vmatpush1.bf16.msra.mxu0 0
    %2244 = vmatprep.subr.bf16.mxu0 0
    %2245 = vmatpush1.bf16.msra.mxu0 0
    %2246 = vmatprep.subr.bf16.mxu0 0
    %2247 = vmatpush1.bf16.msra.mxu0 0
    %2248 = vmatprep.subr.bf16.mxu0 0
    %2249 = vmatpush1.bf16.msra.mxu0 0
    %2250 = vmatprep.subr.bf16.mxu0 0
    %2251 = vmatpush1.bf16.msra.mxu0 0
    %2252 = vmatprep.subr.bf16.mxu0 0
    %2253 = vmatpush1.bf16.msra.mxu0 %v2236
    %2254 = vmatprep.subr.bf16.mxu0 0
    %2255 = vmatpush2.bf16.msra.mxu0 0
    %2256 = vmatprep.subr.bf16.mxu0 0
    %2257 = vmatpush2.bf16.msra.mxu0 0
    %2258 = vmatprep.subr.bf16.mxu0 0
    %2259 = vmatpush2.bf16.msra.mxu0 0
    %2260 = vmatprep.subr.bf16.mxu0 0
    %2261 = vmatpush2.bf16.msra.mxu0 0
    %2262 = vmatprep.subr.bf16.mxu0 0
    %2263 = vmatpush2.bf16.msra.mxu0 0
    %2264 = vmatprep.subr.bf16.mxu0 0
    %2265 = vmatpush2.bf16.msra.mxu0 0
    %2266 = vmatprep.subr.bf16.mxu0 0
    %2267 = vmatpush2.bf16.msra.mxu0 0
    %2268 = vmatprep.subr.bf16.mxu0 0
    %2269 = vmatpush2.bf16.msra.mxu0 0
    %2270 = vmatprep.mubr.bf16.mxu0 0
    %2271 = vmatmul.mubr.bf16.gmra.mxu0 %v2233
    %v2272 = vpop.f32.mrf.mxu0
    %v2273 = vadd.f32 0.0, %v2272
    %v2274 = vpop.f32.mrf.mxu0
    %v2275 = vpop.f32.mrf.mxu0
    %v2276 = vpop.f32.mrf.mxu0
    %2277 = vdwg.mxu0
    %v2279 = vsel %vm1904, %v1999, 0
    %v2282 = vsel %vm2004, %v1515, 0
    %2284 = vmatprep.subr.bf16.mxu0 0
    %2285 = vmatpush1.bf16.msra.mxu0 0
    %2286 = vmatprep.subr.bf16.mxu0 0
    %2287 = vmatpush1.bf16.msra.mxu0 0
    %2288 = vmatprep.subr.bf16.mxu0 0
    %2289 = vmatpush1.bf16.msra.mxu0 0
    %2290 = vmatprep.subr.bf16.mxu0 0
    %2291 = vmatpush1.bf16.msra.mxu0 0
    %2292 = vmatprep.subr.bf16.mxu0 0
    %2293 = vmatpush1.bf16.msra.mxu0 0
    %2294 = vmatprep.subr.bf16.mxu0 0
    %2295 = vmatpush1.bf16.msra.mxu0 0
    %2296 = vmatprep.subr.bf16.mxu0 0
    %2297 = vmatpush1.bf16.msra.mxu0 0
    %2298 = vmatprep.subr.bf16.mxu0 0
    %2299 = vmatpush1.bf16.msra.mxu0 %v2282
    %2300 = vmatprep.subr.bf16.mxu0 0
    %2301 = vmatpush2.bf16.msra.mxu0 0
    %2302 = vmatprep.subr.bf16.mxu0 0
    %2303 = vmatpush2.bf16.msra.mxu0 0
    %2304 = vmatprep.subr.bf16.mxu0 0
    %2305 = vmatpush2.bf16.msra.mxu0 0
    %2306 = vmatprep.subr.bf16.mxu0 0
    %2307 = vmatpush2.bf16.msra.mxu0 0
    %2308 = vmatprep.subr.bf16.mxu0 0
    %2309 = vmatpush2.bf16.msra.mxu0 0
    %2310 = vmatprep.subr.bf16.mxu0 0
    %2311 = vmatpush2.bf16.msra.mxu0 0
    %2312 = vmatprep.subr.bf16.mxu0 0
    %2313 = vmatpush2.bf16.msra.mxu0 0
    %2314 = vmatprep.subr.bf16.mxu0 0
    %2315 = vmatpush2.bf16.msra.mxu0 0
    %2316 = vmatprep.mubr.bf16.mxu0 0
    %2317 = vmatmul.mubr.bf16.gmra.mxu0 %v2279
    %v2318 = vpop.f32.mrf.mxu0
    %v2319 = vadd.f32 0.0, %v2318
    %v2320 = vpop.f32.mrf.mxu0
    %v2321 = vpop.f32.mrf.mxu0
    %v2322 = vpop.f32.mrf.mxu0
    %2323 = vdwg.mxu0
    %v2325 = vsel %vm1904, %v2000, 0
    %v2328 = vsel %vm2004, %v1518, 0
    %2330 = vmatprep.subr.bf16.mxu0 0
    %2331 = vmatpush1.bf16.msra.mxu0 0
    %2332 = vmatprep.subr.bf16.mxu0 0
    %2333 = vmatpush1.bf16.msra.mxu0 0
    %2334 = vmatprep.subr.bf16.mxu0 0
    %2335 = vmatpush1.bf16.msra.mxu0 0
    %2336 = vmatprep.subr.bf16.mxu0 0
    %2337 = vmatpush1.bf16.msra.mxu0 0
    %2338 = vmatprep.subr.bf16.mxu0 0
    %2339 = vmatpush1.bf16.msra.mxu0 0
    %2340 = vmatprep.subr.bf16.mxu0 0
    %2341 = vmatpush1.bf16.msra.mxu0 0
    %2342 = vmatprep.subr.bf16.mxu0 0
    %2343 = vmatpush1.bf16.msra.mxu0 0
    %2344 = vmatprep.subr.bf16.mxu0 0
    %2345 = vmatpush1.bf16.msra.mxu0 %v2328
    %2346 = vmatprep.subr.bf16.mxu0 0
    %2347 = vmatpush2.bf16.msra.mxu0 0
    %2348 = vmatprep.subr.bf16.mxu0 0
    %2349 = vmatpush2.bf16.msra.mxu0 0
    %2350 = vmatprep.subr.bf16.mxu0 0
    %2351 = vmatpush2.bf16.msra.mxu0 0
    %2352 = vmatprep.subr.bf16.mxu0 0
    %2353 = vmatpush2.bf16.msra.mxu0 0
    %2354 = vmatprep.subr.bf16.mxu0 0
    %2355 = vmatpush2.bf16.msra.mxu0 0
    %2356 = vmatprep.subr.bf16.mxu0 0
    %2357 = vmatpush2.bf16.msra.mxu0 0
    %2358 = vmatprep.subr.bf16.mxu0 0
    %2359 = vmatpush2.bf16.msra.mxu0 0
    %2360 = vmatprep.subr.bf16.mxu0 0
    %2361 = vmatpush2.bf16.msra.mxu0 0
    %2362 = vmatprep.mubr.bf16.mxu0 0
    %2363 = vmatmul.mubr.bf16.gmra.mxu0 %v2325
    %v2364 = vpop.f32.mrf.mxu0
    %v2365 = vadd.f32 0.0, %v2364
    %v2366 = vpop.f32.mrf.mxu0
    %v2367 = vpop.f32.mrf.mxu0
    %v2368 = vpop.f32.mrf.mxu0
    %2369 = vdwg.mxu0
    %v2370 = vcombine.low %v2043, %v2135
    %v2371 = vcombine.high %v2043, %v2135
    %v2373 = vunpack.c.l.s4 1983009808
    %v2374 = vunpack.c.0.s8 %v2373
    %v2375 = vlaneseq
    %v2376 = vshrl.u32 %v2375, 7
    %v2377 = vsub.s32 %v2374, %v2376
    %v2378 = vrot.slane %v2370, %v2377
    %v2380 = vunpack.c.l.s4 1983009808
    %v2381 = vunpack.c.0.s8 %v2380
    %v2382 = vlaneseq
    %v2383 = vshrl.u32 %v2382, 7
    %v2384 = vsub.s32 %v2381, %v2383
    %v2385 = vrot.slane %v2371, %v2384
    %v2386 = vcombine.low %v2089, %v2181
    %v2387 = vcombine.high %v2089, %v2181
    %v2389 = vunpack.c.l.s4 1983009808
    %v2390 = vunpack.c.0.s8 %v2389
    %v2391 = vlaneseq
    %v2392 = vshrl.u32 %v2391, 7
    %v2393 = vsub.s32 %v2390, %v2392
    %v2394 = vrot.slane %v2386, %v2393
    %v2396 = vunpack.c.l.s4 1983009808
    %v2397 = vunpack.c.0.s8 %v2396
    %v2398 = vlaneseq
    %v2399 = vshrl.u32 %v2398, 7
    %v2400 = vsub.s32 %v2397, %v2399
    %v2401 = vrot.slane %v2387, %v2400
    %v2402 = vcombine.low %v2378, %v2394
    %v2403 = vcombine.high %v2378, %v2394
    %v2405 = vunpack.c.l.s4 1934713408
    %v2406 = vunpack.c.0.s8 %v2405
    %v2407 = vlaneseq
    %v2408 = vshrl.u32 %v2407, 7
    %v2409 = vsub.s32 %v2406, %v2408
    %v2410 = vrot.slane %v2402, %v2409
    %v2412 = vunpack.c.l.s4 1934713408
    %v2413 = vunpack.c.0.s8 %v2412
    %v2414 = vlaneseq
    %v2415 = vshrl.u32 %v2414, 7
    %v2416 = vsub.s32 %v2413, %v2415
    %v2417 = vrot.slane %v2403, %v2416
    %v2418 = vcombine.low %v2385, %v2401
    %v2419 = vcombine.high %v2385, %v2401
    %v2421 = vunpack.c.l.s4 1934713408
    %v2422 = vunpack.c.0.s8 %v2421
    %v2423 = vlaneseq
    %v2424 = vshrl.u32 %v2423, 7
    %v2425 = vsub.s32 %v2422, %v2424
    %v2426 = vrot.slane %v2418, %v2425
    %v2428 = vunpack.c.l.s4 1934713408
    %v2429 = vunpack.c.0.s8 %v2428
    %v2430 = vlaneseq
    %v2431 = vshrl.u32 %v2430, 7
    %v2432 = vsub.s32 %v2429, %v2431
    %v2433 = vrot.slane %v2419, %v2432
    %v2434 = vcombine.high %v2410, 0.0
    %v2435 = vcombine.high %v2417, 0.0
    %v2436 = vcombine.high %v2426, 0.0
    %v2437 = vcombine.high %v2433, 0.0
    %v2438 = vcombine.low %v2227, %v2319
    %v2439 = vcombine.high %v2227, %v2319
    %v2441 = vunpack.c.l.s4 1983009808
    %v2442 = vunpack.c.0.s8 %v2441
    %v2443 = vlaneseq
    %v2444 = vshrl.u32 %v2443, 7
    %v2445 = vsub.s32 %v2442, %v2444
    %v2446 = vrot.slane %v2438, %v2445
    %v2448 = vunpack.c.l.s4 1983009808
    %v2449 = vunpack.c.0.s8 %v2448
    %v2450 = vlaneseq
    %v2451 = vshrl.u32 %v2450, 7
    %v2452 = vsub.s32 %v2449, %v2451
    %v2453 = vrot.slane %v2439, %v2452
    %v2454 = vcombine.low %v2273, %v2365
    %v2455 = vcombine.high %v2273, %v2365
    %v2457 = vunpack.c.l.s4 1983009808
    %v2458 = vunpack.c.0.s8 %v2457
    %v2459 = vlaneseq
    %v2460 = vshrl.u32 %v2459, 7
    %v2461 = vsub.s32 %v2458, %v2460
    %v2462 = vrot.slane %v2454, %v2461
    %v2464 = vunpack.c.l.s4 1983009808
    %v2465 = vunpack.c.0.s8 %v2464
    %v2466 = vlaneseq
    %v2467 = vshrl.u32 %v2466, 7
    %v2468 = vsub.s32 %v2465, %v2467
    %v2469 = vrot.slane %v2455, %v2468
    %v2470 = vcombine.low %v2446, %v2462
    %v2471 = vcombine.high %v2446, %v2462
    %v2473 = vunpack.c.l.s4 1934713408
    %v2474 = vunpack.c.0.s8 %v2473
    %v2475 = vlaneseq
    %v2476 = vshrl.u32 %v2475, 7
    %v2477 = vsub.s32 %v2474, %v2476
    %v2478 = vrot.slane %v2470, %v2477
    %v2480 = vunpack.c.l.s4 1934713408
    %v2481 = vunpack.c.0.s8 %v2480
    %v2482 = vlaneseq
    %v2483 = vshrl.u32 %v2482, 7
    %v2484 = vsub.s32 %v2481, %v2483
    %v2485 = vrot.slane %v2471, %v2484
    %v2486 = vcombine.low %v2453, %v2469
    %v2487 = vcombine.high %v2453, %v2469
    %v2489 = vunpack.c.l.s4 1934713408
    %v2490 = vunpack.c.0.s8 %v2489
    %v2491 = vlaneseq
    %v2492 = vshrl.u32 %v2491, 7
    %v2493 = vsub.s32 %v2490, %v2492
    %v2494 = vrot.slane %v2486, %v2493
    %v2496 = vunpack.c.l.s4 1934713408
    %v2497 = vunpack.c.0.s8 %v2496
    %v2498 = vlaneseq
    %v2499 = vshrl.u32 %v2498, 7
    %v2500 = vsub.s32 %v2497, %v2499
    %v2501 = vrot.slane %v2487, %v2500
    %v2502 = vcombine.high %v2478, 0.0
    %v2503 = vcombine.high %v2485, 0.0
    %v2504 = vcombine.high %v2494, 0.0
    %v2505 = vcombine.high %v2501, 0.0
    %v2506 = vcombine.low %v2410, %v2417
    %v2508 = vunpack.c.l.s4 1983009808
    %v2509 = vunpack.c.0.s8 %v2508
    %v2510 = vlaneseq
    %v2511 = vshrl.u32 %v2510, 7
    %v2512 = vsub.s32 %v2509, %v2511
    %v2513 = vrot.slane %v2506, %v2512
    %v2514 = vcombine.low %v2434, %v2435
    %v2516 = vunpack.c.l.s4 1983009808
    %v2517 = vunpack.c.0.s8 %v2516
    %v2518 = vlaneseq
    %v2519 = vshrl.u32 %v2518, 7
    %v2520 = vsub.s32 %v2517, %v2519
    %v2521 = vrot.slane %v2514, %v2520
    %v2522 = vcombine.low %v2426, %v2433
    %v2524 = vunpack.c.l.s4 1983009808
    %v2525 = vunpack.c.0.s8 %v2524
    %v2526 = vlaneseq
    %v2527 = vshrl.u32 %v2526, 7
    %v2528 = vsub.s32 %v2525, %v2527
    %v2529 = vrot.slane %v2522, %v2528
    %v2530 = vcombine.low %v2436, %v2437
    %v2532 = vunpack.c.l.s4 1983009808
    %v2533 = vunpack.c.0.s8 %v2532
    %v2534 = vlaneseq
    %v2535 = vshrl.u32 %v2534, 7
    %v2536 = vsub.s32 %v2533, %v2535
    %v2537 = vrot.slane %v2530, %v2536
    %v2538 = vcombine.low %v2513, %v2521
    %v2539 = vcombine.high %v2513, %v2521
    %v2541 = vunpack.c.l.s4 1934713408
    %v2542 = vunpack.c.0.s8 %v2541
    %v2543 = vlaneseq
    %v2544 = vshrl.u32 %v2543, 7
    %v2545 = vsub.s32 %v2542, %v2544
    %v2546 = vrot.slane %v2538, %v2545
    %v2548 = vunpack.c.l.s4 1934713408
    %v2549 = vunpack.c.0.s8 %v2548
    %v2550 = vlaneseq
    %v2551 = vshrl.u32 %v2550, 7
    %v2552 = vsub.s32 %v2549, %v2551
    %v2553 = vrot.slane %v2539, %v2552
    %v2554 = vcombine.low %v2529, %v2537
    %v2555 = vcombine.high %v2529, %v2537
    %v2557 = vunpack.c.l.s4 1934713408
    %v2558 = vunpack.c.0.s8 %v2557
    %v2559 = vlaneseq
    %v2560 = vshrl.u32 %v2559, 7
    %v2561 = vsub.s32 %v2558, %v2560
    %v2562 = vrot.slane %v2554, %v2561
    %v2564 = vunpack.c.l.s4 1934713408
    %v2565 = vunpack.c.0.s8 %v2564
    %v2566 = vlaneseq
    %v2567 = vshrl.u32 %v2566, 7
    %v2568 = vsub.s32 %v2565, %v2567
    %v2569 = vrot.slane %v2555, %v2568
    %v2570 = vcombine.low %v2546, %v2562
    %v2571 = vcombine.high %v2546, %v2562
    %v2572 = vcombine.low %v2553, %v2569
    %v2573 = vcombine.high %v2553, %v2569
    %v2574 = vcombine.low %v2478, %v2485
    %v2576 = vunpack.c.l.s4 1983009808
    %v2577 = vunpack.c.0.s8 %v2576
    %v2578 = vlaneseq
    %v2579 = vshrl.u32 %v2578, 7
    %v2580 = vsub.s32 %v2577, %v2579
    %v2581 = vrot.slane %v2574, %v2580
    %v2582 = vcombine.low %v2502, %v2503
    %v2584 = vunpack.c.l.s4 1983009808
    %v2585 = vunpack.c.0.s8 %v2584
    %v2586 = vlaneseq
    %v2587 = vshrl.u32 %v2586, 7
    %v2588 = vsub.s32 %v2585, %v2587
    %v2589 = vrot.slane %v2582, %v2588
    %v2590 = vcombine.low %v2494, %v2501
    %v2592 = vunpack.c.l.s4 1983009808
    %v2593 = vunpack.c.0.s8 %v2592
    %v2594 = vlaneseq
    %v2595 = vshrl.u32 %v2594, 7
    %v2596 = vsub.s32 %v2593, %v2595
    %v2597 = vrot.slane %v2590, %v2596
    %v2598 = vcombine.low %v2504, %v2505
    %v2600 = vunpack.c.l.s4 1983009808
    %v2601 = vunpack.c.0.s8 %v2600
    %v2602 = vlaneseq
    %v2603 = vshrl.u32 %v2602, 7
    %v2604 = vsub.s32 %v2601, %v2603
    %v2605 = vrot.slane %v2598, %v2604
    %v2606 = vcombine.low %v2581, %v2589
    %v2607 = vcombine.high %v2581, %v2589
    %v2609 = vunpack.c.l.s4 1934713408
    %v2610 = vunpack.c.0.s8 %v2609
    %v2611 = vlaneseq
    %v2612 = vshrl.u32 %v2611, 7
    %v2613 = vsub.s32 %v2610, %v2612
    %v2614 = vrot.slane %v2606, %v2613
    %v2616 = vunpack.c.l.s4 1934713408
    %v2617 = vunpack.c.0.s8 %v2616
    %v2618 = vlaneseq
    %v2619 = vshrl.u32 %v2618, 7
    %v2620 = vsub.s32 %v2617, %v2619
    %v2621 = vrot.slane %v2607, %v2620
    %v2622 = vcombine.low %v2597, %v2605
    %v2623 = vcombine.high %v2597, %v2605
    %v2625 = vunpack.c.l.s4 1934713408
    %v2626 = vunpack.c.0.s8 %v2625
    %v2627 = vlaneseq
    %v2628 = vshrl.u32 %v2627, 7
    %v2629 = vsub.s32 %v2626, %v2628
    %v2630 = vrot.slane %v2622, %v2629
    %v2632 = vunpack.c.l.s4 1934713408
    %v2633 = vunpack.c.0.s8 %v2632
    %v2634 = vlaneseq
    %v2635 = vshrl.u32 %v2634, 7
    %v2636 = vsub.s32 %v2633, %v2635
    %v2637 = vrot.slane %v2623, %v2636
    %v2638 = vcombine.low %v2614, %v2630
    %v2639 = vcombine.high %v2614, %v2630
    %v2640 = vcombine.low %v2621, %v2637
    %v2641 = vcombine.high %v2621, %v2637
    %2644 = vrot.lane.b32.xlu0 %v2571, 32
    %v2645 = vpop.permute.xlu0 %2644
    %2646 = vrot.lane.b32.xlu0 %v2639, 32
    %v2647 = vpop.permute.xlu0 %2646
    %2652 = vrot.lane.b32.xlu0 %v2572, 64
    %v2653 = vpop.permute.xlu0 %2652
    %2654 = vrot.lane.b32.xlu0 %v2640, 64
    %v2655 = vpop.permute.xlu0 %2654
    %2660 = vrot.lane.b32.xlu0 %v2573, 96
    %v2661 = vpop.permute.xlu0 %2660
    %2662 = vrot.lane.b32.xlu0 %v2641, 96
    %v2663 = vpop.permute.xlu0 %2662
    %v2666 = vsel %vm1519, %v2570, %v2645
    %v2667 = vsel %vm1519, %v2638, %v2647
    %vm2668 = vcmask 523264
    %v2669 = vsel %vm2668, %v2666, %v2653
    %v2670 = vsel %vm2668, %v2667, %v2655
    %vm2671 = vcmask 785408
    %v2672 = vsel %vm2671, %v2669, %v2661
    %v2673 = vsel %vm2671, %v2670, %v2663
    %v2674 = vpack.c.bf16 %v2673, %v2672
    %v2675 = vld [vmem:[#allocation11] sm:$0xf]
    %v2676 = vld [vmem:[#allocation11 + $0x4] sm:$0xf]
    %v2677 = vld [vmem:[#allocation11 + $0x8] sm:$0xf]
    %v2678 = vld [vmem:[#allocation11 + $0xc] sm:$0xf]
    %v2679 = vld [vmem:[#allocation11 + $0x10] sm:$0xf]
    %v2680 = vld [vmem:[#allocation11 + $0x14] sm:$0xf]
    %v2681 = vld [vmem:[#allocation11 + $0x18] sm:$0xf]
    %v2682 = vld [vmem:[#allocation11 + $0x1c] sm:$0xf]
    %v2683 = vld [vmem:[#allocation11 + $0x20] sm:$0xf]
    %v2684 = vld [vmem:[#allocation11 + $0x24] sm:$0xf]
    %v2685 = vld [vmem:[#allocation11 + $0x28] sm:$0xf]
    %v2686 = vld [vmem:[#allocation11 + $0x2c] sm:$0xf]
    %v2687 = vld [vmem:[#allocation11 + $0x30] sm:$0xf]
    %v2688 = vld [vmem:[#allocation11 + $0x34] sm:$0xf]
    %v2689 = vld [vmem:[#allocation11 + $0x38] sm:$0xf]
    %v2690 = vld [vmem:[#allocation11 + $0x3c] sm:$0xf]
    %v2691 = vld [vmem:[%s21] sm:$0x1]
    %v2693 = vlaneseq
    %v2694 = vshrl.u32 %v2693, 7
    %v2695 = vsub.s32 0, %v2694
    %v2696 = vrot.slane %v2691, %v2695
    %v2714 = vunpack.c.l.b16 %v2675
    %v2715 = vunpack.c.l.b16 %v2676
    %v2716 = vunpack.c.l.b16 %v2677
    %v2717 = vunpack.c.l.b16 %v2678
    %v2718 = vunpack.c.l.b16 %v2679
    %v2719 = vunpack.c.l.b16 %v2680
    %v2720 = vunpack.c.l.b16 %v2681
    %v2721 = vunpack.c.l.b16 %v2682
    %v2722 = vunpack.c.l.b16 %v2683
    %v2723 = vunpack.c.l.b16 %v2684
    %v2724 = vunpack.c.l.b16 %v2685
    %v2725 = vunpack.c.l.b16 %v2686
    %v2726 = vunpack.c.l.b16 %v2687
    %v2727 = vunpack.c.l.b16 %v2688
    %v2728 = vunpack.c.l.b16 %v2689
    %v2729 = vunpack.c.l.b16 %v2690
    %v2730 = vpack.c.b16 %v2715, %v2714
    %v2731 = vpack.c.b16 %v2717, %v2716
    %v2732 = vpack.c.b16 %v2719, %v2718
    %v2733 = vpack.c.b16 %v2721, %v2720
    %v2734 = vpack.c.b16 %v2723, %v2722
    %v2735 = vpack.c.b16 %v2725, %v2724
    %v2736 = vpack.c.b16 %v2727, %v2726
    %v2737 = vpack.c.b16 %v2729, %v2728
    %2746 = vmatprep.subr.bf16.mxu0 0
    %2747 = vmatpush1.bf16.msra.mxu0 %v2737
    %2748 = vmatprep.subr.bf16.mxu0 0
    %2749 = vmatpush1.bf16.msra.mxu0 %v2736
    %2750 = vmatprep.subr.bf16.mxu0 0
    %2751 = vmatpush1.bf16.msra.mxu0 %v2735
    %2752 = vmatprep.subr.bf16.mxu0 0
    %2753 = vmatpush1.bf16.msra.mxu0 %v2734
    %2754 = vmatprep.subr.bf16.mxu0 0
    %2755 = vmatpush1.bf16.msra.mxu0 %v2733
    %2756 = vmatprep.subr.bf16.mxu0 0
    %2757 = vmatpush1.bf16.msra.mxu0 %v2732
    %2758 = vmatprep.subr.bf16.mxu0 0
    %2759 = vmatpush1.bf16.msra.mxu0 %v2731
    %2760 = vmatprep.subr.bf16.mxu0 0
    %2761 = vmatpush1.bf16.msra.mxu0 %v2730
    %2762 = vmatprep.subr.bf16.mxu0 0
    %2763 = vmatpush2.bf16.msra.mxu0 0
    %2764 = vmatprep.subr.bf16.mxu0 0
    %2765 = vmatpush2.bf16.msra.mxu0 0
    %2766 = vmatprep.subr.bf16.mxu0 0
    %2767 = vmatpush2.bf16.msra.mxu0 0
    %2768 = vmatprep.subr.bf16.mxu0 0
    %2769 = vmatpush2.bf16.msra.mxu0 0
    %2770 = vmatprep.subr.bf16.mxu0 0
    %2771 = vmatpush2.bf16.msra.mxu0 0
    %2772 = vmatprep.subr.bf16.mxu0 0
    %2773 = vmatpush2.bf16.msra.mxu0 0
    %2774 = vmatprep.subr.bf16.mxu0 0
    %2775 = vmatpush2.bf16.msra.mxu0 0
    %2776 = vmatprep.subr.bf16.mxu0 0
    %2777 = vmatpush2.bf16.msra.mxu0 0
    %2778 = vmatprep.mubr.bf16.mxu0 0
    %2779 = vmatmul.mubr.bf16.gmra.mxu0 %v2674
    %v2780 = vpop.f32.mrf.mxu0
    %v2781 = vadd.f32 %v2696, %v2780
    %v2782 = vpop.f32.mrf.mxu0
    %v2783 = vpop.f32.mrf.mxu0
    %v2784 = vadd.f32 %v2696, %v2783
    %v2785 = vpop.f32.mrf.mxu0
    %2786 = vdwg.mxu0
    %v2787 = vadd.f32 %v2781, %v329
    %v2788 = vadd.f32 %v2784, %v330
    %2789 = vadd.xlane.f32.xlu0 %v2787
    %v2790 = vpop.xlane.xlu0 %2789
    %2791 = vadd.xlane.f32.xlu0 %v2788
    %v2792 = vpop.xlane.xlu0 %2791
    %v2793 = vrcp.pop 128.0
    %v2794 = vmul.f32 %v2790, %v2793
    %v2795 = vmul.f32 %v2792, %v2793
    %v2796 = vsub.f32 %v2787, %v2794
    %v2797 = vsub.f32 %v2788, %v2795
    %v2798 = vmul.f32 %v2796, %v2796
    %v2799 = vmul.f32 %v2797, %v2797
    %2800 = vadd.xlane.f32.xlu0 %v2798
    %v2801 = vpop.xlane.xlu0 %2800
    %2802 = vadd.xlane.f32.xlu0 %v2799
    %v2803 = vpop.xlane.xlu0 %2802
    %v2804 = vmul.f32 %v2801, %v2793
    %v2805 = vmul.f32 %v2803, %v2793
    %v2806 = vadd.f32 %v2804, 1e-05
    %v2807 = vadd.f32 %v2805, 1e-05
    %v2808 = vrsqrt.pop %v2806
    %v2809 = vrsqrt.pop %v2807
    %v2810 = vmul.f32 %v2796, %v2808
    %v2811 = vmul.f32 %v2797, %v2809
    %v2812 = vld [vmem:[%s23] sm:$0x1]
    %v2814 = vlaneseq
    %v2815 = vshrl.u32 %v2814, 7
    %v2816 = vsub.s32 0, %v2815
    %v2817 = vrot.slane %v2812, %v2816
    %v2819 = vmul.f32 %v2810, %v2817
    %v2820 = vmul.f32 %v2811, %v2817
    %v2821 = vld [vmem:[%s25] sm:$0x1]
    %v2823 = vlaneseq
    %v2824 = vshrl.u32 %v2823, 7
    %v2825 = vsub.s32 0, %v2824
    %v2826 = vrot.slane %v2821, %v2825
    %v2828 = vadd.f32 %v2819, %v2826
    %v2829 = vadd.f32 %v2820, %v2826
    %v2830 = vpack.c.bf16 %v2829, %v2828
    %v2832 = vunpack.c.l.s4 1966171168
    %v2833 = vunpack.c.0.s8 %v2832
    %v2834 = vlaneseq
    %v2835 = vshrl.u32 %v2834, 7
    %v2836 = vsub.s32 %v2833, %v2835
    %v2837 = vrot.slane %v324, %v2836
    %v2838 = vcombine.high %v2837, %v2837
    %v2840 = vunpack.c.l.s4 1966171168
    %v2841 = vunpack.c.0.s8 %v2840
    %v2842 = vlaneseq
    %v2843 = vshrl.u32 %v2842, 7
    %v2844 = vsub.s32 %v2841, %v2843
    %v2845 = vrot.slane %v2837, %v2844
    %v2847 = vunpack.c.l.s4 1966171168
    %v2848 = vunpack.c.0.s8 %v2847
    %v2849 = vlaneseq
    %v2850 = vshrl.u32 %v2849, 7
    %v2851 = vsub.s32 %v2848, %v2850
    %v2852 = vrot.slane %v2838, %v2851
    %v2853 = vcombine.high %v2845, %v2845
    %v2854 = vcombine.high %v2852, %v2852
    %v2856 = vunpack.c.l.s4 1966171168
    %v2857 = vunpack.c.0.s8 %v2856
    %v2858 = vlaneseq
    %v2859 = vshrl.u32 %v2858, 7
    %v2860 = vsub.s32 %v2857, %v2859
    %v2861 = vrot.slane %v328, %v2860
    %v2862 = vcombine.high %v2861, %v2861
    %v2864 = vunpack.c.l.s4 1966171168
    %v2865 = vunpack.c.0.s8 %v2864
    %v2866 = vlaneseq
    %v2867 = vshrl.u32 %v2866, 7
    %v2868 = vsub.s32 %v2865, %v2867
    %v2869 = vrot.slane %v2861, %v2868
    %v2871 = vunpack.c.l.s4 1966171168
    %v2872 = vunpack.c.0.s8 %v2871
    %v2873 = vlaneseq
    %v2874 = vshrl.u32 %v2873, 7
    %v2875 = vsub.s32 %v2872, %v2874
    %v2876 = vrot.slane %v2862, %v2875
    %v2877 = vcombine.high %v2869, %v2869
    %v2878 = vcombine.high %v2876, %v2876
    %v2879 = vld [vmem:[#allocation13] sm:$0xf]
    %v2880 = vld [vmem:[#allocation13 + $0x4] sm:$0xf]
    %v2881 = vld [vmem:[#allocation13 + $0x8] sm:$0xf]
    %v2882 = vld [vmem:[#allocation13 + $0xc] sm:$0xf]
    %v2883 = vld [vmem:[#allocation13 + $0x10] sm:$0xf]
    %v2884 = vld [vmem:[#allocation13 + $0x14] sm:$0xf]
    %v2885 = vld [vmem:[#allocation13 + $0x18] sm:$0xf]
    %v2886 = vld [vmem:[#allocation13 + $0x1c] sm:$0xf]
    %v2887 = vld [vmem:[#allocation13 + $0x20] sm:$0xf]
    %v2888 = vld [vmem:[#allocation13 + $0x24] sm:$0xf]
    %v2889 = vld [vmem:[#allocation13 + $0x28] sm:$0xf]
    %v2890 = vld [vmem:[#allocation13 + $0x2c] sm:$0xf]
    %v2891 = vld [vmem:[#allocation13 + $0x30] sm:$0xf]
    %v2892 = vld [vmem:[#allocation13 + $0x34] sm:$0xf]
    %v2893 = vld [vmem:[#allocation13 + $0x38] sm:$0xf]
    %v2894 = vld [vmem:[#allocation13 + $0x3c] sm:$0xf]
    %v2895 = vld [vmem:[%s29] sm:$0x1]
    %v2897 = vlaneseq
    %v2898 = vshrl.u32 %v2897, 7
    %v2899 = vsub.s32 0, %v2898
    %v2900 = vrot.slane %v2895, %v2899
    %v2918 = vunpack.c.l.b16 %v2879
    %v2919 = vunpack.c.l.b16 %v2880
    %v2920 = vunpack.c.l.b16 %v2881
    %v2921 = vunpack.c.l.b16 %v2882
    %v2922 = vunpack.c.l.b16 %v2883
    %v2923 = vunpack.c.l.b16 %v2884
    %v2924 = vunpack.c.l.b16 %v2885
    %v2925 = vunpack.c.l.b16 %v2886
    %v2926 = vunpack.c.l.b16 %v2887
    %v2927 = vunpack.c.l.b16 %v2888
    %v2928 = vunpack.c.l.b16 %v2889
    %v2929 = vunpack.c.l.b16 %v2890
    %v2930 = vunpack.c.l.b16 %v2891
    %v2931 = vunpack.c.l.b16 %v2892
    %v2932 = vunpack.c.l.b16 %v2893
    %v2933 = vunpack.c.l.b16 %v2894
    %v2934 = vpack.c.b16 %v2919, %v2918
    %v2935 = vpack.c.b16 %v2921, %v2920
    %v2936 = vpack.c.b16 %v2923, %v2922
    %v2937 = vpack.c.b16 %v2925, %v2924
    %v2938 = vpack.c.b16 %v2927, %v2926
    %v2939 = vpack.c.b16 %v2929, %v2928
    %v2940 = vpack.c.b16 %v2931, %v2930
    %v2941 = vpack.c.b16 %v2933, %v2932
    %2950 = vmatprep.subr.bf16.mxu0 0
    %2951 = vmatpush1.bf16.msra.mxu0 %v2941
    %2952 = vmatprep.subr.bf16.mxu0 0
    %2953 = vmatpush1.bf16.msra.mxu0 %v2940
    %2954 = vmatprep.subr.bf16.mxu0 0
    %2955 = vmatpush1.bf16.msra.mxu0 %v2939
    %2956 = vmatprep.subr.bf16.mxu0 0
    %2957 = vmatpush1.bf16.msra.mxu0 %v2938
    %2958 = vmatprep.subr.bf16.mxu0 0
    %2959 = vmatpush1.bf16.msra.mxu0 %v2937
    %2960 = vmatprep.subr.bf16.mxu0 0
    %2961 = vmatpush1.bf16.msra.mxu0 %v2936
    %2962 = vmatprep.subr.bf16.mxu0 0
    %2963 = vmatpush1.bf16.msra.mxu0 %v2935
    %2964 = vmatprep.subr.bf16.mxu0 0
    %2965 = vmatpush1.bf16.msra.mxu0 %v2934
    %2966 = vmatprep.subr.bf16.mxu0 0
    %2967 = vmatpush2.bf16.msra.mxu0 0
    %2968 = vmatprep.subr.bf16.mxu0 0
    %2969 = vmatpush2.bf16.msra.mxu0 0
    %2970 = vmatprep.subr.bf16.mxu0 0
    %2971 = vmatpush2.bf16.msra.mxu0 0
    %2972 = vmatprep.subr.bf16.mxu0 0
    %2973 = vmatpush2.bf16.msra.mxu0 0
    %2974 = vmatprep.subr.bf16.mxu0 0
    %2975 = vmatpush2.bf16.msra.mxu0 0
    %2976 = vmatprep.subr.bf16.mxu0 0
    %2977 = vmatpush2.bf16.msra.mxu0 0
    %2978 = vmatprep.subr.bf16.mxu0 0
    %2979 = vmatpush2.bf16.msra.mxu0 0
    %2980 = vmatprep.subr.bf16.mxu0 0
    %2981 = vmatpush2.bf16.msra.mxu0 0
    %2982 = vmatprep.mubr.bf16.mxu0 0
    %2983 = vmatmul.mubr.bf16.gmra.mxu0 %v2830
    %v2984 = vpop.f32.mrf.mxu0
    %v2985 = vadd.f32 %v2900, %v2984
    %v2986 = vpop.f32.mrf.mxu0
    %v2987 = vpop.f32.mrf.mxu0
    %v2988 = vadd.f32 %v2900, %v2987
    %v2989 = vpop.f32.mrf.mxu0
    %2990 = vdwg.mxu0
    %v2991 = vld [vmem:[#allocation14] sm:$0xf]
    %v2992 = vld [vmem:[#allocation14 + $0x4] sm:$0xf]
    %v2993 = vld [vmem:[#allocation14 + $0x8] sm:$0xf]
    %v2994 = vld [vmem:[#allocation14 + $0xc] sm:$0xf]
    %v2995 = vld [vmem:[#allocation14 + $0x10] sm:$0xf]
    %v2996 = vld [vmem:[#allocation14 + $0x14] sm:$0xf]
    %v2997 = vld [vmem:[#allocation14 + $0x18] sm:$0xf]
    %v2998 = vld [vmem:[#allocation14 + $0x1c] sm:$0xf]
    %v2999 = vld [vmem:[#allocation14 + $0x20] sm:$0xf]
    %v3000 = vld [vmem:[#allocation14 + $0x24] sm:$0xf]
    %v3001 = vld [vmem:[#allocation14 + $0x28] sm:$0xf]
    %v3002 = vld [vmem:[#allocation14 + $0x2c] sm:$0xf]
    %v3003 = vld [vmem:[#allocation14 + $0x30] sm:$0xf]
    %v3004 = vld [vmem:[#allocation14 + $0x34] sm:$0xf]
    %v3005 = vld [vmem:[#allocation14 + $0x38] sm:$0xf]
    %v3006 = vld [vmem:[#allocation14 + $0x3c] sm:$0xf]
    %v3007 = vld [vmem:[%s33] sm:$0x1]
    %v3009 = vlaneseq
    %v3010 = vshrl.u32 %v3009, 7
    %v3011 = vsub.s32 0, %v3010
    %v3012 = vrot.slane %v3007, %v3011
    %v3016 = vunpack.c.l.b16 %v289
    %v3017 = vunpack.c.l.b16 %v290
    %v3018 = vpack.c.b16 %v3017, %v3016
    %v3036 = vunpack.c.l.b16 %v2991
    %v3037 = vunpack.c.l.b16 %v2992
    %v3038 = vunpack.c.l.b16 %v2993
    %v3039 = vunpack.c.l.b16 %v2994
    %v3040 = vunpack.c.l.b16 %v2995
    %v3041 = vunpack.c.l.b16 %v2996
    %v3042 = vunpack.c.l.b16 %v2997
    %v3043 = vunpack.c.l.b16 %v2998
    %v3044 = vunpack.c.l.b16 %v2999
    %v3045 = vunpack.c.l.b16 %v3000
    %v3046 = vunpack.c.l.b16 %v3001
    %v3047 = vunpack.c.l.b16 %v3002
    %v3048 = vunpack.c.l.b16 %v3003
    %v3049 = vunpack.c.l.b16 %v3004
    %v3050 = vunpack.c.l.b16 %v3005
    %v3051 = vunpack.c.l.b16 %v3006
    %v3052 = vpack.c.b16 %v3037, %v3036
    %v3053 = vpack.c.b16 %v3039, %v3038
    %v3054 = vpack.c.b16 %v3041, %v3040
    %v3055 = vpack.c.b16 %v3043, %v3042
    %v3056 = vpack.c.b16 %v3045, %v3044
    %v3057 = vpack.c.b16 %v3047, %v3046
    %v3058 = vpack.c.b16 %v3049, %v3048
    %v3059 = vpack.c.b16 %v3051, %v3050
    %3068 = vmatprep.subr.bf16.mxu0 0
    %3069 = vmatpush1.bf16.msra.mxu0 %v3059
    %3070 = vmatprep.subr.bf16.mxu0 0
    %3071 = vmatpush1.bf16.msra.mxu0 %v3058
    %3072 = vmatprep.subr.bf16.mxu0 0
    %3073 = vmatpush1.bf16.msra.mxu0 %v3057
    %3074 = vmatprep.subr.bf16.mxu0 0
    %3075 = vmatpush1.bf16.msra.mxu0 %v3056
    %3076 = vmatprep.subr.bf16.mxu0 0
    %3077 = vmatpush1.bf16.msra.mxu0 %v3055
    %3078 = vmatprep.subr.bf16.mxu0 0
    %3079 = vmatpush1.bf16.msra.mxu0 %v3054
    %3080 = vmatprep.subr.bf16.mxu0 0
    %3081 = vmatpush1.bf16.msra.mxu0 %v3053
    %3082 = vmatprep.subr.bf16.mxu0 0
    %3083 = vmatpush1.bf16.msra.mxu0 %v3052
    %3084 = vmatprep.subr.bf16.mxu0 0
    %3085 = vmatpush2.bf16.msra.mxu0 0
    %3086 = vmatprep.subr.bf16.mxu0 0
    %3087 = vmatpush2.bf16.msra.mxu0 0
    %3088 = vmatprep.subr.bf16.mxu0 0
    %3089 = vmatpush2.bf16.msra.mxu0 0
    %3090 = vmatprep.subr.bf16.mxu0 0
    %3091 = vmatpush2.bf16.msra.mxu0 0
    %3092 = vmatprep.subr.bf16.mxu0 0
    %3093 = vmatpush2.bf16.msra.mxu0 0
    %3094 = vmatprep.subr.bf16.mxu0 0
    %3095 = vmatpush2.bf16.msra.mxu0 0
    %3096 = vmatprep.subr.bf16.mxu0 0
    %3097 = vmatpush2.bf16.msra.mxu0 0
    %3098 = vmatprep.subr.bf16.mxu0 0
    %3099 = vmatpush2.bf16.msra.mxu0 0
    %3100 = vmatprep.mubr.bf16.mxu0 0
    %3101 = vmatmul.mubr.bf16.gmra.mxu0 %v3018
    %v3102 = vpop.f32.mrf.mxu0
    %v3103 = vadd.f32 %v3012, %v3102
    %v3104 = vpop.f32.mrf.mxu0
    %v3105 = vpop.f32.mrf.mxu0
    %v3106 = vadd.f32 %v3012, %v3105
    %v3107 = vpop.f32.mrf.mxu0
    %3108 = vdwg.mxu0
    %v3109 = vld [vmem:[#allocation16] sm:$0xf]
    %v3110 = vld [vmem:[#allocation16 + $0x4] sm:$0xf]
    %v3111 = vld [vmem:[#allocation16 + $0x8] sm:$0xf]
    %v3112 = vld [vmem:[#allocation16 + $0xc] sm:$0xf]
    %v3113 = vld [vmem:[#allocation16 + $0x10] sm:$0xf]
    %v3114 = vld [vmem:[#allocation16 + $0x14] sm:$0xf]
    %v3115 = vld [vmem:[#allocation16 + $0x18] sm:$0xf]
    %v3116 = vld [vmem:[#allocation16 + $0x1c] sm:$0xf]
    %v3117 = vld [vmem:[#allocation16 + $0x20] sm:$0xf]
    %v3118 = vld [vmem:[#allocation16 + $0x24] sm:$0xf]
    %v3119 = vld [vmem:[#allocation16 + $0x28] sm:$0xf]
    %v3120 = vld [vmem:[#allocation16 + $0x2c] sm:$0xf]
    %v3121 = vld [vmem:[#allocation16 + $0x30] sm:$0xf]
    %v3122 = vld [vmem:[#allocation16 + $0x34] sm:$0xf]
    %v3123 = vld [vmem:[#allocation16 + $0x38] sm:$0xf]
    %v3124 = vld [vmem:[#allocation16 + $0x3c] sm:$0xf]
    %v3125 = vld [vmem:[%s37] sm:$0x1]
    %v3127 = vlaneseq
    %v3128 = vshrl.u32 %v3127, 7
    %v3129 = vsub.s32 0, %v3128
    %v3130 = vrot.slane %v3125, %v3129
    %v3148 = vunpack.c.l.b16 %v3109
    %v3149 = vunpack.c.l.b16 %v3110
    %v3150 = vunpack.c.l.b16 %v3111
    %v3151 = vunpack.c.l.b16 %v3112
    %v3152 = vunpack.c.l.b16 %v3113
    %v3153 = vunpack.c.l.b16 %v3114
    %v3154 = vunpack.c.l.b16 %v3115
    %v3155 = vunpack.c.l.b16 %v3116
    %v3156 = vunpack.c.l.b16 %v3117
    %v3157 = vunpack.c.l.b16 %v3118
    %v3158 = vunpack.c.l.b16 %v3119
    %v3159 = vunpack.c.l.b16 %v3120
    %v3160 = vunpack.c.l.b16 %v3121
    %v3161 = vunpack.c.l.b16 %v3122
    %v3162 = vunpack.c.l.b16 %v3123
    %v3163 = vunpack.c.l.b16 %v3124
    %v3164 = vpack.c.b16 %v3149, %v3148
    %v3165 = vpack.c.b16 %v3151, %v3150
    %v3166 = vpack.c.b16 %v3153, %v3152
    %v3167 = vpack.c.b16 %v3155, %v3154
    %v3168 = vpack.c.b16 %v3157, %v3156
    %v3169 = vpack.c.b16 %v3159, %v3158
    %v3170 = vpack.c.b16 %v3161, %v3160
    %v3171 = vpack.c.b16 %v3163, %v3162
    %3180 = vmatprep.subr.bf16.mxu0 0
    %3181 = vmatpush1.bf16.msra.mxu0 %v3171
    %3182 = vmatprep.subr.bf16.mxu0 0
    %3183 = vmatpush1.bf16.msra.mxu0 %v3170
    %3184 = vmatprep.subr.bf16.mxu0 0
    %3185 = vmatpush1.bf16.msra.mxu0 %v3169
    %3186 = vmatprep.subr.bf16.mxu0 0
    %3187 = vmatpush1.bf16.msra.mxu0 %v3168
    %3188 = vmatprep.subr.bf16.mxu0 0
    %3189 = vmatpush1.bf16.msra.mxu0 %v3167
    %3190 = vmatprep.subr.bf16.mxu0 0
    %3191 = vmatpush1.bf16.msra.mxu0 %v3166
    %3192 = vmatprep.subr.bf16.mxu0 0
    %3193 = vmatpush1.bf16.msra.mxu0 %v3165
    %3194 = vmatprep.subr.bf16.mxu0 0
    %3195 = vmatpush1.bf16.msra.mxu0 %v3164
    %3196 = vmatprep.subr.bf16.mxu0 0
    %3197 = vmatpush2.bf16.msra.mxu0 0
    %3198 = vmatprep.subr.bf16.mxu0 0
    %3199 = vmatpush2.bf16.msra.mxu0 0
    %3200 = vmatprep.subr.bf16.mxu0 0
    %3201 = vmatpush2.bf16.msra.mxu0 0
    %3202 = vmatprep.subr.bf16.mxu0 0
    %3203 = vmatpush2.bf16.msra.mxu0 0
    %3204 = vmatprep.subr.bf16.mxu0 0
    %3205 = vmatpush2.bf16.msra.mxu0 0
    %3206 = vmatprep.subr.bf16.mxu0 0
    %3207 = vmatpush2.bf16.msra.mxu0 0
    %3208 = vmatprep.subr.bf16.mxu0 0
    %3209 = vmatpush2.bf16.msra.mxu0 0
    %3210 = vmatprep.subr.bf16.mxu0 0
    %3211 = vmatpush2.bf16.msra.mxu0 0
    %3212 = vmatprep.mubr.bf16.mxu0 0
    %3213 = vmatmul.mubr.bf16.gmra.mxu0 %v3018
    %v3214 = vpop.f32.mrf.mxu0
    %v3215 = vadd.f32 %v3130, %v3214
    %v3216 = vpop.f32.mrf.mxu0
    %v3217 = vpop.f32.mrf.mxu0
    %v3218 = vadd.f32 %v3130, %v3217
    %v3219 = vpop.f32.mrf.mxu0
    %3220 = vdwg.mxu0
    %v3221 = vpack.c.bf16 %v2988, %v2985
    %3223 = vrot.lane.b32.xlu0 %v3221, 96
    %v3224 = vpop.permute.xlu0 %3223
    %3225 = vrot.lane.b32.xlu0 %v3221, 64
    %v3226 = vpop.permute.xlu0 %3225
    %3227 = vrot.lane.b32.xlu0 %v3221, 32
    %v3228 = vpop.permute.xlu0 %3227
    %v3231 = vpack.i.b16 %v3224, %v3221
    %v3233 = vshrl.u32 %v3221, 16
    %v3234 = vshrl.u32 %v3224, 16
    %v3235 = vpack.i.b16 %v3234, %v3233
    %v3239 = vpack.i.b16 %v3228, %v3226
    %v3241 = vshrl.u32 %v3226, 16
    %v3242 = vshrl.u32 %v3228, 16
    %v3243 = vpack.i.b16 %v3242, %v3241
    %v3245 = vcombine.high %v3231, %v698
    %v3247 = vunpack.c.l.s4 1983009808
    %v3248 = vunpack.c.0.s8 %v3247
    %v3249 = vlaneseq
    %v3250 = vshrl.u32 %v3249, 7
    %v3251 = vsub.s32 %v3248, %v3250
    %v3252 = vrot.slane %v3231, %v3251
    %v3254 = vunpack.c.l.s4 1983009808
    %v3255 = vunpack.c.0.s8 %v3254
    %v3256 = vlaneseq
    %v3257 = vshrl.u32 %v3256, 7
    %v3258 = vsub.s32 %v3255, %v3257
    %v3259 = vrot.slane %v3245, %v3258
    %v3260 = vcombine.high %v3239, %v698
    %v3262 = vunpack.c.l.s4 1983009808
    %v3263 = vunpack.c.0.s8 %v3262
    %v3264 = vlaneseq
    %v3265 = vshrl.u32 %v3264, 7
    %v3266 = vsub.s32 %v3263, %v3265
    %v3267 = vrot.slane %v3239, %v3266
    %v3269 = vunpack.c.l.s4 1983009808
    %v3270 = vunpack.c.0.s8 %v3269
    %v3271 = vlaneseq
    %v3272 = vshrl.u32 %v3271, 7
    %v3273 = vsub.s32 %v3270, %v3272
    %v3274 = vrot.slane %v3260, %v3273
    %v3275 = vcombine.low %v3252, %v3267
    %v3276 = vcombine.high %v3252, %v3267
    %v3278 = vunpack.c.l.s4 1934713408
    %v3279 = vunpack.c.0.s8 %v3278
    %v3280 = vlaneseq
    %v3281 = vshrl.u32 %v3280, 7
    %v3282 = vsub.s32 %v3279, %v3281
    %v3283 = vrot.slane %v3275, %v3282
    %v3285 = vunpack.c.l.s4 1934713408
    %v3286 = vunpack.c.0.s8 %v3285
    %v3287 = vlaneseq
    %v3288 = vshrl.u32 %v3287, 7
    %v3289 = vsub.s32 %v3286, %v3288
    %v3290 = vrot.slane %v3276, %v3289
    %v3291 = vcombine.low %v3259, %v3274
    %v3292 = vcombine.high %v3259, %v3274
    %v3294 = vunpack.c.l.s4 1934713408
    %v3295 = vunpack.c.0.s8 %v3294
    %v3296 = vlaneseq
    %v3297 = vshrl.u32 %v3296, 7
    %v3298 = vsub.s32 %v3295, %v3297
    %v3299 = vrot.slane %v3291, %v3298
    %v3301 = vunpack.c.l.s4 1934713408
    %v3302 = vunpack.c.0.s8 %v3301
    %v3303 = vlaneseq
    %v3304 = vshrl.u32 %v3303, 7
    %v3305 = vsub.s32 %v3302, %v3304
    %v3306 = vrot.slane %v3292, %v3305
    %v3307 = vcombine.high %v3283, 0
    %v3308 = vcombine.high %v3290, 0
    %v3309 = vcombine.high %v3299, 0
    %v3310 = vcombine.high %v3306, 0
    %v3311 = vcombine.high %v3235, %v701
    %v3313 = vunpack.c.l.s4 1983009808
    %v3314 = vunpack.c.0.s8 %v3313
    %v3315 = vlaneseq
    %v3316 = vshrl.u32 %v3315, 7
    %v3317 = vsub.s32 %v3314, %v3316
    %v3318 = vrot.slane %v3235, %v3317
    %v3320 = vunpack.c.l.s4 1983009808
    %v3321 = vunpack.c.0.s8 %v3320
    %v3322 = vlaneseq
    %v3323 = vshrl.u32 %v3322, 7
    %v3324 = vsub.s32 %v3321, %v3323
    %v3325 = vrot.slane %v3311, %v3324
    %v3326 = vcombine.high %v3243, %v701
    %v3328 = vunpack.c.l.s4 1983009808
    %v3329 = vunpack.c.0.s8 %v3328
    %v3330 = vlaneseq
    %v3331 = vshrl.u32 %v3330, 7
    %v3332 = vsub.s32 %v3329, %v3331
    %v3333 = vrot.slane %v3243, %v3332
    %v3335 = vunpack.c.l.s4 1983009808
    %v3336 = vunpack.c.0.s8 %v3335
    %v3337 = vlaneseq
    %v3338 = vshrl.u32 %v3337, 7
    %v3339 = vsub.s32 %v3336, %v3338
    %v3340 = vrot.slane %v3326, %v3339
    %v3341 = vcombine.low %v3318, %v3333
    %v3342 = vcombine.high %v3318, %v3333
    %v3344 = vunpack.c.l.s4 1934713408
    %v3345 = vunpack.c.0.s8 %v3344
    %v3346 = vlaneseq
    %v3347 = vshrl.u32 %v3346, 7
    %v3348 = vsub.s32 %v3345, %v3347
    %v3349 = vrot.slane %v3341, %v3348
    %v3351 = vunpack.c.l.s4 1934713408
    %v3352 = vunpack.c.0.s8 %v3351
    %v3353 = vlaneseq
    %v3354 = vshrl.u32 %v3353, 7
    %v3355 = vsub.s32 %v3352, %v3354
    %v3356 = vrot.slane %v3342, %v3355
    %v3357 = vcombine.low %v3325, %v3340
    %v3358 = vcombine.high %v3325, %v3340
    %v3360 = vunpack.c.l.s4 1934713408
    %v3361 = vunpack.c.0.s8 %v3360
    %v3362 = vlaneseq
    %v3363 = vshrl.u32 %v3362, 7
    %v3364 = vsub.s32 %v3361, %v3363
    %v3365 = vrot.slane %v3357, %v3364
    %v3367 = vunpack.c.l.s4 1934713408
    %v3368 = vunpack.c.0.s8 %v3367
    %v3369 = vlaneseq
    %v3370 = vshrl.u32 %v3369, 7
    %v3371 = vsub.s32 %v3368, %v3370
    %v3372 = vrot.slane %v3358, %v3371
    %v3373 = vcombine.high %v3349, 0
    %v3374 = vcombine.high %v3356, 0
    %v3375 = vcombine.high %v3365, 0
    %v3376 = vcombine.high %v3372, 0
    %v3377 = vcombine.low %v3283, %v3290
    %v3379 = vunpack.c.l.s4 1983009808
    %v3380 = vunpack.c.0.s8 %v3379
    %v3381 = vlaneseq
    %v3382 = vshrl.u32 %v3381, 7
    %v3383 = vsub.s32 %v3380, %v3382
    %v3384 = vrot.slane %v3377, %v3383
    %v3385 = vcombine.low %v3307, %v3308
    %v3387 = vunpack.c.l.s4 1983009808
    %v3388 = vunpack.c.0.s8 %v3387
    %v3389 = vlaneseq
    %v3390 = vshrl.u32 %v3389, 7
    %v3391 = vsub.s32 %v3388, %v3390
    %v3392 = vrot.slane %v3385, %v3391
    %v3393 = vcombine.low %v3384, %v3392
    %v3395 = vunpack.c.l.s4 1934713408
    %v3396 = vunpack.c.0.s8 %v3395
    %v3397 = vlaneseq
    %v3398 = vshrl.u32 %v3397, 7
    %v3399 = vsub.s32 %v3396, %v3398
    %v3400 = vrot.slane %v3393, %v3399
    %v3401 = vcombine.high %v3400, 0
    %v3402 = vcombine.low %v3349, %v3356
    %v3404 = vunpack.c.l.s4 1983009808
    %v3405 = vunpack.c.0.s8 %v3404
    %v3406 = vlaneseq
    %v3407 = vshrl.u32 %v3406, 7
    %v3408 = vsub.s32 %v3405, %v3407
    %v3409 = vrot.slane %v3402, %v3408
    %v3410 = vcombine.low %v3373, %v3374
    %v3412 = vunpack.c.l.s4 1983009808
    %v3413 = vunpack.c.0.s8 %v3412
    %v3414 = vlaneseq
    %v3415 = vshrl.u32 %v3414, 7
    %v3416 = vsub.s32 %v3413, %v3415
    %v3417 = vrot.slane %v3410, %v3416
    %v3418 = vcombine.low %v3409, %v3417
    %v3420 = vunpack.c.l.s4 1934713408
    %v3421 = vunpack.c.0.s8 %v3420
    %v3422 = vlaneseq
    %v3423 = vshrl.u32 %v3422, 7
    %v3424 = vsub.s32 %v3421, %v3423
    %v3425 = vrot.slane %v3418, %v3424
    %v3426 = vcombine.high %v3425, 0
    %v3427 = vcombine.low %v3299, %v3306
    %v3429 = vunpack.c.l.s4 1983009808
    %v3430 = vunpack.c.0.s8 %v3429
    %v3431 = vlaneseq
    %v3432 = vshrl.u32 %v3431, 7
    %v3433 = vsub.s32 %v3430, %v3432
    %v3434 = vrot.slane %v3427, %v3433
    %v3435 = vcombine.low %v3309, %v3310
    %v3437 = vunpack.c.l.s4 1983009808
    %v3438 = vunpack.c.0.s8 %v3437
    %v3439 = vlaneseq
    %v3440 = vshrl.u32 %v3439, 7
    %v3441 = vsub.s32 %v3438, %v3440
    %v3442 = vrot.slane %v3435, %v3441
    %v3443 = vcombine.low %v3434, %v3442
    %v3445 = vunpack.c.l.s4 1934713408
    %v3446 = vunpack.c.0.s8 %v3445
    %v3447 = vlaneseq
    %v3448 = vshrl.u32 %v3447, 7
    %v3449 = vsub.s32 %v3446, %v3448
    %v3450 = vrot.slane %v3443, %v3449
    %v3451 = vcombine.high %v3450, 0
    %v3452 = vcombine.low %v3365, %v3372
    %v3454 = vunpack.c.l.s4 1983009808
    %v3455 = vunpack.c.0.s8 %v3454
    %v3456 = vlaneseq
    %v3457 = vshrl.u32 %v3456, 7
    %v3458 = vsub.s32 %v3455, %v3457
    %v3459 = vrot.slane %v3452, %v3458
    %v3460 = vcombine.low %v3375, %v3376
    %v3462 = vunpack.c.l.s4 1983009808
    %v3463 = vunpack.c.0.s8 %v3462
    %v3464 = vlaneseq
    %v3465 = vshrl.u32 %v3464, 7
    %v3466 = vsub.s32 %v3463, %v3465
    %v3467 = vrot.slane %v3460, %v3466
    %v3468 = vcombine.low %v3459, %v3467
    %v3470 = vunpack.c.l.s4 1934713408
    %v3471 = vunpack.c.0.s8 %v3470
    %v3472 = vlaneseq
    %v3473 = vshrl.u32 %v3472, 7
    %v3474 = vsub.s32 %v3471, %v3473
    %v3475 = vrot.slane %v3468, %v3474
    %v3476 = vcombine.high %v3475, 0
    %v3479 = vpack.i.b16 %v3425, %v3400
    %v3480 = vshrl.u32 %v3400, 16
    %v3481 = vshrl.u32 %v3425, 16
    %v3482 = vpack.i.b16 %v3481, %v3480
    %v3485 = vpack.i.b16 %v3426, %v3401
    %v3486 = vshrl.u32 %v3401, 16
    %v3487 = vshrl.u32 %v3426, 16
    %v3488 = vpack.i.b16 %v3487, %v3486
    %v3491 = vpack.i.b16 %v3475, %v3450
    %v3492 = vshrl.u32 %v3450, 16
    %v3493 = vshrl.u32 %v3475, 16
    %v3494 = vpack.i.b16 %v3493, %v3492
    %v3497 = vpack.i.b16 %v3476, %v3451
    %v3498 = vshrl.u32 %v3451, 16
    %v3499 = vshrl.u32 %v3476, 16
    %v3500 = vpack.i.b16 %v3499, %v3498
    %v3501 = vpack.c.bf16 %v3106, %v3103
    %3503 = vrot.lane.b32.xlu0 %v3501, 96
    %v3504 = vpop.permute.xlu0 %3503
    %3505 = vrot.lane.b32.xlu0 %v3501, 64
    %v3506 = vpop.permute.xlu0 %3505
    %3507 = vrot.lane.b32.xlu0 %v3501, 32
    %v3508 = vpop.permute.xlu0 %3507
    %v3511 = vpack.i.b16 %v3504, %v3501
    %v3513 = vshrl.u32 %v3501, 16
    %v3514 = vshrl.u32 %v3504, 16
    %v3515 = vpack.i.b16 %v3514, %v3513
    %v3519 = vpack.i.b16 %v3508, %v3506
    %v3521 = vshrl.u32 %v3506, 16
    %v3522 = vshrl.u32 %v3508, 16
    %v3523 = vpack.i.b16 %v3522, %v3521
    %v3525 = vcombine.high %v3511, %v698
    %v3527 = vunpack.c.l.s4 1983009808
    %v3528 = vunpack.c.0.s8 %v3527
    %v3529 = vlaneseq
    %v3530 = vshrl.u32 %v3529, 7
    %v3531 = vsub.s32 %v3528, %v3530
    %v3532 = vrot.slane %v3511, %v3531
    %v3534 = vunpack.c.l.s4 1983009808
    %v3535 = vunpack.c.0.s8 %v3534
    %v3536 = vlaneseq
    %v3537 = vshrl.u32 %v3536, 7
    %v3538 = vsub.s32 %v3535, %v3537
    %v3539 = vrot.slane %v3525, %v3538
    %v3540 = vcombine.high %v3519, %v698
    %v3542 = vunpack.c.l.s4 1983009808
    %v3543 = vunpack.c.0.s8 %v3542
    %v3544 = vlaneseq
    %v3545 = vshrl.u32 %v3544, 7
    %v3546 = vsub.s32 %v3543, %v3545
    %v3547 = vrot.slane %v3519, %v3546
    %v3549 = vunpack.c.l.s4 1983009808
    %v3550 = vunpack.c.0.s8 %v3549
    %v3551 = vlaneseq
    %v3552 = vshrl.u32 %v3551, 7
    %v3553 = vsub.s32 %v3550, %v3552
    %v3554 = vrot.slane %v3540, %v3553
    %v3555 = vcombine.low %v3532, %v3547
    %v3556 = vcombine.high %v3532, %v3547
    %v3558 = vunpack.c.l.s4 1934713408
    %v3559 = vunpack.c.0.s8 %v3558
    %v3560 = vlaneseq
    %v3561 = vshrl.u32 %v3560, 7
    %v3562 = vsub.s32 %v3559, %v3561
    %v3563 = vrot.slane %v3555, %v3562
    %v3565 = vunpack.c.l.s4 1934713408
    %v3566 = vunpack.c.0.s8 %v3565
    %v3567 = vlaneseq
    %v3568 = vshrl.u32 %v3567, 7
    %v3569 = vsub.s32 %v3566, %v3568
    %v3570 = vrot.slane %v3556, %v3569
    %v3571 = vcombine.low %v3539, %v3554
    %v3572 = vcombine.high %v3539, %v3554
    %v3574 = vunpack.c.l.s4 1934713408
    %v3575 = vunpack.c.0.s8 %v3574
    %v3576 = vlaneseq
    %v3577 = vshrl.u32 %v3576, 7
    %v3578 = vsub.s32 %v3575, %v3577
    %v3579 = vrot.slane %v3571, %v3578
    %v3581 = vunpack.c.l.s4 1934713408
    %v3582 = vunpack.c.0.s8 %v3581
    %v3583 = vlaneseq
    %v3584 = vshrl.u32 %v3583, 7
    %v3585 = vsub.s32 %v3582, %v3584
    %v3586 = vrot.slane %v3572, %v3585
    %v3587 = vcombine.high %v3563, 0
    %v3588 = vcombine.high %v3570, 0
    %v3589 = vcombine.high %v3579, 0
    %v3590 = vcombine.high %v3586, 0
    %v3591 = vcombine.high %v3515, %v701
    %v3593 = vunpack.c.l.s4 1983009808
    %v3594 = vunpack.c.0.s8 %v3593
    %v3595 = vlaneseq
    %v3596 = vshrl.u32 %v3595, 7
    %v3597 = vsub.s32 %v3594, %v3596
    %v3598 = vrot.slane %v3515, %v3597
    %v3600 = vunpack.c.l.s4 1983009808
    %v3601 = vunpack.c.0.s8 %v3600
    %v3602 = vlaneseq
    %v3603 = vshrl.u32 %v3602, 7
    %v3604 = vsub.s32 %v3601, %v3603
    %v3605 = vrot.slane %v3591, %v3604
    %v3606 = vcombine.high %v3523, %v701
    %v3608 = vunpack.c.l.s4 1983009808
    %v3609 = vunpack.c.0.s8 %v3608
    %v3610 = vlaneseq
    %v3611 = vshrl.u32 %v3610, 7
    %v3612 = vsub.s32 %v3609, %v3611
    %v3613 = vrot.slane %v3523, %v3612
    %v3615 = vunpack.c.l.s4 1983009808
    %v3616 = vunpack.c.0.s8 %v3615
    %v3617 = vlaneseq
    %v3618 = vshrl.u32 %v3617, 7
    %v3619 = vsub.s32 %v3616, %v3618
    %v3620 = vrot.slane %v3606, %v3619
    %v3621 = vcombine.low %v3598, %v3613
    %v3622 = vcombine.high %v3598, %v3613
    %v3624 = vunpack.c.l.s4 1934713408
    %v3625 = vunpack.c.0.s8 %v3624
    %v3626 = vlaneseq
    %v3627 = vshrl.u32 %v3626, 7
    %v3628 = vsub.s32 %v3625, %v3627
    %v3629 = vrot.slane %v3621, %v3628
    %v3631 = vunpack.c.l.s4 1934713408
    %v3632 = vunpack.c.0.s8 %v3631
    %v3633 = vlaneseq
    %v3634 = vshrl.u32 %v3633, 7
    %v3635 = vsub.s32 %v3632, %v3634
    %v3636 = vrot.slane %v3622, %v3635
    %v3637 = vcombine.low %v3605, %v3620
    %v3638 = vcombine.high %v3605, %v3620
    %v3640 = vunpack.c.l.s4 1934713408
    %v3641 = vunpack.c.0.s8 %v3640
    %v3642 = vlaneseq
    %v3643 = vshrl.u32 %v3642, 7
    %v3644 = vsub.s32 %v3641, %v3643
    %v3645 = vrot.slane %v3637, %v3644
    %v3647 = vunpack.c.l.s4 1934713408
    %v3648 = vunpack.c.0.s8 %v3647
    %v3649 = vlaneseq
    %v3650 = vshrl.u32 %v3649, 7
    %v3651 = vsub.s32 %v3648, %v3650
    %v3652 = vrot.slane %v3638, %v3651
    %v3653 = vcombine.high %v3629, 0
    %v3654 = vcombine.high %v3636, 0
    %v3655 = vcombine.high %v3645, 0
    %v3656 = vcombine.high %v3652, 0
    %v3657 = vcombine.low %v3563, %v3570
    %v3659 = vunpack.c.l.s4 1983009808
    %v3660 = vunpack.c.0.s8 %v3659
    %v3661 = vlaneseq
    %v3662 = vshrl.u32 %v3661, 7
    %v3663 = vsub.s32 %v3660, %v3662
    %v3664 = vrot.slane %v3657, %v3663
    %v3665 = vcombine.low %v3587, %v3588
    %v3667 = vunpack.c.l.s4 1983009808
    %v3668 = vunpack.c.0.s8 %v3667
    %v3669 = vlaneseq
    %v3670 = vshrl.u32 %v3669, 7
    %v3671 = vsub.s32 %v3668, %v3670
    %v3672 = vrot.slane %v3665, %v3671
    %v3673 = vcombine.low %v3664, %v3672
    %v3675 = vunpack.c.l.s4 1934713408
    %v3676 = vunpack.c.0.s8 %v3675
    %v3677 = vlaneseq
    %v3678 = vshrl.u32 %v3677, 7
    %v3679 = vsub.s32 %v3676, %v3678
    %v3680 = vrot.slane %v3673, %v3679
    %v3681 = vcombine.high %v3680, 0
    %v3682 = vcombine.low %v3629, %v3636
    %v3684 = vunpack.c.l.s4 1983009808
    %v3685 = vunpack.c.0.s8 %v3684
    %v3686 = vlaneseq
    %v3687 = vshrl.u32 %v3686, 7
    %v3688 = vsub.s32 %v3685, %v3687
    %v3689 = vrot.slane %v3682, %v3688
    %v3690 = vcombine.low %v3653, %v3654
    %v3692 = vunpack.c.l.s4 1983009808
    %v3693 = vunpack.c.0.s8 %v3692
    %v3694 = vlaneseq
    %v3695 = vshrl.u32 %v3694, 7
    %v3696 = vsub.s32 %v3693, %v3695
    %v3697 = vrot.slane %v3690, %v3696
    %v3698 = vcombine.low %v3689, %v3697
    %v3700 = vunpack.c.l.s4 1934713408
    %v3701 = vunpack.c.0.s8 %v3700
    %v3702 = vlaneseq
    %v3703 = vshrl.u32 %v3702, 7
    %v3704 = vsub.s32 %v3701, %v3703
    %v3705 = vrot.slane %v3698, %v3704
    %v3706 = vcombine.high %v3705, 0
    %v3707 = vcombine.low %v3579, %v3586
    %v3709 = vunpack.c.l.s4 1983009808
    %v3710 = vunpack.c.0.s8 %v3709
    %v3711 = vlaneseq
    %v3712 = vshrl.u32 %v3711, 7
    %v3713 = vsub.s32 %v3710, %v3712
    %v3714 = vrot.slane %v3707, %v3713
    %v3715 = vcombine.low %v3589, %v3590
    %v3717 = vunpack.c.l.s4 1983009808
    %v3718 = vunpack.c.0.s8 %v3717
    %v3719 = vlaneseq
    %v3720 = vshrl.u32 %v3719, 7
    %v3721 = vsub.s32 %v3718, %v3720
    %v3722 = vrot.slane %v3715, %v3721
    %v3723 = vcombine.low %v3714, %v3722
    %v3725 = vunpack.c.l.s4 1934713408
    %v3726 = vunpack.c.0.s8 %v3725
    %v3727 = vlaneseq
    %v3728 = vshrl.u32 %v3727, 7
    %v3729 = vsub.s32 %v3726, %v3728
    %v3730 = vrot.slane %v3723, %v3729
    %v3731 = vcombine.high %v3730, 0
    %v3732 = vcombine.low %v3645, %v3652
    %v3734 = vunpack.c.l.s4 1983009808
    %v3735 = vunpack.c.0.s8 %v3734
    %v3736 = vlaneseq
    %v3737 = vshrl.u32 %v3736, 7
    %v3738 = vsub.s32 %v3735, %v3737
    %v3739 = vrot.slane %v3732, %v3738
    %v3740 = vcombine.low %v3655, %v3656
    %v3742 = vunpack.c.l.s4 1983009808
    %v3743 = vunpack.c.0.s8 %v3742
    %v3744 = vlaneseq
    %v3745 = vshrl.u32 %v3744, 7
    %v3746 = vsub.s32 %v3743, %v3745
    %v3747 = vrot.slane %v3740, %v3746
    %v3748 = vcombine.low %v3739, %v3747
    %v3750 = vunpack.c.l.s4 1934713408
    %v3751 = vunpack.c.0.s8 %v3750
    %v3752 = vlaneseq
    %v3753 = vshrl.u32 %v3752, 7
    %v3754 = vsub.s32 %v3751, %v3753
    %v3755 = vrot.slane %v3748, %v3754
    %v3756 = vcombine.high %v3755, 0
    %v3759 = vpack.i.b16 %v3705, %v3680
    %v3760 = vshrl.u32 %v3680, 16
    %v3761 = vshrl.u32 %v3705, 16
    %v3762 = vpack.i.b16 %v3761, %v3760
    %v3765 = vpack.i.b16 %v3706, %v3681
    %v3766 = vshrl.u32 %v3681, 16
    %v3767 = vshrl.u32 %v3706, 16
    %v3768 = vpack.i.b16 %v3767, %v3766
    %v3771 = vpack.i.b16 %v3755, %v3730
    %v3772 = vshrl.u32 %v3730, 16
    %v3773 = vshrl.u32 %v3755, 16
    %v3774 = vpack.i.b16 %v3773, %v3772
    %v3777 = vpack.i.b16 %v3756, %v3731
    %v3778 = vshrl.u32 %v3731, 16
    %v3779 = vshrl.u32 %v3756, 16
    %v3780 = vpack.i.b16 %v3779, %v3778
    %v3781 = vpack.c.bf16 %v3218, %v3215
    %3783 = vrot.lane.b32.xlu0 %v3781, 96
    %v3784 = vpop.permute.xlu0 %3783
    %3785 = vrot.lane.b32.xlu0 %v3781, 64
    %v3786 = vpop.permute.xlu0 %3785
    %3787 = vrot.lane.b32.xlu0 %v3781, 32
    %v3788 = vpop.permute.xlu0 %3787
    %v3791 = vpack.i.b16 %v3784, %v3781
    %v3793 = vshrl.u32 %v3781, 16
    %v3794 = vshrl.u32 %v3784, 16
    %v3795 = vpack.i.b16 %v3794, %v3793
    %v3799 = vpack.i.b16 %v3788, %v3786
    %v3801 = vshrl.u32 %v3786, 16
    %v3802 = vshrl.u32 %v3788, 16
    %v3803 = vpack.i.b16 %v3802, %v3801
    %v3805 = vcombine.high %v3791, %v698
    %v3807 = vunpack.c.l.s4 1983009808
    %v3808 = vunpack.c.0.s8 %v3807
    %v3809 = vlaneseq
    %v3810 = vshrl.u32 %v3809, 7
    %v3811 = vsub.s32 %v3808, %v3810
    %v3812 = vrot.slane %v3791, %v3811
    %v3814 = vunpack.c.l.s4 1983009808
    %v3815 = vunpack.c.0.s8 %v3814
    %v3816 = vlaneseq
    %v3817 = vshrl.u32 %v3816, 7
    %v3818 = vsub.s32 %v3815, %v3817
    %v3819 = vrot.slane %v3805, %v3818
    %v3820 = vcombine.high %v3799, %v698
    %v3822 = vunpack.c.l.s4 1983009808
    %v3823 = vunpack.c.0.s8 %v3822
    %v3824 = vlaneseq
    %v3825 = vshrl.u32 %v3824, 7
    %v3826 = vsub.s32 %v3823, %v3825
    %v3827 = vrot.slane %v3799, %v3826
    %v3829 = vunpack.c.l.s4 1983009808
    %v3830 = vunpack.c.0.s8 %v3829
    %v3831 = vlaneseq
    %v3832 = vshrl.u32 %v3831, 7
    %v3833 = vsub.s32 %v3830, %v3832
    %v3834 = vrot.slane %v3820, %v3833
    %v3835 = vcombine.low %v3812, %v3827
    %v3836 = vcombine.high %v3812, %v3827
    %v3838 = vunpack.c.l.s4 1934713408
    %v3839 = vunpack.c.0.s8 %v3838
    %v3840 = vlaneseq
    %v3841 = vshrl.u32 %v3840, 7
    %v3842 = vsub.s32 %v3839, %v3841
    %v3843 = vrot.slane %v3835, %v3842
    %v3845 = vunpack.c.l.s4 1934713408
    %v3846 = vunpack.c.0.s8 %v3845
    %v3847 = vlaneseq
    %v3848 = vshrl.u32 %v3847, 7
    %v3849 = vsub.s32 %v3846, %v3848
    %v3850 = vrot.slane %v3836, %v3849
    %v3851 = vcombine.low %v3819, %v3834
    %v3852 = vcombine.high %v3819, %v3834
    %v3854 = vunpack.c.l.s4 1934713408
    %v3855 = vunpack.c.0.s8 %v3854
    %v3856 = vlaneseq
    %v3857 = vshrl.u32 %v3856, 7
    %v3858 = vsub.s32 %v3855, %v3857
    %v3859 = vrot.slane %v3851, %v3858
    %v3861 = vunpack.c.l.s4 1934713408
    %v3862 = vunpack.c.0.s8 %v3861
    %v3863 = vlaneseq
    %v3864 = vshrl.u32 %v3863, 7
    %v3865 = vsub.s32 %v3862, %v3864
    %v3866 = vrot.slane %v3852, %v3865
    %v3867 = vcombine.high %v3843, 0
    %v3868 = vcombine.high %v3850, 0
    %v3869 = vcombine.high %v3859, 0
    %v3870 = vcombine.high %v3866, 0
    %v3871 = vcombine.high %v3795, %v701
    %v3873 = vunpack.c.l.s4 1983009808
    %v3874 = vunpack.c.0.s8 %v3873
    %v3875 = vlaneseq
    %v3876 = vshrl.u32 %v3875, 7
    %v3877 = vsub.s32 %v3874, %v3876
    %v3878 = vrot.slane %v3795, %v3877
    %v3880 = vunpack.c.l.s4 1983009808
    %v3881 = vunpack.c.0.s8 %v3880
    %v3882 = vlaneseq
    %v3883 = vshrl.u32 %v3882, 7
    %v3884 = vsub.s32 %v3881, %v3883
    %v3885 = vrot.slane %v3871, %v3884
    %v3886 = vcombine.high %v3803, %v701
    %v3888 = vunpack.c.l.s4 1983009808
    %v3889 = vunpack.c.0.s8 %v3888
    %v3890 = vlaneseq
    %v3891 = vshrl.u32 %v3890, 7
    %v3892 = vsub.s32 %v3889, %v3891
    %v3893 = vrot.slane %v3803, %v3892
    %v3895 = vunpack.c.l.s4 1983009808
    %v3896 = vunpack.c.0.s8 %v3895
    %v3897 = vlaneseq
    %v3898 = vshrl.u32 %v3897, 7
    %v3899 = vsub.s32 %v3896, %v3898
    %v3900 = vrot.slane %v3886, %v3899
    %v3901 = vcombine.low %v3878, %v3893
    %v3902 = vcombine.high %v3878, %v3893
    %v3904 = vunpack.c.l.s4 1934713408
    %v3905 = vunpack.c.0.s8 %v3904
    %v3906 = vlaneseq
    %v3907 = vshrl.u32 %v3906, 7
    %v3908 = vsub.s32 %v3905, %v3907
    %v3909 = vrot.slane %v3901, %v3908
    %v3911 = vunpack.c.l.s4 1934713408
    %v3912 = vunpack.c.0.s8 %v3911
    %v3913 = vlaneseq
    %v3914 = vshrl.u32 %v3913, 7
    %v3915 = vsub.s32 %v3912, %v3914
    %v3916 = vrot.slane %v3902, %v3915
    %v3917 = vcombine.low %v3885, %v3900
    %v3918 = vcombine.high %v3885, %v3900
    %v3920 = vunpack.c.l.s4 1934713408
    %v3921 = vunpack.c.0.s8 %v3920
    %v3922 = vlaneseq
    %v3923 = vshrl.u32 %v3922, 7
    %v3924 = vsub.s32 %v3921, %v3923
    %v3925 = vrot.slane %v3917, %v3924
    %v3927 = vunpack.c.l.s4 1934713408
    %v3928 = vunpack.c.0.s8 %v3927
    %v3929 = vlaneseq
    %v3930 = vshrl.u32 %v3929, 7
    %v3931 = vsub.s32 %v3928, %v3930
    %v3932 = vrot.slane %v3918, %v3931
    %v3933 = vcombine.high %v3909, 0
    %v3934 = vcombine.high %v3916, 0
    %v3935 = vcombine.high %v3925, 0
    %v3936 = vcombine.high %v3932, 0
    %v3937 = vcombine.low %v3843, %v3850
    %v3939 = vunpack.c.l.s4 1983009808
    %v3940 = vunpack.c.0.s8 %v3939
    %v3941 = vlaneseq
    %v3942 = vshrl.u32 %v3941, 7
    %v3943 = vsub.s32 %v3940, %v3942
    %v3944 = vrot.slane %v3937, %v3943
    %v3945 = vcombine.low %v3867, %v3868
    %v3947 = vunpack.c.l.s4 1983009808
    %v3948 = vunpack.c.0.s8 %v3947
    %v3949 = vlaneseq
    %v3950 = vshrl.u32 %v3949, 7
    %v3951 = vsub.s32 %v3948, %v3950
    %v3952 = vrot.slane %v3945, %v3951
    %v3953 = vcombine.low %v3944, %v3952
    %v3955 = vunpack.c.l.s4 1934713408
    %v3956 = vunpack.c.0.s8 %v3955
    %v3957 = vlaneseq
    %v3958 = vshrl.u32 %v3957, 7
    %v3959 = vsub.s32 %v3956, %v3958
    %v3960 = vrot.slane %v3953, %v3959
    %v3961 = vcombine.high %v3960, 0
    %v3962 = vcombine.low %v3909, %v3916
    %v3964 = vunpack.c.l.s4 1983009808
    %v3965 = vunpack.c.0.s8 %v3964
    %v3966 = vlaneseq
    %v3967 = vshrl.u32 %v3966, 7
    %v3968 = vsub.s32 %v3965, %v3967
    %v3969 = vrot.slane %v3962, %v3968
    %v3970 = vcombine.low %v3933, %v3934
    %v3972 = vunpack.c.l.s4 1983009808
    %v3973 = vunpack.c.0.s8 %v3972
    %v3974 = vlaneseq
    %v3975 = vshrl.u32 %v3974, 7
    %v3976 = vsub.s32 %v3973, %v3975
    %v3977 = vrot.slane %v3970, %v3976
    %v3978 = vcombine.low %v3969, %v3977
    %v3980 = vunpack.c.l.s4 1934713408
    %v3981 = vunpack.c.0.s8 %v3980
    %v3982 = vlaneseq
    %v3983 = vshrl.u32 %v3982, 7
    %v3984 = vsub.s32 %v3981, %v3983
    %v3985 = vrot.slane %v3978, %v3984
    %v3986 = vcombine.high %v3985, 0
    %v3987 = vcombine.low %v3859, %v3866
    %v3989 = vunpack.c.l.s4 1983009808
    %v3990 = vunpack.c.0.s8 %v3989
    %v3991 = vlaneseq
    %v3992 = vshrl.u32 %v3991, 7
    %v3993 = vsub.s32 %v3990, %v3992
    %v3994 = vrot.slane %v3987, %v3993
    %v3995 = vcombine.low %v3869, %v3870
    %v3997 = vunpack.c.l.s4 1983009808
    %v3998 = vunpack.c.0.s8 %v3997
    %v3999 = vlaneseq
    %v4000 = vshrl.u32 %v3999, 7
    %v4001 = vsub.s32 %v3998, %v4000
    %v4002 = vrot.slane %v3995, %v4001
    %v4003 = vcombine.low %v3994, %v4002
    %v4005 = vunpack.c.l.s4 1934713408
    %v4006 = vunpack.c.0.s8 %v4005
    %v4007 = vlaneseq
    %v4008 = vshrl.u32 %v4007, 7
    %v4009 = vsub.s32 %v4006, %v4008
    %v4010 = vrot.slane %v4003, %v4009
    %v4011 = vcombine.high %v4010, 0
    %v4012 = vcombine.low %v3925, %v3932
    %v4014 = vunpack.c.l.s4 1983009808
    %v4015 = vunpack.c.0.s8 %v4014
    %v4016 = vlaneseq
    %v4017 = vshrl.u32 %v4016, 7
    %v4018 = vsub.s32 %v4015, %v4017
    %v4019 = vrot.slane %v4012, %v4018
    %v4020 = vcombine.low %v3935, %v3936
    %v4022 = vunpack.c.l.s4 1983009808
    %v4023 = vunpack.c.0.s8 %v4022
    %v4024 = vlaneseq
    %v4025 = vshrl.u32 %v4024, 7
    %v4026 = vsub.s32 %v4023, %v4025
    %v4027 = vrot.slane %v4020, %v4026
    %v4028 = vcombine.low %v4019, %v4027
    %v4030 = vunpack.c.l.s4 1934713408
    %v4031 = vunpack.c.0.s8 %v4030
    %v4032 = vlaneseq
    %v4033 = vshrl.u32 %v4032, 7
    %v4034 = vsub.s32 %v4031, %v4033
    %v4035 = vrot.slane %v4028, %v4034
    %v4036 = vcombine.high %v4035, 0
    %v4039 = vpack.i.b16 %v3985, %v3960
    %v4040 = vshrl.u32 %v3960, 16
    %v4041 = vshrl.u32 %v3985, 16
    %v4042 = vpack.i.b16 %v4041, %v4040
    %v4045 = vpack.i.b16 %v3986, %v3961
    %v4046 = vshrl.u32 %v3961, 16
    %v4047 = vshrl.u32 %v3986, 16
    %v4048 = vpack.i.b16 %v4047, %v4046
    %v4051 = vpack.i.b16 %v4035, %v4010
    %v4052 = vshrl.u32 %v4010, 16
    %v4053 = vshrl.u32 %v4035, 16
    %v4054 = vpack.i.b16 %v4053, %v4052
    %v4057 = vpack.i.b16 %v4036, %v4011
    %v4058 = vshrl.u32 %v4011, 16
    %v4059 = vshrl.u32 %v4036, 16
    %v4060 = vpack.i.b16 %v4059, %v4058
    %v4062 = vsel %vm1519, %v3479, 0
    %v4065 = vsel %vm1519, %v3759, 0
    %4067 = vmatprep.subr.bf16.mxu0 0
    %4068 = vmatpush1.bf16.xpose.msra.mxu0 0
    %4069 = vmatprep.subr.bf16.mxu0 0
    %4070 = vmatpush1.bf16.xpose.msra.mxu0 0
    %4071 = vmatprep.subr.bf16.mxu0 0
    %4072 = vmatpush1.bf16.xpose.msra.mxu0 0
    %4073 = vmatprep.subr.bf16.mxu0 0
    %4074 = vmatpush1.bf16.xpose.msra.mxu0 0
    %4075 = vmatprep.subr.bf16.mxu0 0
    %4076 = vmatpush1.bf16.xpose.msra.mxu0 0
    %4077 = vmatprep.subr.bf16.mxu0 0
    %4078 = vmatpush1.bf16.xpose.msra.mxu0 0
    %4079 = vmatprep.subr.bf16.mxu0 0
    %4080 = vmatpush1.bf16.xpose.msra.mxu0 0
    %4081 = vmatprep.subr.bf16.mxu0 0
    %4082 = vmatpush1.bf16.xpose.msra.mxu0 %v4065
    %4083 = vmatprep.subr.bf16.mxu0 0
    %4084 = vmatpush2.bf16.xpose.msra.mxu0 0
    %4085 = vmatprep.subr.bf16.mxu0 0
    %4086 = vmatpush2.bf16.xpose.msra.mxu0 0
    %4087 = vmatprep.subr.bf16.mxu0 0
    %4088 = vmatpush2.bf16.xpose.msra.mxu0 0
    %4089 = vmatprep.subr.bf16.mxu0 0
    %4090 = vmatpush2.bf16.xpose.msra.mxu0 0
    %4091 = vmatprep.subr.bf16.mxu0 0
    %4092 = vmatpush2.bf16.xpose.msra.mxu0 0
    %4093 = vmatprep.subr.bf16.mxu0 0
    %4094 = vmatpush2.bf16.xpose.msra.mxu0 0
    %4095 = vmatprep.subr.bf16.mxu0 0
    %4096 = vmatpush2.bf16.xpose.msra.mxu0 0
    %4097 = vmatprep.subr.bf16.mxu0 0
    %4098 = vmatpush2.bf16.xpose.msra.mxu0 0
    %4099 = vmatprep.mubr.bf16.mxu0 0
    %4100 = vmatmul.mubr.bf16.gmra.mxu0 %v4062
    %v4101 = vpop.f32.mrf.mxu0
    %v4102 = vadd.f32 0.0, %v4101
    %v4103 = vpop.f32.mrf.mxu0
    %v4104 = vpop.f32.mrf.mxu0
    %v4105 = vpop.f32.mrf.mxu0
    %4106 = vdwg.mxu0
    %v4108 = vsel %vm1519, %v3482, 0
    %v4111 = vsel %vm1519, %v3762, 0
    %4113 = vmatprep.subr.bf16.mxu0 0
    %4114 = vmatpush1.bf16.xpose.msra.mxu0 0
    %4115 = vmatprep.subr.bf16.mxu0 0
    %4116 = vmatpush1.bf16.xpose.msra.mxu0 0
    %4117 = vmatprep.subr.bf16.mxu0 0
    %4118 = vmatpush1.bf16.xpose.msra.mxu0 0
    %4119 = vmatprep.subr.bf16.mxu0 0
    %4120 = vmatpush1.bf16.xpose.msra.mxu0 0
    %4121 = vmatprep.subr.bf16.mxu0 0
    %4122 = vmatpush1.bf16.xpose.msra.mxu0 0
    %4123 = vmatprep.subr.bf16.mxu0 0
    %4124 = vmatpush1.bf16.xpose.msra.mxu0 0
    %4125 = vmatprep.subr.bf16.mxu0 0
    %4126 = vmatpush1.bf16.xpose.msra.mxu0 0
    %4127 = vmatprep.subr.bf16.mxu0 0
    %4128 = vmatpush1.bf16.xpose.msra.mxu0 %v4111
    %4129 = vmatprep.subr.bf16.mxu0 0
    %4130 = vmatpush2.bf16.xpose.msra.mxu0 0
    %4131 = vmatprep.subr.bf16.mxu0 0
    %4132 = vmatpush2.bf16.xpose.msra.mxu0 0
    %4133 = vmatprep.subr.bf16.mxu0 0
    %4134 = vmatpush2.bf16.xpose.msra.mxu0 0
    %4135 = vmatprep.subr.bf16.mxu0 0
    %4136 = vmatpush2.bf16.xpose.msra.mxu0 0
    %4137 = vmatprep.subr.bf16.mxu0 0
    %4138 = vmatpush2.bf16.xpose.msra.mxu0 0
    %4139 = vmatprep.subr.bf16.mxu0 0
    %4140 = vmatpush2.bf16.xpose.msra.mxu0 0
    %4141 = vmatprep.subr.bf16.mxu0 0
    %4142 = vmatpush2.bf16.xpose.msra.mxu0 0
    %4143 = vmatprep.subr.bf16.mxu0 0
    %4144 = vmatpush2.bf16.xpose.msra.mxu0 0
    %4145 = vmatprep.mubr.bf16.mxu0 0
    %4146 = vmatmul.mubr.bf16.gmra.mxu0 %v4108
    %v4147 = vpop.f32.mrf.mxu0
    %v4148 = vadd.f32 0.0, %v4147
    %v4149 = vpop.f32.mrf.mxu0
    %v4150 = vpop.f32.mrf.mxu0
    %v4151 = vpop.f32.mrf.mxu0
    %4152 = vdwg.mxu0
    %v4154 = vsel %vm1519, %v3485, 0
    %v4157 = vsel %vm1519, %v3765, 0
    %4159 = vmatprep.subr.bf16.mxu0 0
    %4160 = vmatpush1.bf16.xpose.msra.mxu0 0
    %4161 = vmatprep.subr.bf16.mxu0 0
    %4162 = vmatpush1.bf16.xpose.msra.mxu0 0
    %4163 = vmatprep.subr.bf16.mxu0 0
    %4164 = vmatpush1.bf16.xpose.msra.mxu0 0
    %4165 = vmatprep.subr.bf16.mxu0 0
    %4166 = vmatpush1.bf16.xpose.msra.mxu0 0
    %4167 = vmatprep.subr.bf16.mxu0 0
    %4168 = vmatpush1.bf16.xpose.msra.mxu0 0
    %4169 = vmatprep.subr.bf16.mxu0 0
    %4170 = vmatpush1.bf16.xpose.msra.mxu0 0
    %4171 = vmatprep.subr.bf16.mxu0 0
    %4172 = vmatpush1.bf16.xpose.msra.mxu0 0
    %4173 = vmatprep.subr.bf16.mxu0 0
    %4174 = vmatpush1.bf16.xpose.msra.mxu0 %v4157
    %4175 = vmatprep.subr.bf16.mxu0 0
    %4176 = vmatpush2.bf16.xpose.msra.mxu0 0
    %4177 = vmatprep.subr.bf16.mxu0 0
    %4178 = vmatpush2.bf16.xpose.msra.mxu0 0
    %4179 = vmatprep.subr.bf16.mxu0 0
    %4180 = vmatpush2.bf16.xpose.msra.mxu0 0
    %4181 = vmatprep.subr.bf16.mxu0 0
    %4182 = vmatpush2.bf16.xpose.msra.mxu0 0
    %4183 = vmatprep.subr.bf16.mxu0 0
    %4184 = vmatpush2.bf16.xpose.msra.mxu0 0
    %4185 = vmatprep.subr.bf16.mxu0 0
    %4186 = vmatpush2.bf16.xpose.msra.mxu0 0
    %4187 = vmatprep.subr.bf16.mxu0 0
    %4188 = vmatpush2.bf16.xpose.msra.mxu0 0
    %4189 = vmatprep.subr.bf16.mxu0 0
    %4190 = vmatpush2.bf16.xpose.msra.mxu0 0
    %4191 = vmatprep.mubr.bf16.mxu0 0
    %4192 = vmatmul.mubr.bf16.gmra.mxu0 %v4154
    %v4193 = vpop.f32.mrf.mxu0
    %v4194 = vadd.f32 0.0, %v4193
    %v4195 = vpop.f32.mrf.mxu0
    %v4196 = vpop.f32.mrf.mxu0
    %v4197 = vpop.f32.mrf.mxu0
    %4198 = vdwg.mxu0
    %v4200 = vsel %vm1519, %v3488, 0
    %v4203 = vsel %vm1519, %v3768, 0
    %4205 = vmatprep.subr.bf16.mxu0 0
    %4206 = vmatpush1.bf16.xpose.msra.mxu0 0
    %4207 = vmatprep.subr.bf16.mxu0 0
    %4208 = vmatpush1.bf16.xpose.msra.mxu0 0
    %4209 = vmatprep.subr.bf16.mxu0 0
    %4210 = vmatpush1.bf16.xpose.msra.mxu0 0
    %4211 = vmatprep.subr.bf16.mxu0 0
    %4212 = vmatpush1.bf16.xpose.msra.mxu0 0
    %4213 = vmatprep.subr.bf16.mxu0 0
    %4214 = vmatpush1.bf16.xpose.msra.mxu0 0
    %4215 = vmatprep.subr.bf16.mxu0 0
    %4216 = vmatpush1.bf16.xpose.msra.mxu0 0
    %4217 = vmatprep.subr.bf16.mxu0 0
    %4218 = vmatpush1.bf16.xpose.msra.mxu0 0
    %4219 = vmatprep.subr.bf16.mxu0 0
    %4220 = vmatpush1.bf16.xpose.msra.mxu0 %v4203
    %4221 = vmatprep.subr.bf16.mxu0 0
    %4222 = vmatpush2.bf16.xpose.msra.mxu0 0
    %4223 = vmatprep.subr.bf16.mxu0 0
    %4224 = vmatpush2.bf16.xpose.msra.mxu0 0
    %4225 = vmatprep.subr.bf16.mxu0 0
    %4226 = vmatpush2.bf16.xpose.msra.mxu0 0
    %4227 = vmatprep.subr.bf16.mxu0 0
    %4228 = vmatpush2.bf16.xpose.msra.mxu0 0
    %4229 = vmatprep.subr.bf16.mxu0 0
    %4230 = vmatpush2.bf16.xpose.msra.mxu0 0
    %4231 = vmatprep.subr.bf16.mxu0 0
    %4232 = vmatpush2.bf16.xpose.msra.mxu0 0
    %4233 = vmatprep.subr.bf16.mxu0 0
    %4234 = vmatpush2.bf16.xpose.msra.mxu0 0
    %4235 = vmatprep.subr.bf16.mxu0 0
    %4236 = vmatpush2.bf16.xpose.msra.mxu0 0
    %4237 = vmatprep.mubr.bf16.mxu0 0
    %4238 = vmatmul.mubr.bf16.gmra.mxu0 %v4200
    %v4239 = vpop.f32.mrf.mxu0
    %v4240 = vadd.f32 0.0, %v4239
    %v4241 = vpop.f32.mrf.mxu0
    %v4242 = vpop.f32.mrf.mxu0
    %v4243 = vpop.f32.mrf.mxu0
    %4244 = vdwg.mxu0
    %v4246 = vsel %vm1519, %v3491, 0
    %v4249 = vsel %vm1519, %v3771, 0
    %4251 = vmatprep.subr.bf16.mxu0 0
    %4252 = vmatpush1.bf16.xpose.msra.mxu0 0
    %4253 = vmatprep.subr.bf16.mxu0 0
    %4254 = vmatpush1.bf16.xpose.msra.mxu0 0
    %4255 = vmatprep.subr.bf16.mxu0 0
    %4256 = vmatpush1.bf16.xpose.msra.mxu0 0
    %4257 = vmatprep.subr.bf16.mxu0 0
    %4258 = vmatpush1.bf16.xpose.msra.mxu0 0
    %4259 = vmatprep.subr.bf16.mxu0 0
    %4260 = vmatpush1.bf16.xpose.msra.mxu0 0
    %4261 = vmatprep.subr.bf16.mxu0 0
    %4262 = vmatpush1.bf16.xpose.msra.mxu0 0
    %4263 = vmatprep.subr.bf16.mxu0 0
    %4264 = vmatpush1.bf16.xpose.msra.mxu0 0
    %4265 = vmatprep.subr.bf16.mxu0 0
    %4266 = vmatpush1.bf16.xpose.msra.mxu0 %v4249
    %4267 = vmatprep.subr.bf16.mxu0 0
    %4268 = vmatpush2.bf16.xpose.msra.mxu0 0
    %4269 = vmatprep.subr.bf16.mxu0 0
    %4270 = vmatpush2.bf16.xpose.msra.mxu0 0
    %4271 = vmatprep.subr.bf16.mxu0 0
    %4272 = vmatpush2.bf16.xpose.msra.mxu0 0
    %4273 = vmatprep.subr.bf16.mxu0 0
    %4274 = vmatpush2.bf16.xpose.msra.mxu0 0
    %4275 = vmatprep.subr.bf16.mxu0 0
    %4276 = vmatpush2.bf16.xpose.msra.mxu0 0
    %4277 = vmatprep.subr.bf16.mxu0 0
    %4278 = vmatpush2.bf16.xpose.msra.mxu0 0
    %4279 = vmatprep.subr.bf16.mxu0 0
    %4280 = vmatpush2.bf16.xpose.msra.mxu0 0
    %4281 = vmatprep.subr.bf16.mxu0 0
    %4282 = vmatpush2.bf16.xpose.msra.mxu0 0
    %4283 = vmatprep.mubr.bf16.mxu0 0
    %4284 = vmatmul.mubr.bf16.gmra.mxu0 %v4246
    %v4285 = vpop.f32.mrf.mxu0
    %v4286 = vadd.f32 0.0, %v4285
    %v4287 = vpop.f32.mrf.mxu0
    %v4288 = vpop.f32.mrf.mxu0
    %v4289 = vpop.f32.mrf.mxu0
    %4290 = vdwg.mxu0
    %v4292 = vsel %vm1519, %v3494, 0
    %v4295 = vsel %vm1519, %v3774, 0
    %4297 = vmatprep.subr.bf16.mxu0 0
    %4298 = vmatpush1.bf16.xpose.msra.mxu0 0
    %4299 = vmatprep.subr.bf16.mxu0 0
    %4300 = vmatpush1.bf16.xpose.msra.mxu0 0
    %4301 = vmatprep.subr.bf16.mxu0 0
    %4302 = vmatpush1.bf16.xpose.msra.mxu0 0
    %4303 = vmatprep.subr.bf16.mxu0 0
    %4304 = vmatpush1.bf16.xpose.msra.mxu0 0
    %4305 = vmatprep.subr.bf16.mxu0 0
    %4306 = vmatpush1.bf16.xpose.msra.mxu0 0
    %4307 = vmatprep.subr.bf16.mxu0 0
    %4308 = vmatpush1.bf16.xpose.msra.mxu0 0
    %4309 = vmatprep.subr.bf16.mxu0 0
    %4310 = vmatpush1.bf16.xpose.msra.mxu0 0
    %4311 = vmatprep.subr.bf16.mxu0 0
    %4312 = vmatpush1.bf16.xpose.msra.mxu0 %v4295
    %4313 = vmatprep.subr.bf16.mxu0 0
    %4314 = vmatpush2.bf16.xpose.msra.mxu0 0
    %4315 = vmatprep.subr.bf16.mxu0 0
    %4316 = vmatpush2.bf16.xpose.msra.mxu0 0
    %4317 = vmatprep.subr.bf16.mxu0 0
    %4318 = vmatpush2.bf16.xpose.msra.mxu0 0
    %4319 = vmatprep.subr.bf16.mxu0 0
    %4320 = vmatpush2.bf16.xpose.msra.mxu0 0
    %4321 = vmatprep.subr.bf16.mxu0 0
    %4322 = vmatpush2.bf16.xpose.msra.mxu0 0
    %4323 = vmatprep.subr.bf16.mxu0 0
    %4324 = vmatpush2.bf16.xpose.msra.mxu0 0
    %4325 = vmatprep.subr.bf16.mxu0 0
    %4326 = vmatpush2.bf16.xpose.msra.mxu0 0
    %4327 = vmatprep.subr.bf16.mxu0 0
    %4328 = vmatpush2.bf16.xpose.msra.mxu0 0
    %4329 = vmatprep.mubr.bf16.mxu0 0
    %4330 = vmatmul.mubr.bf16.gmra.mxu0 %v4292
    %v4331 = vpop.f32.mrf.mxu0
    %v4332 = vadd.f32 0.0, %v4331
    %v4333 = vpop.f32.mrf.mxu0
    %v4334 = vpop.f32.mrf.mxu0
    %v4335 = vpop.f32.mrf.mxu0
    %4336 = vdwg.mxu0
    %v4338 = vsel %vm1519, %v3497, 0
    %v4341 = vsel %vm1519, %v3777, 0
    %4343 = vmatprep.subr.bf16.mxu0 0
    %4344 = vmatpush1.bf16.xpose.msra.mxu0 0
    %4345 = vmatprep.subr.bf16.mxu0 0
    %4346 = vmatpush1.bf16.xpose.msra.mxu0 0
    %4347 = vmatprep.subr.bf16.mxu0 0
    %4348 = vmatpush1.bf16.xpose.msra.mxu0 0
    %4349 = vmatprep.subr.bf16.mxu0 0
    %4350 = vmatpush1.bf16.xpose.msra.mxu0 0
    %4351 = vmatprep.subr.bf16.mxu0 0
    %4352 = vmatpush1.bf16.xpose.msra.mxu0 0
    %4353 = vmatprep.subr.bf16.mxu0 0
    %4354 = vmatpush1.bf16.xpose.msra.mxu0 0
    %4355 = vmatprep.subr.bf16.mxu0 0
    %4356 = vmatpush1.bf16.xpose.msra.mxu0 0
    %4357 = vmatprep.subr.bf16.mxu0 0
    %4358 = vmatpush1.bf16.xpose.msra.mxu0 %v4341
    %4359 = vmatprep.subr.bf16.mxu0 0
    %4360 = vmatpush2.bf16.xpose.msra.mxu0 0
    %4361 = vmatprep.subr.bf16.mxu0 0
    %4362 = vmatpush2.bf16.xpose.msra.mxu0 0
    %4363 = vmatprep.subr.bf16.mxu0 0
    %4364 = vmatpush2.bf16.xpose.msra.mxu0 0
    %4365 = vmatprep.subr.bf16.mxu0 0
    %4366 = vmatpush2.bf16.xpose.msra.mxu0 0
    %4367 = vmatprep.subr.bf16.mxu0 0
    %4368 = vmatpush2.bf16.xpose.msra.mxu0 0
    %4369 = vmatprep.subr.bf16.mxu0 0
    %4370 = vmatpush2.bf16.xpose.msra.mxu0 0
    %4371 = vmatprep.subr.bf16.mxu0 0
    %4372 = vmatpush2.bf16.xpose.msra.mxu0 0
    %4373 = vmatprep.subr.bf16.mxu0 0
    %4374 = vmatpush2.bf16.xpose.msra.mxu0 0
    %4375 = vmatprep.mubr.bf16.mxu0 0
    %4376 = vmatmul.mubr.bf16.gmra.mxu0 %v4338
    %v4377 = vpop.f32.mrf.mxu0
    %v4378 = vadd.f32 0.0, %v4377
    %v4379 = vpop.f32.mrf.mxu0
    %v4380 = vpop.f32.mrf.mxu0
    %v4381 = vpop.f32.mrf.mxu0
    %4382 = vdwg.mxu0
    %v4384 = vsel %vm1519, %v3500, 0
    %v4387 = vsel %vm1519, %v3780, 0
    %4389 = vmatprep.subr.bf16.mxu0 0
    %4390 = vmatpush1.bf16.xpose.msra.mxu0 0
    %4391 = vmatprep.subr.bf16.mxu0 0
    %4392 = vmatpush1.bf16.xpose.msra.mxu0 0
    %4393 = vmatprep.subr.bf16.mxu0 0
    %4394 = vmatpush1.bf16.xpose.msra.mxu0 0
    %4395 = vmatprep.subr.bf16.mxu0 0
    %4396 = vmatpush1.bf16.xpose.msra.mxu0 0
    %4397 = vmatprep.subr.bf16.mxu0 0
    %4398 = vmatpush1.bf16.xpose.msra.mxu0 0
    %4399 = vmatprep.subr.bf16.mxu0 0
    %4400 = vmatpush1.bf16.xpose.msra.mxu0 0
    %4401 = vmatprep.subr.bf16.mxu0 0
    %4402 = vmatpush1.bf16.xpose.msra.mxu0 0
    %4403 = vmatprep.subr.bf16.mxu0 0
    %4404 = vmatpush1.bf16.xpose.msra.mxu0 %v4387
    %4405 = vmatprep.subr.bf16.mxu0 0
    %4406 = vmatpush2.bf16.xpose.msra.mxu0 0
    %4407 = vmatprep.subr.bf16.mxu0 0
    %4408 = vmatpush2.bf16.xpose.msra.mxu0 0
    %4409 = vmatprep.subr.bf16.mxu0 0
    %4410 = vmatpush2.bf16.xpose.msra.mxu0 0
    %4411 = vmatprep.subr.bf16.mxu0 0
    %4412 = vmatpush2.bf16.xpose.msra.mxu0 0
    %4413 = vmatprep.subr.bf16.mxu0 0
    %4414 = vmatpush2.bf16.xpose.msra.mxu0 0
    %4415 = vmatprep.subr.bf16.mxu0 0
    %4416 = vmatpush2.bf16.xpose.msra.mxu0 0
    %4417 = vmatprep.subr.bf16.mxu0 0
    %4418 = vmatpush2.bf16.xpose.msra.mxu0 0
    %4419 = vmatprep.subr.bf16.mxu0 0
    %4420 = vmatpush2.bf16.xpose.msra.mxu0 0
    %4421 = vmatprep.mubr.bf16.mxu0 0
    %4422 = vmatmul.mubr.bf16.gmra.mxu0 %v4384
    %v4423 = vpop.f32.mrf.mxu0
    %v4424 = vadd.f32 0.0, %v4423
    %v4425 = vpop.f32.mrf.mxu0
    %v4426 = vpop.f32.mrf.mxu0
    %v4427 = vpop.f32.mrf.mxu0
    %4428 = vdwg.mxu0
    %v4429 = vmul.f32 %v4102, 0.17677669
    %v4430 = vmul.f32 %v4148, 0.17677669
    %v4431 = vmul.f32 %v4194, 0.17677669
    %v4432 = vmul.f32 %v4240, 0.17677669
    %v4433 = vmul.f32 %v4286, 0.17677669
    %v4434 = vmul.f32 %v4332, 0.17677669
    %v4435 = vmul.f32 %v4378, 0.17677669
    %v4436 = vmul.f32 %v4424, 0.17677669
    %v4437 = vlaneseq
    %v4438 = vshrl.u32 %v4437, 7
    %v4439 = vsub.s32 0, %v4438
    %v4440 = vrot.slane %v2845, %v4439
    %v4441 = vlaneseq
    %v4442 = vshrl.u32 %v4441, 7
    %v4443 = vsub.s32 0, %v4442
    %v4444 = vrot.slane %v2852, %v4443
    %v4445 = vlaneseq
    %v4446 = vshrl.u32 %v4445, 7
    %v4447 = vsub.s32 0, %v4446
    %v4448 = vrot.slane %v2853, %v4447
    %v4449 = vlaneseq
    %v4450 = vshrl.u32 %v4449, 7
    %v4451 = vsub.s32 0, %v4450
    %v4452 = vrot.slane %v2854, %v4451
    %v4453 = vlaneseq
    %v4454 = vshrl.u32 %v4453, 7
    %v4455 = vsub.s32 0, %v4454
    %v4456 = vrot.slane %v2869, %v4455
    %v4457 = vlaneseq
    %v4458 = vshrl.u32 %v4457, 7
    %v4459 = vsub.s32 0, %v4458
    %v4460 = vrot.slane %v2876, %v4459
    %v4461 = vlaneseq
    %v4462 = vshrl.u32 %v4461, 7
    %v4463 = vsub.s32 0, %v4462
    %v4464 = vrot.slane %v2877, %v4463
    %v4465 = vlaneseq
    %v4466 = vshrl.u32 %v4465, 7
    %v4467 = vsub.s32 0, %v4466
    %v4468 = vrot.slane %v2878, %v4467
    %v4477 = vadd.f32 %v4429, %v4440
    %v4478 = vadd.f32 %v4430, %v4444
    %v4479 = vadd.f32 %v4431, %v4448
    %v4480 = vadd.f32 %v4432, %v4452
    %v4481 = vadd.f32 %v4433, %v4456
    %v4482 = vadd.f32 %v4434, %v4460
    %v4483 = vadd.f32 %v4435, %v4464
    %v4484 = vadd.f32 %v4436, %v4468
    %v4485 = vsel %vm1904, %v4477, -inf
    %4486 = vmax.xlane.f32.xlu0 %v4485
    %v4487 = vpop.xlane.xlu0 %4486
    %v4488 = vsel %vm1904, %v4478, -inf
    %4489 = vmax.xlane.f32.xlu0 %v4488
    %v4490 = vpop.xlane.xlu0 %4489
    %v4491 = vsel %vm1904, %v4479, -inf
    %4492 = vmax.xlane.f32.xlu0 %v4491
    %v4493 = vpop.xlane.xlu0 %4492
    %v4494 = vsel %vm1904, %v4480, -inf
    %4495 = vmax.xlane.f32.xlu0 %v4494
    %v4496 = vpop.xlane.xlu0 %4495
    %v4497 = vsel %vm1904, %v4481, -inf
    %4498 = vmax.xlane.f32.xlu0 %v4497
    %v4499 = vpop.xlane.xlu0 %4498
    %v4500 = vsel %vm1904, %v4482, -inf
    %4501 = vmax.xlane.f32.xlu0 %v4500
    %v4502 = vpop.xlane.xlu0 %4501
    %v4503 = vsel %vm1904, %v4483, -inf
    %4504 = vmax.xlane.f32.xlu0 %v4503
    %v4505 = vpop.xlane.xlu0 %4504
    %v4506 = vsel %vm1904, %v4484, -inf
    %4507 = vmax.xlane.f32.xlu0 %v4506
    %v4508 = vpop.xlane.xlu0 %4507
    %v4509 = vsub.f32 %v4477, %v4487
    %v4510 = vsub.f32 %v4478, %v4490
    %v4511 = vsub.f32 %v4479, %v4493
    %v4512 = vsub.f32 %v4480, %v4496
    %v4513 = vsub.f32 %v4481, %v4499
    %v4514 = vsub.f32 %v4482, %v4502
    %v4515 = vsub.f32 %v4483, %v4505
    %v4516 = vsub.f32 %v4484, %v4508
    %v4517 = vmul.f32 %v4509, 1.442695
    %v4518 = vpow.pop %v4517
    %v4519 = vmul.f32 %v4510, 1.442695
    %v4520 = vpow.pop %v4519
    %v4521 = vmul.f32 %v4511, 1.442695
    %v4522 = vpow.pop %v4521
    %v4523 = vmul.f32 %v4512, 1.442695
    %v4524 = vpow.pop %v4523
    %v4525 = vmul.f32 %v4513, 1.442695
    %v4526 = vpow.pop %v4525
    %v4527 = vmul.f32 %v4514, 1.442695
    %v4528 = vpow.pop %v4527
    %v4529 = vmul.f32 %v4515, 1.442695
    %v4530 = vpow.pop %v4529
    %v4531 = vmul.f32 %v4516, 1.442695
    %v4532 = vpow.pop %v4531
    %v4533 = vsel %vm1904, %v4518, 0.0
    %4534 = vadd.xlane.f32.xlu0 %v4533
    %v4535 = vpop.xlane.xlu0 %4534
    %v4536 = vsel %vm1904, %v4520, 0.0
    %4537 = vadd.xlane.f32.xlu0 %v4536
    %v4538 = vpop.xlane.xlu0 %4537
    %v4539 = vsel %vm1904, %v4522, 0.0
    %4540 = vadd.xlane.f32.xlu0 %v4539
    %v4541 = vpop.xlane.xlu0 %4540
    %v4542 = vsel %vm1904, %v4524, 0.0
    %4543 = vadd.xlane.f32.xlu0 %v4542
    %v4544 = vpop.xlane.xlu0 %4543
    %v4545 = vsel %vm1904, %v4526, 0.0
    %4546 = vadd.xlane.f32.xlu0 %v4545
    %v4547 = vpop.xlane.xlu0 %4546
    %v4548 = vsel %vm1904, %v4528, 0.0
    %4549 = vadd.xlane.f32.xlu0 %v4548
    %v4550 = vpop.xlane.xlu0 %4549
    %v4551 = vsel %vm1904, %v4530, 0.0
    %4552 = vadd.xlane.f32.xlu0 %v4551
    %v4553 = vpop.xlane.xlu0 %4552
    %v4554 = vsel %vm1904, %v4532, 0.0
    %4555 = vadd.xlane.f32.xlu0 %v4554
    %v4556 = vpop.xlane.xlu0 %4555
    %v4557 = vrcp.pop %v4535
    %v4558 = vrcp.pop %v4538
    %v4559 = vrcp.pop %v4541
    %v4560 = vrcp.pop %v4544
    %v4561 = vrcp.pop %v4547
    %v4562 = vrcp.pop %v4550
    %v4563 = vrcp.pop %v4553
    %v4564 = vrcp.pop %v4556
    %v4565 = vmul.f32 %v4518, %v4557
    %v4566 = vmul.f32 %v4520, %v4558
    %v4567 = vmul.f32 %v4522, %v4559
    %v4568 = vmul.f32 %v4524, %v4560
    %v4569 = vmul.f32 %v4526, %v4561
    %v4570 = vmul.f32 %v4528, %v4562
    %v4571 = vmul.f32 %v4530, %v4563
    %v4572 = vmul.f32 %v4532, %v4564
    %v4573 = vpack.c.bf16 %v4565, %v4565
    %v4574 = vpack.c.bf16 %v4566, %v4566
    %v4575 = vpack.c.bf16 %v4567, %v4567
    %v4576 = vpack.c.bf16 %v4568, %v4568
    %v4577 = vpack.c.bf16 %v4569, %v4569
    %v4578 = vpack.c.bf16 %v4570, %v4570
    %v4579 = vpack.c.bf16 %v4571, %v4571
    %v4580 = vpack.c.bf16 %v4572, %v4572
    %v4582 = vsel %vm1904, %v4573, 0
    %v4585 = vsel %vm2004, %v4039, 0
    %4587 = vmatprep.subr.bf16.mxu0 0
    %4588 = vmatpush1.bf16.msra.mxu0 0
    %4589 = vmatprep.subr.bf16.mxu0 0
    %4590 = vmatpush1.bf16.msra.mxu0 0
    %4591 = vmatprep.subr.bf16.mxu0 0
    %4592 = vmatpush1.bf16.msra.mxu0 0
    %4593 = vmatprep.subr.bf16.mxu0 0
    %4594 = vmatpush1.bf16.msra.mxu0 0
    %4595 = vmatprep.subr.bf16.mxu0 0
    %4596 = vmatpush1.bf16.msra.mxu0 0
    %4597 = vmatprep.subr.bf16.mxu0 0
    %4598 = vmatpush1.bf16.msra.mxu0 0
    %4599 = vmatprep.subr.bf16.mxu0 0
    %4600 = vmatpush1.bf16.msra.mxu0 0
    %4601 = vmatprep.subr.bf16.mxu0 0
    %4602 = vmatpush1.bf16.msra.mxu0 %v4585
    %4603 = vmatprep.subr.bf16.mxu0 0
    %4604 = vmatpush2.bf16.msra.mxu0 0
    %4605 = vmatprep.subr.bf16.mxu0 0
    %4606 = vmatpush2.bf16.msra.mxu0 0
    %4607 = vmatprep.subr.bf16.mxu0 0
    %4608 = vmatpush2.bf16.msra.mxu0 0
    %4609 = vmatprep.subr.bf16.mxu0 0
    %4610 = vmatpush2.bf16.msra.mxu0 0
    %4611 = vmatprep.subr.bf16.mxu0 0
    %4612 = vmatpush2.bf16.msra.mxu0 0
    %4613 = vmatprep.subr.bf16.mxu0 0
    %4614 = vmatpush2.bf16.msra.mxu0 0
    %4615 = vmatprep.subr.bf16.mxu0 0
    %4616 = vmatpush2.bf16.msra.mxu0 0
    %4617 = vmatprep.subr.bf16.mxu0 0
    %4618 = vmatpush2.bf16.msra.mxu0 0
    %4619 = vmatprep.mubr.bf16.mxu0 0
    %4620 = vmatmul.mubr.bf16.gmra.mxu0 %v4582
    %v4621 = vpop.f32.mrf.mxu0
    %v4622 = vadd.f32 0.0, %v4621
    %v4623 = vpop.f32.mrf.mxu0
    %v4624 = vpop.f32.mrf.mxu0
    %v4625 = vpop.f32.mrf.mxu0
    %4626 = vdwg.mxu0
    %v4628 = vsel %vm1904, %v4574, 0
    %v4631 = vsel %vm2004, %v4042, 0
    %4633 = vmatprep.subr.bf16.mxu0 0
    %4634 = vmatpush1.bf16.msra.mxu0 0
    %4635 = vmatprep.subr.bf16.mxu0 0
    %4636 = vmatpush1.bf16.msra.mxu0 0
    %4637 = vmatprep.subr.bf16.mxu0 0
    %4638 = vmatpush1.bf16.msra.mxu0 0
    %4639 = vmatprep.subr.bf16.mxu0 0
    %4640 = vmatpush1.bf16.msra.mxu0 0
    %4641 = vmatprep.subr.bf16.mxu0 0
    %4642 = vmatpush1.bf16.msra.mxu0 0
    %4643 = vmatprep.subr.bf16.mxu0 0
    %4644 = vmatpush1.bf16.msra.mxu0 0
    %4645 = vmatprep.subr.bf16.mxu0 0
    %4646 = vmatpush1.bf16.msra.mxu0 0
    %4647 = vmatprep.subr.bf16.mxu0 0
    %4648 = vmatpush1.bf16.msra.mxu0 %v4631
    %4649 = vmatprep.subr.bf16.mxu0 0
    %4650 = vmatpush2.bf16.msra.mxu0 0
    %4651 = vmatprep.subr.bf16.mxu0 0
    %4652 = vmatpush2.bf16.msra.mxu0 0
    %4653 = vmatprep.subr.bf16.mxu0 0
    %4654 = vmatpush2.bf16.msra.mxu0 0
    %4655 = vmatprep.subr.bf16.mxu0 0
    %4656 = vmatpush2.bf16.msra.mxu0 0
    %4657 = vmatprep.subr.bf16.mxu0 0
    %4658 = vmatpush2.bf16.msra.mxu0 0
    %4659 = vmatprep.subr.bf16.mxu0 0
    %4660 = vmatpush2.bf16.msra.mxu0 0
    %4661 = vmatprep.subr.bf16.mxu0 0
    %4662 = vmatpush2.bf16.msra.mxu0 0
    %4663 = vmatprep.subr.bf16.mxu0 0
    %4664 = vmatpush2.bf16.msra.mxu0 0
    %4665 = vmatprep.mubr.bf16.mxu0 0
    %4666 = vmatmul.mubr.bf16.gmra.mxu0 %v4628
    %v4667 = vpop.f32.mrf.mxu0
    %v4668 = vadd.f32 0.0, %v4667
    %v4669 = vpop.f32.mrf.mxu0
    %v4670 = vpop.f32.mrf.mxu0
    %v4671 = vpop.f32.mrf.mxu0
    %4672 = vdwg.mxu0
    %v4674 = vsel %vm1904, %v4575, 0
    %v4677 = vsel %vm2004, %v4045, 0
    %4679 = vmatprep.subr.bf16.mxu0 0
    %4680 = vmatpush1.bf16.msra.mxu0 0
    %4681 = vmatprep.subr.bf16.mxu0 0
    %4682 = vmatpush1.bf16.msra.mxu0 0
    %4683 = vmatprep.subr.bf16.mxu0 0
    %4684 = vmatpush1.bf16.msra.mxu0 0
    %4685 = vmatprep.subr.bf16.mxu0 0
    %4686 = vmatpush1.bf16.msra.mxu0 0
    %4687 = vmatprep.subr.bf16.mxu0 0
    %4688 = vmatpush1.bf16.msra.mxu0 0
    %4689 = vmatprep.subr.bf16.mxu0 0
    %4690 = vmatpush1.bf16.msra.mxu0 0
    %4691 = vmatprep.subr.bf16.mxu0 0
    %4692 = vmatpush1.bf16.msra.mxu0 0
    %4693 = vmatprep.subr.bf16.mxu0 0
    %4694 = vmatpush1.bf16.msra.mxu0 %v4677
    %4695 = vmatprep.subr.bf16.mxu0 0
    %4696 = vmatpush2.bf16.msra.mxu0 0
    %4697 = vmatprep.subr.bf16.mxu0 0
    %4698 = vmatpush2.bf16.msra.mxu0 0
    %4699 = vmatprep.subr.bf16.mxu0 0
    %4700 = vmatpush2.bf16.msra.mxu0 0
    %4701 = vmatprep.subr.bf16.mxu0 0
    %4702 = vmatpush2.bf16.msra.mxu0 0
    %4703 = vmatprep.subr.bf16.mxu0 0
    %4704 = vmatpush2.bf16.msra.mxu0 0
    %4705 = vmatprep.subr.bf16.mxu0 0
    %4706 = vmatpush2.bf16.msra.mxu0 0
    %4707 = vmatprep.subr.bf16.mxu0 0
    %4708 = vmatpush2.bf16.msra.mxu0 0
    %4709 = vmatprep.subr.bf16.mxu0 0
    %4710 = vmatpush2.bf16.msra.mxu0 0
    %4711 = vmatprep.mubr.bf16.mxu0 0
    %4712 = vmatmul.mubr.bf16.gmra.mxu0 %v4674
    %v4713 = vpop.f32.mrf.mxu0
    %v4714 = vadd.f32 0.0, %v4713
    %v4715 = vpop.f32.mrf.mxu0
    %v4716 = vpop.f32.mrf.mxu0
    %v4717 = vpop.f32.mrf.mxu0
    %4718 = vdwg.mxu0
    %v4720 = vsel %vm1904, %v4576, 0
    %v4723 = vsel %vm2004, %v4048, 0
    %4725 = vmatprep.subr.bf16.mxu0 0
    %4726 = vmatpush1.bf16.msra.mxu0 0
    %4727 = vmatprep.subr.bf16.mxu0 0
    %4728 = vmatpush1.bf16.msra.mxu0 0
    %4729 = vmatprep.subr.bf16.mxu0 0
    %4730 = vmatpush1.bf16.msra.mxu0 0
    %4731 = vmatprep.subr.bf16.mxu0 0
    %4732 = vmatpush1.bf16.msra.mxu0 0
    %4733 = vmatprep.subr.bf16.mxu0 0
    %4734 = vmatpush1.bf16.msra.mxu0 0
    %4735 = vmatprep.subr.bf16.mxu0 0
    %4736 = vmatpush1.bf16.msra.mxu0 0
    %4737 = vmatprep.subr.bf16.mxu0 0
    %4738 = vmatpush1.bf16.msra.mxu0 0
    %4739 = vmatprep.subr.bf16.mxu0 0
    %4740 = vmatpush1.bf16.msra.mxu0 %v4723
    %4741 = vmatprep.subr.bf16.mxu0 0
    %4742 = vmatpush2.bf16.msra.mxu0 0
    %4743 = vmatprep.subr.bf16.mxu0 0
    %4744 = vmatpush2.bf16.msra.mxu0 0
    %4745 = vmatprep.subr.bf16.mxu0 0
    %4746 = vmatpush2.bf16.msra.mxu0 0
    %4747 = vmatprep.subr.bf16.mxu0 0
    %4748 = vmatpush2.bf16.msra.mxu0 0
    %4749 = vmatprep.subr.bf16.mxu0 0
    %4750 = vmatpush2.bf16.msra.mxu0 0
    %4751 = vmatprep.subr.bf16.mxu0 0
    %4752 = vmatpush2.bf16.msra.mxu0 0
    %4753 = vmatprep.subr.bf16.mxu0 0
    %4754 = vmatpush2.bf16.msra.mxu0 0
    %4755 = vmatprep.subr.bf16.mxu0 0
    %4756 = vmatpush2.bf16.msra.mxu0 0
    %4757 = vmatprep.mubr.bf16.mxu0 0
    %4758 = vmatmul.mubr.bf16.gmra.mxu0 %v4720
    %v4759 = vpop.f32.mrf.mxu0
    %v4760 = vadd.f32 0.0, %v4759
    %v4761 = vpop.f32.mrf.mxu0
    %v4762 = vpop.f32.mrf.mxu0
    %v4763 = vpop.f32.mrf.mxu0
    %4764 = vdwg.mxu0
    %v4766 = vsel %vm1904, %v4577, 0
    %v4769 = vsel %vm2004, %v4051, 0
    %4771 = vmatprep.subr.bf16.mxu0 0
    %4772 = vmatpush1.bf16.msra.mxu0 0
    %4773 = vmatprep.subr.bf16.mxu0 0
    %4774 = vmatpush1.bf16.msra.mxu0 0
    %4775 = vmatprep.subr.bf16.mxu0 0
    %4776 = vmatpush1.bf16.msra.mxu0 0
    %4777 = vmatprep.subr.bf16.mxu0 0
    %4778 = vmatpush1.bf16.msra.mxu0 0
    %4779 = vmatprep.subr.bf16.mxu0 0
    %4780 = vmatpush1.bf16.msra.mxu0 0
    %4781 = vmatprep.subr.bf16.mxu0 0
    %4782 = vmatpush1.bf16.msra.mxu0 0
    %4783 = vmatprep.subr.bf16.mxu0 0
    %4784 = vmatpush1.bf16.msra.mxu0 0
    %4785 = vmatprep.subr.bf16.mxu0 0
    %4786 = vmatpush1.bf16.msra.mxu0 %v4769
    %4787 = vmatprep.subr.bf16.mxu0 0
    %4788 = vmatpush2.bf16.msra.mxu0 0
    %4789 = vmatprep.subr.bf16.mxu0 0
    %4790 = vmatpush2.bf16.msra.mxu0 0
    %4791 = vmatprep.subr.bf16.mxu0 0
    %4792 = vmatpush2.bf16.msra.mxu0 0
    %4793 = vmatprep.subr.bf16.mxu0 0
    %4794 = vmatpush2.bf16.msra.mxu0 0
    %4795 = vmatprep.subr.bf16.mxu0 0
    %4796 = vmatpush2.bf16.msra.mxu0 0
    %4797 = vmatprep.subr.bf16.mxu0 0
    %4798 = vmatpush2.bf16.msra.mxu0 0
    %4799 = vmatprep.subr.bf16.mxu0 0
    %4800 = vmatpush2.bf16.msra.mxu0 0
    %4801 = vmatprep.subr.bf16.mxu0 0
    %4802 = vmatpush2.bf16.msra.mxu0 0
    %4803 = vmatprep.mubr.bf16.mxu0 0
    %4804 = vmatmul.mubr.bf16.gmra.mxu0 %v4766
    %v4805 = vpop.f32.mrf.mxu0
    %v4806 = vadd.f32 0.0, %v4805
    %v4807 = vpop.f32.mrf.mxu0
    %v4808 = vpop.f32.mrf.mxu0
    %v4809 = vpop.f32.mrf.mxu0
    %4810 = vdwg.mxu0
    %v4812 = vsel %vm1904, %v4578, 0
    %v4815 = vsel %vm2004, %v4054, 0
    %4817 = vmatprep.subr.bf16.mxu0 0
    %4818 = vmatpush1.bf16.msra.mxu0 0
    %4819 = vmatprep.subr.bf16.mxu0 0
    %4820 = vmatpush1.bf16.msra.mxu0 0
    %4821 = vmatprep.subr.bf16.mxu0 0
    %4822 = vmatpush1.bf16.msra.mxu0 0
    %4823 = vmatprep.subr.bf16.mxu0 0
    %4824 = vmatpush1.bf16.msra.mxu0 0
    %4825 = vmatprep.subr.bf16.mxu0 0
    %4826 = vmatpush1.bf16.msra.mxu0 0
    %4827 = vmatprep.subr.bf16.mxu0 0
    %4828 = vmatpush1.bf16.msra.mxu0 0
    %4829 = vmatprep.subr.bf16.mxu0 0
    %4830 = vmatpush1.bf16.msra.mxu0 0
    %4831 = vmatprep.subr.bf16.mxu0 0
    %4832 = vmatpush1.bf16.msra.mxu0 %v4815
    %4833 = vmatprep.subr.bf16.mxu0 0
    %4834 = vmatpush2.bf16.msra.mxu0 0
    %4835 = vmatprep.subr.bf16.mxu0 0
    %4836 = vmatpush2.bf16.msra.mxu0 0
    %4837 = vmatprep.subr.bf16.mxu0 0
    %4838 = vmatpush2.bf16.msra.mxu0 0
    %4839 = vmatprep.subr.bf16.mxu0 0
    %4840 = vmatpush2.bf16.msra.mxu0 0
    %4841 = vmatprep.subr.bf16.mxu0 0
    %4842 = vmatpush2.bf16.msra.mxu0 0
    %4843 = vmatprep.subr.bf16.mxu0 0
    %4844 = vmatpush2.bf16.msra.mxu0 0
    %4845 = vmatprep.subr.bf16.mxu0 0
    %4846 = vmatpush2.bf16.msra.mxu0 0
    %4847 = vmatprep.subr.bf16.mxu0 0
    %4848 = vmatpush2.bf16.msra.mxu0 0
    %4849 = vmatprep.mubr.bf16.mxu0 0
    %4850 = vmatmul.mubr.bf16.gmra.mxu0 %v4812
    %v4851 = vpop.f32.mrf.mxu0
    %v4852 = vadd.f32 0.0, %v4851
    %v4853 = vpop.f32.mrf.mxu0
    %v4854 = vpop.f32.mrf.mxu0
    %v4855 = vpop.f32.mrf.mxu0
    %4856 = vdwg.mxu0
    %v4858 = vsel %vm1904, %v4579, 0
    %v4861 = vsel %vm2004, %v4057, 0
    %4863 = vmatprep.subr.bf16.mxu0 0
    %4864 = vmatpush1.bf16.msra.mxu0 0
    %4865 = vmatprep.subr.bf16.mxu0 0
    %4866 = vmatpush1.bf16.msra.mxu0 0
    %4867 = vmatprep.subr.bf16.mxu0 0
    %4868 = vmatpush1.bf16.msra.mxu0 0
    %4869 = vmatprep.subr.bf16.mxu0 0
    %4870 = vmatpush1.bf16.msra.mxu0 0
    %4871 = vmatprep.subr.bf16.mxu0 0
    %4872 = vmatpush1.bf16.msra.mxu0 0
    %4873 = vmatprep.subr.bf16.mxu0 0
    %4874 = vmatpush1.bf16.msra.mxu0 0
    %4875 = vmatprep.subr.bf16.mxu0 0
    %4876 = vmatpush1.bf16.msra.mxu0 0
    %4877 = vmatprep.subr.bf16.mxu0 0
    %4878 = vmatpush1.bf16.msra.mxu0 %v4861
    %4879 = vmatprep.subr.bf16.mxu0 0
    %4880 = vmatpush2.bf16.msra.mxu0 0
    %4881 = vmatprep.subr.bf16.mxu0 0
    %4882 = vmatpush2.bf16.msra.mxu0 0
    %4883 = vmatprep.subr.bf16.mxu0 0
    %4884 = vmatpush2.bf16.msra.mxu0 0
    %4885 = vmatprep.subr.bf16.mxu0 0
    %4886 = vmatpush2.bf16.msra.mxu0 0
    %4887 = vmatprep.subr.bf16.mxu0 0
    %4888 = vmatpush2.bf16.msra.mxu0 0
    %4889 = vmatprep.subr.bf16.mxu0 0
    %4890 = vmatpush2.bf16.msra.mxu0 0
    %4891 = vmatprep.subr.bf16.mxu0 0
    %4892 = vmatpush2.bf16.msra.mxu0 0
    %4893 = vmatprep.subr.bf16.mxu0 0
    %4894 = vmatpush2.bf16.msra.mxu0 0
    %4895 = vmatprep.mubr.bf16.mxu0 0
    %4896 = vmatmul.mubr.bf16.gmra.mxu0 %v4858
    %v4897 = vpop.f32.mrf.mxu0
    %v4898 = vadd.f32 0.0, %v4897
    %v4899 = vpop.f32.mrf.mxu0
    %v4900 = vpop.f32.mrf.mxu0
    %v4901 = vpop.f32.mrf.mxu0
    %4902 = vdwg.mxu0
    %v4904 = vsel %vm1904, %v4580, 0
    %v4907 = vsel %vm2004, %v4060, 0
    %4909 = vmatprep.subr.bf16.mxu0 0
    %4910 = vmatpush1.bf16.msra.mxu0 0
    %4911 = vmatprep.subr.bf16.mxu0 0
    %4912 = vmatpush1.bf16.msra.mxu0 0
    %4913 = vmatprep.subr.bf16.mxu0 0
    %4914 = vmatpush1.bf16.msra.mxu0 0
    %4915 = vmatprep.subr.bf16.mxu0 0
    %4916 = vmatpush1.bf16.msra.mxu0 0
    %4917 = vmatprep.subr.bf16.mxu0 0
    %4918 = vmatpush1.bf16.msra.mxu0 0
    %4919 = vmatprep.subr.bf16.mxu0 0
    %4920 = vmatpush1.bf16.msra.mxu0 0
    %4921 = vmatprep.subr.bf16.mxu0 0
    %4922 = vmatpush1.bf16.msra.mxu0 0
    %4923 = vmatprep.subr.bf16.mxu0 0
    %4924 = vmatpush1.bf16.msra.mxu0 %v4907
    %4925 = vmatprep.subr.bf16.mxu0 0
    %4926 = vmatpush2.bf16.msra.mxu0 0
    %4927 = vmatprep.subr.bf16.mxu0 0
    %4928 = vmatpush2.bf16.msra.mxu0 0
    %4929 = vmatprep.subr.bf16.mxu0 0
    %4930 = vmatpush2.bf16.msra.mxu0 0
    %4931 = vmatprep.subr.bf16.mxu0 0
    %4932 = vmatpush2.bf16.msra.mxu0 0
    %4933 = vmatprep.subr.bf16.mxu0 0
    %4934 = vmatpush2.bf16.msra.mxu0 0
    %4935 = vmatprep.subr.bf16.mxu0 0
    %4936 = vmatpush2.bf16.msra.mxu0 0
    %4937 = vmatprep.subr.bf16.mxu0 0
    %4938 = vmatpush2.bf16.msra.mxu0 0
    %4939 = vmatprep.subr.bf16.mxu0 0
    %4940 = vmatpush2.bf16.msra.mxu0 0
    %4941 = vmatprep.mubr.bf16.mxu0 0
    %4942 = vmatmul.mubr.bf16.gmra.mxu0 %v4904
    %v4943 = vpop.f32.mrf.mxu0
    %v4944 = vadd.f32 0.0, %v4943
    %v4945 = vpop.f32.mrf.mxu0
    %v4946 = vpop.f32.mrf.mxu0
    %v4947 = vpop.f32.mrf.mxu0
    %4948 = vdwg.mxu0
    %v4949 = vcombine.low %v4622, %v4714
    %v4950 = vcombine.high %v4622, %v4714
    %v4952 = vunpack.c.l.s4 1983009808
    %v4953 = vunpack.c.0.s8 %v4952
    %v4954 = vlaneseq
    %v4955 = vshrl.u32 %v4954, 7
    %v4956 = vsub.s32 %v4953, %v4955
    %v4957 = vrot.slane %v4949, %v4956
    %v4959 = vunpack.c.l.s4 1983009808
    %v4960 = vunpack.c.0.s8 %v4959
    %v4961 = vlaneseq
    %v4962 = vshrl.u32 %v4961, 7
    %v4963 = vsub.s32 %v4960, %v4962
    %v4964 = vrot.slane %v4950, %v4963
    %v4965 = vcombine.low %v4668, %v4760
    %v4966 = vcombine.high %v4668, %v4760
    %v4968 = vunpack.c.l.s4 1983009808
    %v4969 = vunpack.c.0.s8 %v4968
    %v4970 = vlaneseq
    %v4971 = vshrl.u32 %v4970, 7
    %v4972 = vsub.s32 %v4969, %v4971
    %v4973 = vrot.slane %v4965, %v4972
    %v4975 = vunpack.c.l.s4 1983009808
    %v4976 = vunpack.c.0.s8 %v4975
    %v4977 = vlaneseq
    %v4978 = vshrl.u32 %v4977, 7
    %v4979 = vsub.s32 %v4976, %v4978
    %v4980 = vrot.slane %v4966, %v4979
    %v4981 = vcombine.low %v4957, %v4973
    %v4982 = vcombine.high %v4957, %v4973
    %v4984 = vunpack.c.l.s4 1934713408
    %v4985 = vunpack.c.0.s8 %v4984
    %v4986 = vlaneseq
    %v4987 = vshrl.u32 %v4986, 7
    %v4988 = vsub.s32 %v4985, %v4987
    %v4989 = vrot.slane %v4981, %v4988
    %v4991 = vunpack.c.l.s4 1934713408
    %v4992 = vunpack.c.0.s8 %v4991
    %v4993 = vlaneseq
    %v4994 = vshrl.u32 %v4993, 7
    %v4995 = vsub.s32 %v4992, %v4994
    %v4996 = vrot.slane %v4982, %v4995
    %v4997 = vcombine.low %v4964, %v4980
    %v4998 = vcombine.high %v4964, %v4980
    %v5000 = vunpack.c.l.s4 1934713408
    %v5001 = vunpack.c.0.s8 %v5000
    %v5002 = vlaneseq
    %v5003 = vshrl.u32 %v5002, 7
    %v5004 = vsub.s32 %v5001, %v5003
    %v5005 = vrot.slane %v4997, %v5004
    %v5007 = vunpack.c.l.s4 1934713408
    %v5008 = vunpack.c.0.s8 %v5007
    %v5009 = vlaneseq
    %v5010 = vshrl.u32 %v5009, 7
    %v5011 = vsub.s32 %v5008, %v5010
    %v5012 = vrot.slane %v4998, %v5011
    %v5013 = vcombine.high %v4989, 0.0
    %v5014 = vcombine.high %v4996, 0.0
    %v5015 = vcombine.high %v5005, 0.0
    %v5016 = vcombine.high %v5012, 0.0
    %v5017 = vcombine.low %v4806, %v4898
    %v5018 = vcombine.high %v4806, %v4898
    %v5020 = vunpack.c.l.s4 1983009808
    %v5021 = vunpack.c.0.s8 %v5020
    %v5022 = vlaneseq
    %v5023 = vshrl.u32 %v5022, 7
    %v5024 = vsub.s32 %v5021, %v5023
    %v5025 = vrot.slane %v5017, %v5024
    %v5027 = vunpack.c.l.s4 1983009808
    %v5028 = vunpack.c.0.s8 %v5027
    %v5029 = vlaneseq
    %v5030 = vshrl.u32 %v5029, 7
    %v5031 = vsub.s32 %v5028, %v5030
    %v5032 = vrot.slane %v5018, %v5031
    %v5033 = vcombine.low %v4852, %v4944
    %v5034 = vcombine.high %v4852, %v4944
    %v5036 = vunpack.c.l.s4 1983009808
    %v5037 = vunpack.c.0.s8 %v5036
    %v5038 = vlaneseq
    %v5039 = vshrl.u32 %v5038, 7
    %v5040 = vsub.s32 %v5037, %v5039
    %v5041 = vrot.slane %v5033, %v5040
    %v5043 = vunpack.c.l.s4 1983009808
    %v5044 = vunpack.c.0.s8 %v5043
    %v5045 = vlaneseq
    %v5046 = vshrl.u32 %v5045, 7
    %v5047 = vsub.s32 %v5044, %v5046
    %v5048 = vrot.slane %v5034, %v5047
    %v5049 = vcombine.low %v5025, %v5041
    %v5050 = vcombine.high %v5025, %v5041
    %v5052 = vunpack.c.l.s4 1934713408
    %v5053 = vunpack.c.0.s8 %v5052
    %v5054 = vlaneseq
    %v5055 = vshrl.u32 %v5054, 7
    %v5056 = vsub.s32 %v5053, %v5055
    %v5057 = vrot.slane %v5049, %v5056
    %v5059 = vunpack.c.l.s4 1934713408
    %v5060 = vunpack.c.0.s8 %v5059
    %v5061 = vlaneseq
    %v5062 = vshrl.u32 %v5061, 7
    %v5063 = vsub.s32 %v5060, %v5062
    %v5064 = vrot.slane %v5050, %v5063
    %v5065 = vcombine.low %v5032, %v5048
    %v5066 = vcombine.high %v5032, %v5048
    %v5068 = vunpack.c.l.s4 1934713408
    %v5069 = vunpack.c.0.s8 %v5068
    %v5070 = vlaneseq
    %v5071 = vshrl.u32 %v5070, 7
    %v5072 = vsub.s32 %v5069, %v5071
    %v5073 = vrot.slane %v5065, %v5072
    %v5075 = vunpack.c.l.s4 1934713408
    %v5076 = vunpack.c.0.s8 %v5075
    %v5077 = vlaneseq
    %v5078 = vshrl.u32 %v5077, 7
    %v5079 = vsub.s32 %v5076, %v5078
    %v5080 = vrot.slane %v5066, %v5079
    %v5081 = vcombine.high %v5057, 0.0
    %v5082 = vcombine.high %v5064, 0.0
    %v5083 = vcombine.high %v5073, 0.0
    %v5084 = vcombine.high %v5080, 0.0
    %v5085 = vcombine.low %v4989, %v4996
    %v5087 = vunpack.c.l.s4 1983009808
    %v5088 = vunpack.c.0.s8 %v5087
    %v5089 = vlaneseq
    %v5090 = vshrl.u32 %v5089, 7
    %v5091 = vsub.s32 %v5088, %v5090
    %v5092 = vrot.slane %v5085, %v5091
    %v5093 = vcombine.low %v5013, %v5014
    %v5095 = vunpack.c.l.s4 1983009808
    %v5096 = vunpack.c.0.s8 %v5095
    %v5097 = vlaneseq
    %v5098 = vshrl.u32 %v5097, 7
    %v5099 = vsub.s32 %v5096, %v5098
    %v5100 = vrot.slane %v5093, %v5099
    %v5101 = vcombine.low %v5005, %v5012
    %v5103 = vunpack.c.l.s4 1983009808
    %v5104 = vunpack.c.0.s8 %v5103
    %v5105 = vlaneseq
    %v5106 = vshrl.u32 %v5105, 7
    %v5107 = vsub.s32 %v5104, %v5106
    %v5108 = vrot.slane %v5101, %v5107
    %v5109 = vcombine.low %v5015, %v5016
    %v5111 = vunpack.c.l.s4 1983009808
    %v5112 = vunpack.c.0.s8 %v5111
    %v5113 = vlaneseq
    %v5114 = vshrl.u32 %v5113, 7
    %v5115 = vsub.s32 %v5112, %v5114
    %v5116 = vrot.slane %v5109, %v5115
    %v5117 = vcombine.low %v5092, %v5100
    %v5118 = vcombine.high %v5092, %v5100
    %v5120 = vunpack.c.l.s4 1934713408
    %v5121 = vunpack.c.0.s8 %v5120
    %v5122 = vlaneseq
    %v5123 = vshrl.u32 %v5122, 7
    %v5124 = vsub.s32 %v5121, %v5123
    %v5125 = vrot.slane %v5117, %v5124
    %v5127 = vunpack.c.l.s4 1934713408
    %v5128 = vunpack.c.0.s8 %v5127
    %v5129 = vlaneseq
    %v5130 = vshrl.u32 %v5129, 7
    %v5131 = vsub.s32 %v5128, %v5130
    %v5132 = vrot.slane %v5118, %v5131
    %v5133 = vcombine.low %v5108, %v5116
    %v5134 = vcombine.high %v5108, %v5116
    %v5136 = vunpack.c.l.s4 1934713408
    %v5137 = vunpack.c.0.s8 %v5136
    %v5138 = vlaneseq
    %v5139 = vshrl.u32 %v5138, 7
    %v5140 = vsub.s32 %v5137, %v5139
    %v5141 = vrot.slane %v5133, %v5140
    %v5143 = vunpack.c.l.s4 1934713408
    %v5144 = vunpack.c.0.s8 %v5143
    %v5145 = vlaneseq
    %v5146 = vshrl.u32 %v5145, 7
    %v5147 = vsub.s32 %v5144, %v5146
    %v5148 = vrot.slane %v5134, %v5147
    %v5149 = vcombine.low %v5125, %v5141
    %v5150 = vcombine.high %v5125, %v5141
    %v5151 = vcombine.low %v5132, %v5148
    %v5152 = vcombine.high %v5132, %v5148
    %v5153 = vcombine.low %v5057, %v5064
    %v5155 = vunpack.c.l.s4 1983009808
    %v5156 = vunpack.c.0.s8 %v5155
    %v5157 = vlaneseq
    %v5158 = vshrl.u32 %v5157, 7
    %v5159 = vsub.s32 %v5156, %v5158
    %v5160 = vrot.slane %v5153, %v5159
    %v5161 = vcombine.low %v5081, %v5082
    %v5163 = vunpack.c.l.s4 1983009808
    %v5164 = vunpack.c.0.s8 %v5163
    %v5165 = vlaneseq
    %v5166 = vshrl.u32 %v5165, 7
    %v5167 = vsub.s32 %v5164, %v5166
    %v5168 = vrot.slane %v5161, %v5167
    %v5169 = vcombine.low %v5073, %v5080
    %v5171 = vunpack.c.l.s4 1983009808
    %v5172 = vunpack.c.0.s8 %v5171
    %v5173 = vlaneseq
    %v5174 = vshrl.u32 %v5173, 7
    %v5175 = vsub.s32 %v5172, %v5174
    %v5176 = vrot.slane %v5169, %v5175
    %v5177 = vcombine.low %v5083, %v5084
    %v5179 = vunpack.c.l.s4 1983009808
    %v5180 = vunpack.c.0.s8 %v5179
    %v5181 = vlaneseq
    %v5182 = vshrl.u32 %v5181, 7
    %v5183 = vsub.s32 %v5180, %v5182
    %v5184 = vrot.slane %v5177, %v5183
    %v5185 = vcombine.low %v5160, %v5168
    %v5186 = vcombine.high %v5160, %v5168
    %v5188 = vunpack.c.l.s4 1934713408
    %v5189 = vunpack.c.0.s8 %v5188
    %v5190 = vlaneseq
    %v5191 = vshrl.u32 %v5190, 7
    %v5192 = vsub.s32 %v5189, %v5191
    %v5193 = vrot.slane %v5185, %v5192
    %v5195 = vunpack.c.l.s4 1934713408
    %v5196 = vunpack.c.0.s8 %v5195
    %v5197 = vlaneseq
    %v5198 = vshrl.u32 %v5197, 7
    %v5199 = vsub.s32 %v5196, %v5198
    %v5200 = vrot.slane %v5186, %v5199
    %v5201 = vcombine.low %v5176, %v5184
    %v5202 = vcombine.high %v5176, %v5184
    %v5204 = vunpack.c.l.s4 1934713408
    %v5205 = vunpack.c.0.s8 %v5204
    %v5206 = vlaneseq
    %v5207 = vshrl.u32 %v5206, 7
    %v5208 = vsub.s32 %v5205, %v5207
    %v5209 = vrot.slane %v5201, %v5208
    %v5211 = vunpack.c.l.s4 1934713408
    %v5212 = vunpack.c.0.s8 %v5211
    %v5213 = vlaneseq
    %v5214 = vshrl.u32 %v5213, 7
    %v5215 = vsub.s32 %v5212, %v5214
    %v5216 = vrot.slane %v5202, %v5215
    %v5217 = vcombine.low %v5193, %v5209
    %v5218 = vcombine.high %v5193, %v5209
    %v5219 = vcombine.low %v5200, %v5216
    %v5220 = vcombine.high %v5200, %v5216
    %5223 = vrot.lane.b32.xlu0 %v5150, 32
    %v5224 = vpop.permute.xlu0 %5223
    %5225 = vrot.lane.b32.xlu0 %v5218, 32
    %v5226 = vpop.permute.xlu0 %5225
    %5231 = vrot.lane.b32.xlu0 %v5151, 64
    %v5232 = vpop.permute.xlu0 %5231
    %5233 = vrot.lane.b32.xlu0 %v5219, 64
    %v5234 = vpop.permute.xlu0 %5233
    %5239 = vrot.lane.b32.xlu0 %v5152, 96
    %v5240 = vpop.permute.xlu0 %5239
    %5241 = vrot.lane.b32.xlu0 %v5220, 96
    %v5242 = vpop.permute.xlu0 %5241
    %v5245 = vsel %vm1519, %v5149, %v5224
    %v5246 = vsel %vm1519, %v5217, %v5226
    %v5247 = vsel %vm2668, %v5245, %v5232
    %v5248 = vsel %vm2668, %v5246, %v5234
    %v5249 = vsel %vm2671, %v5247, %v5240
    %v5250 = vsel %vm2671, %v5248, %v5242
    %v5251 = vpack.c.bf16 %v5250, %v5249
    %v5252 = vld [vmem:[#allocation17] sm:$0xf]
    %v5253 = vld [vmem:[#allocation17 + $0x4] sm:$0xf]
    %v5254 = vld [vmem:[#allocation17 + $0x8] sm:$0xf]
    %v5255 = vld [vmem:[#allocation17 + $0xc] sm:$0xf]
    %v5256 = vld [vmem:[#allocation17 + $0x10] sm:$0xf]
    %v5257 = vld [vmem:[#allocation17 + $0x14] sm:$0xf]
    %v5258 = vld [vmem:[#allocation17 + $0x18] sm:$0xf]
    %v5259 = vld [vmem:[#allocation17 + $0x1c] sm:$0xf]
    %v5260 = vld [vmem:[#allocation17 + $0x20] sm:$0xf]
    %v5261 = vld [vmem:[#allocation17 + $0x24] sm:$0xf]
    %v5262 = vld [vmem:[#allocation17 + $0x28] sm:$0xf]
    %v5263 = vld [vmem:[#allocation17 + $0x2c] sm:$0xf]
    %v5264 = vld [vmem:[#allocation17 + $0x30] sm:$0xf]
    %v5265 = vld [vmem:[#allocation17 + $0x34] sm:$0xf]
    %v5266 = vld [vmem:[#allocation17 + $0x38] sm:$0xf]
    %v5267 = vld [vmem:[#allocation17 + $0x3c] sm:$0xf]
    %v5268 = vld [vmem:[%s41] sm:$0x1]
    %v5270 = vlaneseq
    %v5271 = vshrl.u32 %v5270, 7
    %v5272 = vsub.s32 0, %v5271
    %v5273 = vrot.slane %v5268, %v5272
    %v5291 = vunpack.c.l.b16 %v5252
    %v5292 = vunpack.c.l.b16 %v5253
    %v5293 = vunpack.c.l.b16 %v5254
    %v5294 = vunpack.c.l.b16 %v5255
    %v5295 = vunpack.c.l.b16 %v5256
    %v5296 = vunpack.c.l.b16 %v5257
    %v5297 = vunpack.c.l.b16 %v5258
    %v5298 = vunpack.c.l.b16 %v5259
    %v5299 = vunpack.c.l.b16 %v5260
    %v5300 = vunpack.c.l.b16 %v5261
    %v5301 = vunpack.c.l.b16 %v5262
    %v5302 = vunpack.c.l.b16 %v5263
    %v5303 = vunpack.c.l.b16 %v5264
    %v5304 = vunpack.c.l.b16 %v5265
    %v5305 = vunpack.c.l.b16 %v5266
    %v5306 = vunpack.c.l.b16 %v5267
    %v5307 = vpack.c.b16 %v5292, %v5291
    %v5308 = vpack.c.b16 %v5294, %v5293
    %v5309 = vpack.c.b16 %v5296, %v5295
    %v5310 = vpack.c.b16 %v5298, %v5297
    %v5311 = vpack.c.b16 %v5300, %v5299
    %v5312 = vpack.c.b16 %v5302, %v5301
    %v5313 = vpack.c.b16 %v5304, %v5303
    %v5314 = vpack.c.b16 %v5306, %v5305
    %5323 = vmatprep.subr.bf16.mxu0 0
    %5324 = vmatpush1.bf16.msra.mxu0 %v5314
    %5325 = vmatprep.subr.bf16.mxu0 0
    %5326 = vmatpush1.bf16.msra.mxu0 %v5313
    %5327 = vmatprep.subr.bf16.mxu0 0
    %5328 = vmatpush1.bf16.msra.mxu0 %v5312
    %5329 = vmatprep.subr.bf16.mxu0 0
    %5330 = vmatpush1.bf16.msra.mxu0 %v5311
    %5331 = vmatprep.subr.bf16.mxu0 0
    %5332 = vmatpush1.bf16.msra.mxu0 %v5310
    %5333 = vmatprep.subr.bf16.mxu0 0
    %5334 = vmatpush1.bf16.msra.mxu0 %v5309
    %5335 = vmatprep.subr.bf16.mxu0 0
    %5336 = vmatpush1.bf16.msra.mxu0 %v5308
    %5337 = vmatprep.subr.bf16.mxu0 0
    %5338 = vmatpush1.bf16.msra.mxu0 %v5307
    %5339 = vmatprep.subr.bf16.mxu0 0
    %5340 = vmatpush2.bf16.msra.mxu0 0
    %5341 = vmatprep.subr.bf16.mxu0 0
    %5342 = vmatpush2.bf16.msra.mxu0 0
    %5343 = vmatprep.subr.bf16.mxu0 0
    %5344 = vmatpush2.bf16.msra.mxu0 0
    %5345 = vmatprep.subr.bf16.mxu0 0
    %5346 = vmatpush2.bf16.msra.mxu0 0
    %5347 = vmatprep.subr.bf16.mxu0 0
    %5348 = vmatpush2.bf16.msra.mxu0 0
    %5349 = vmatprep.subr.bf16.mxu0 0
    %5350 = vmatpush2.bf16.msra.mxu0 0
    %5351 = vmatprep.subr.bf16.mxu0 0
    %5352 = vmatpush2.bf16.msra.mxu0 0
    %5353 = vmatprep.subr.bf16.mxu0 0
    %5354 = vmatpush2.bf16.msra.mxu0 0
    %5355 = vmatprep.mubr.bf16.mxu0 0
    %5356 = vmatmul.mubr.bf16.gmra.mxu0 %v5251
    %v5357 = vpop.f32.mrf.mxu0
    %v5358 = vadd.f32 %v5273, %v5357
    %v5359 = vpop.f32.mrf.mxu0
    %v5360 = vpop.f32.mrf.mxu0
    %v5361 = vadd.f32 %v5273, %v5360
    %v5362 = vpop.f32.mrf.mxu0
    %5363 = vdwg.mxu0
    %v5364 = vadd.f32 %v5358, %v2828
    %v5365 = vadd.f32 %v5361, %v2829
    %5366 = vadd.xlane.f32.xlu0 %v5364
    %v5367 = vpop.xlane.xlu0 %5366
    %5368 = vadd.xlane.f32.xlu0 %v5365
    %v5369 = vpop.xlane.xlu0 %5368
    %v5370 = vmul.f32 %v5367, %v2793
    %v5371 = vmul.f32 %v5369, %v2793
    %v5372 = vsub.f32 %v5364, %v5370
    %v5373 = vsub.f32 %v5365, %v5371
    %v5374 = vmul.f32 %v5372, %v5372
    %v5375 = vmul.f32 %v5373, %v5373
    %5376 = vadd.xlane.f32.xlu0 %v5374
    %v5377 = vpop.xlane.xlu0 %5376
    %5378 = vadd.xlane.f32.xlu0 %v5375
    %v5379 = vpop.xlane.xlu0 %5378
    %v5380 = vmul.f32 %v5377, %v2793
    %v5381 = vmul.f32 %v5379, %v2793
    %v5382 = vadd.f32 %v5380, 1e-05
    %v5383 = vadd.f32 %v5381, 1e-05
    %v5384 = vrsqrt.pop %v5382
    %v5385 = vrsqrt.pop %v5383
    %v5386 = vmul.f32 %v5372, %v5384
    %v5387 = vmul.f32 %v5373, %v5385
    %v5388 = vld [vmem:[%s43] sm:$0x1]
    %v5390 = vlaneseq
    %v5391 = vshrl.u32 %v5390, 7
    %v5392 = vsub.s32 0, %v5391
    %v5393 = vrot.slane %v5388, %v5392
    %v5395 = vmul.f32 %v5386, %v5393
    %v5396 = vmul.f32 %v5387, %v5393
    %v5397 = vld [vmem:[%s45] sm:$0x1]
    %v5399 = vlaneseq
    %v5400 = vshrl.u32 %v5399, 7
    %v5401 = vsub.s32 0, %v5400
    %v5402 = vrot.slane %v5397, %v5401
    %v5404 = vadd.f32 %v5395, %v5402
    %v5405 = vadd.f32 %v5396, %v5402
    %v5406 = vpack.c.bf16 %v5405, %v5404
    %v5407 = vld [vmem:[#allocation19] sm:$0xff]
    %v5408 = vld [vmem:[#allocation19 + $0x8] sm:$0xff]
    %v5409 = vld [vmem:[#allocation19 + $0x10] sm:$0xff]
    %v5410 = vld [vmem:[#allocation19 + $0x18] sm:$0xff]
    %v5411 = vld [vmem:[#allocation19 + $0x20] sm:$0xff]
    %v5412 = vld [vmem:[#allocation19 + $0x28] sm:$0xff]
    %v5413 = vld [vmem:[#allocation19 + $0x30] sm:$0xff]
    %v5414 = vld [vmem:[#allocation19 + $0x38] sm:$0xff]
    %v5415 = vld [vmem:[#allocation19 + $0x40] sm:$0xff]
    %v5416 = vld [vmem:[#allocation19 + $0x48] sm:$0xff]
    %v5417 = vld [vmem:[#allocation19 + $0x50] sm:$0xff]
    %v5418 = vld [vmem:[#allocation19 + $0x58] sm:$0xff]
    %v5419 = vld [vmem:[#allocation19 + $0x60] sm:$0xff]
    %v5420 = vld [vmem:[#allocation19 + $0x68] sm:$0xff]
    %v5421 = vld [vmem:[#allocation19 + $0x70] sm:$0xff]
    %v5422 = vld [vmem:[#allocation19 + $0x78] sm:$0xff]
    %v5423 = vld [vmem:[%s49] sm:$0x3]
    %v5425 = vlaneseq
    %v5426 = vshrl.u32 %v5425, 7
    %v5427 = vsub.s32 0, %v5426
    %v5428 = vrot.slane %v5423, %v5427
    %v5429 = vlaneseq
    %v5430 = vshrl.u32 %v5429, 7
    %v5431 = vsub.s32 1, %v5430
    %v5432 = vrot.slane %v5423, %v5431
    %v5451 = vunpack.c.l.b16 %v5407
    %v5452 = vunpack.c.h.b16 %v5407
    %v5453 = vunpack.c.l.b16 %v5408
    %v5454 = vunpack.c.h.b16 %v5408
    %v5455 = vunpack.c.l.b16 %v5409
    %v5456 = vunpack.c.h.b16 %v5409
    %v5457 = vunpack.c.l.b16 %v5410
    %v5458 = vunpack.c.h.b16 %v5410
    %v5459 = vunpack.c.l.b16 %v5411
    %v5460 = vunpack.c.h.b16 %v5411
    %v5461 = vunpack.c.l.b16 %v5412
    %v5462 = vunpack.c.h.b16 %v5412
    %v5463 = vunpack.c.l.b16 %v5413
    %v5464 = vunpack.c.h.b16 %v5413
    %v5465 = vunpack.c.l.b16 %v5414
    %v5466 = vunpack.c.h.b16 %v5414
    %v5467 = vunpack.c.l.b16 %v5415
    %v5468 = vunpack.c.h.b16 %v5415
    %v5469 = vunpack.c.l.b16 %v5416
    %v5470 = vunpack.c.h.b16 %v5416
    %v5471 = vunpack.c.l.b16 %v5417
    %v5472 = vunpack.c.h.b16 %v5417
    %v5473 = vunpack.c.l.b16 %v5418
    %v5474 = vunpack.c.h.b16 %v5418
    %v5475 = vunpack.c.l.b16 %v5419
    %v5476 = vunpack.c.h.b16 %v5419
    %v5477 = vunpack.c.l.b16 %v5420
    %v5478 = vunpack.c.h.b16 %v5420
    %v5479 = vunpack.c.l.b16 %v5421
    %v5480 = vunpack.c.h.b16 %v5421
    %v5481 = vunpack.c.l.b16 %v5422
    %v5482 = vunpack.c.h.b16 %v5422
    %v5483 = vpack.c.b16 %v5453, %v5451
    %v5484 = vpack.c.b16 %v5454, %v5452
    %v5485 = vpack.c.b16 %v5457, %v5455
    %v5486 = vpack.c.b16 %v5458, %v5456
    %v5487 = vpack.c.b16 %v5461, %v5459
    %v5488 = vpack.c.b16 %v5462, %v5460
    %v5489 = vpack.c.b16 %v5465, %v5463
    %v5490 = vpack.c.b16 %v5466, %v5464
    %v5491 = vpack.c.b16 %v5469, %v5467
    %v5492 = vpack.c.b16 %v5470, %v5468
    %v5493 = vpack.c.b16 %v5473, %v5471
    %v5494 = vpack.c.b16 %v5474, %v5472
    %v5495 = vpack.c.b16 %v5477, %v5475
    %v5496 = vpack.c.b16 %v5478, %v5476
    %v5497 = vpack.c.b16 %v5481, %v5479
    %v5498 = vpack.c.b16 %v5482, %v5480
    %5515 = vmatprep.subr.bf16.mxu0 %v5498
    %5516 = vmatpush1.bf16.msra.mxu0 %v5497
    %5517 = vmatprep.subr.bf16.mxu0 %v5496
    %5518 = vmatpush1.bf16.msra.mxu0 %v5495
    %5519 = vmatprep.subr.bf16.mxu0 %v5494
    %5520 = vmatpush1.bf16.msra.mxu0 %v5493
    %5521 = vmatprep.subr.bf16.mxu0 %v5492
    %5522 = vmatpush1.bf16.msra.mxu0 %v5491
    %5523 = vmatprep.subr.bf16.mxu0 %v5490
    %5524 = vmatpush1.bf16.msra.mxu0 %v5489
    %5525 = vmatprep.subr.bf16.mxu0 %v5488
    %5526 = vmatpush1.bf16.msra.mxu0 %v5487
    %5527 = vmatprep.subr.bf16.mxu0 %v5486
    %5528 = vmatpush1.bf16.msra.mxu0 %v5485
    %5529 = vmatprep.subr.bf16.mxu0 %v5484
    %5530 = vmatpush1.bf16.msra.mxu0 %v5483
    %5531 = vmatprep.subr.bf16.mxu0 0
    %5532 = vmatpush2.bf16.msra.mxu0 0
    %5533 = vmatprep.subr.bf16.mxu0 0
    %5534 = vmatpush2.bf16.msra.mxu0 0
    %5535 = vmatprep.subr.bf16.mxu0 0
    %5536 = vmatpush2.bf16.msra.mxu0 0
    %5537 = vmatprep.subr.bf16.mxu0 0
    %5538 = vmatpush2.bf16.msra.mxu0 0
    %5539 = vmatprep.subr.bf16.mxu0 0
    %5540 = vmatpush2.bf16.msra.mxu0 0
    %5541 = vmatprep.subr.bf16.mxu0 0
    %5542 = vmatpush2.bf16.msra.mxu0 0
    %5543 = vmatprep.subr.bf16.mxu0 0
    %5544 = vmatpush2.bf16.msra.mxu0 0
    %5545 = vmatprep.subr.bf16.mxu0 0
    %5546 = vmatpush2.bf16.msra.mxu0 0
    %5547 = vmatprep.mubr.bf16.mxu0 0
    %5548 = vmatmul.mubr.bf16.gmra.mxu0 %v5406
    %v5549 = vpop.f32.mrf.mxu0
    %v5550 = vadd.f32 %v5428, %v5549
    %v5551 = vpop.f32.mrf.mxu0
    %v5552 = vadd.f32 %v5432, %v5551
    %v5553 = vpop.f32.mrf.mxu0
    %v5554 = vadd.f32 %v5428, %v5553
    %v5555 = vpop.f32.mrf.mxu0
    %v5556 = vadd.f32 %v5432, %v5555
    %5557 = vdwg.mxu0
    %v5558 = vmax.f32 %v5550, 0.0
    %v5559 = vmax.f32 %v5552, 0.0
    %v5560 = vmax.f32 %v5554, 0.0
    %v5561 = vmax.f32 %v5556, 0.0
    %v5562 = vpack.c.bf16 %v5560, %v5558
    %v5563 = vpack.c.bf16 %v5561, %v5559
    %v5564 = vld [vmem:[#allocation20] sm:$0xf]
    %v5565 = vld [vmem:[#allocation20 + $0x4] sm:$0xf]
    %v5566 = vld [vmem:[#allocation20 + $0x8] sm:$0xf]
    %v5567 = vld [vmem:[#allocation20 + $0xc] sm:$0xf]
    %v5568 = vld [vmem:[#allocation20 + $0x10] sm:$0xf]
    %v5569 = vld [vmem:[#allocation20 + $0x14] sm:$0xf]
    %v5570 = vld [vmem:[#allocation20 + $0x18] sm:$0xf]
    %v5571 = vld [vmem:[#allocation20 + $0x1c] sm:$0xf]
    %v5572 = vld [vmem:[#allocation20 + $0x20] sm:$0xf]
    %v5573 = vld [vmem:[#allocation20 + $0x24] sm:$0xf]
    %v5574 = vld [vmem:[#allocation20 + $0x28] sm:$0xf]
    %v5575 = vld [vmem:[#allocation20 + $0x2c] sm:$0xf]
    %v5576 = vld [vmem:[#allocation20 + $0x30] sm:$0xf]
    %v5577 = vld [vmem:[#allocation20 + $0x34] sm:$0xf]
    %v5578 = vld [vmem:[#allocation20 + $0x38] sm:$0xf]
    %v5579 = vld [vmem:[#allocation20 + $0x3c] sm:$0xf]
    %v5580 = vld [vmem:[#allocation20 + $0x40] sm:$0xf]
    %v5581 = vld [vmem:[#allocation20 + $0x44] sm:$0xf]
    %v5582 = vld [vmem:[#allocation20 + $0x48] sm:$0xf]
    %v5583 = vld [vmem:[#allocation20 + $0x4c] sm:$0xf]
    %v5584 = vld [vmem:[#allocation20 + $0x50] sm:$0xf]
    %v5585 = vld [vmem:[#allocation20 + $0x54] sm:$0xf]
    %v5586 = vld [vmem:[#allocation20 + $0x58] sm:$0xf]
    %v5587 = vld [vmem:[#allocation20 + $0x5c] sm:$0xf]
    %v5588 = vld [vmem:[#allocation20 + $0x60] sm:$0xf]
    %v5589 = vld [vmem:[#allocation20 + $0x64] sm:$0xf]
    %v5590 = vld [vmem:[#allocation20 + $0x68] sm:$0xf]
    %v5591 = vld [vmem:[#allocation20 + $0x6c] sm:$0xf]
    %v5592 = vld [vmem:[#allocation20 + $0x70] sm:$0xf]
    %v5593 = vld [vmem:[#allocation20 + $0x74] sm:$0xf]
    %v5594 = vld [vmem:[#allocation20 + $0x78] sm:$0xf]
    %v5595 = vld [vmem:[#allocation20 + $0x7c] sm:$0xf]
    %v5596 = vld [vmem:[%s53] sm:$0x1]
    %v5598 = vlaneseq
    %v5599 = vshrl.u32 %v5598, 7
    %v5600 = vsub.s32 0, %v5599
    %v5601 = vrot.slane %v5596, %v5600
    %v5635 = vunpack.c.l.b16 %v5564
    %v5636 = vunpack.c.l.b16 %v5565
    %v5637 = vunpack.c.l.b16 %v5566
    %v5638 = vunpack.c.l.b16 %v5567
    %v5639 = vunpack.c.l.b16 %v5568
    %v5640 = vunpack.c.l.b16 %v5569
    %v5641 = vunpack.c.l.b16 %v5570
    %v5642 = vunpack.c.l.b16 %v5571
    %v5643 = vunpack.c.l.b16 %v5572
    %v5644 = vunpack.c.l.b16 %v5573
    %v5645 = vunpack.c.l.b16 %v5574
    %v5646 = vunpack.c.l.b16 %v5575
    %v5647 = vunpack.c.l.b16 %v5576
    %v5648 = vunpack.c.l.b16 %v5577
    %v5649 = vunpack.c.l.b16 %v5578
    %v5650 = vunpack.c.l.b16 %v5579
    %v5651 = vunpack.c.l.b16 %v5580
    %v5652 = vunpack.c.l.b16 %v5581
    %v5653 = vunpack.c.l.b16 %v5582
    %v5654 = vunpack.c.l.b16 %v5583
    %v5655 = vunpack.c.l.b16 %v5584
    %v5656 = vunpack.c.l.b16 %v5585
    %v5657 = vunpack.c.l.b16 %v5586
    %v5658 = vunpack.c.l.b16 %v5587
    %v5659 = vunpack.c.l.b16 %v5588
    %v5660 = vunpack.c.l.b16 %v5589
    %v5661 = vunpack.c.l.b16 %v5590
    %v5662 = vunpack.c.l.b16 %v5591
    %v5663 = vunpack.c.l.b16 %v5592
    %v5664 = vunpack.c.l.b16 %v5593
    %v5665 = vunpack.c.l.b16 %v5594
    %v5666 = vunpack.c.l.b16 %v5595
    %v5667 = vpack.c.b16 %v5636, %v5635
    %v5668 = vpack.c.b16 %v5638, %v5637
    %v5669 = vpack.c.b16 %v5640, %v5639
    %v5670 = vpack.c.b16 %v5642, %v5641
    %v5671 = vpack.c.b16 %v5644, %v5643
    %v5672 = vpack.c.b16 %v5646, %v5645
    %v5673 = vpack.c.b16 %v5648, %v5647
    %v5674 = vpack.c.b16 %v5650, %v5649
    %v5675 = vpack.c.b16 %v5652, %v5651
    %v5676 = vpack.c.b16 %v5654, %v5653
    %v5677 = vpack.c.b16 %v5656, %v5655
    %v5678 = vpack.c.b16 %v5658, %v5657
    %v5679 = vpack.c.b16 %v5660, %v5659
    %v5680 = vpack.c.b16 %v5662, %v5661
    %v5681 = vpack.c.b16 %v5664, %v5663
    %v5682 = vpack.c.b16 %v5666, %v5665
    %5699 = vmatprep.subr.bf16.mxu0 0
    %5700 = vmatpush1.bf16.msra.mxu0 %v5674
    %5701 = vmatprep.subr.bf16.mxu0 0
    %5702 = vmatpush1.bf16.msra.mxu0 %v5673
    %5703 = vmatprep.subr.bf16.mxu0 0
    %5704 = vmatpush1.bf16.msra.mxu0 %v5672
    %5705 = vmatprep.subr.bf16.mxu0 0
    %5706 = vmatpush1.bf16.msra.mxu0 %v5671
    %5707 = vmatprep.subr.bf16.mxu0 0
    %5708 = vmatpush1.bf16.msra.mxu0 %v5670
    %5709 = vmatprep.subr.bf16.mxu0 0
    %5710 = vmatpush1.bf16.msra.mxu0 %v5669
    %5711 = vmatprep.subr.bf16.mxu0 0
    %5712 = vmatpush1.bf16.msra.mxu0 %v5668
    %5713 = vmatprep.subr.bf16.mxu0 0
    %5714 = vmatpush1.bf16.msra.mxu0 %v5667
    %5715 = vmatprep.subr.bf16.mxu0 0
    %5716 = vmatpush2.bf16.msra.mxu0 %v5682
    %5717 = vmatprep.subr.bf16.mxu0 0
    %5718 = vmatpush2.bf16.msra.mxu0 %v5681
    %5719 = vmatprep.subr.bf16.mxu0 0
    %5720 = vmatpush2.bf16.msra.mxu0 %v5680
    %5721 = vmatprep.subr.bf16.mxu0 0
    %5722 = vmatpush2.bf16.msra.mxu0 %v5679
    %5723 = vmatprep.subr.bf16.mxu0 0
    %5724 = vmatpush2.bf16.msra.mxu0 %v5678
    %5725 = vmatprep.subr.bf16.mxu0 0
    %5726 = vmatpush2.bf16.msra.mxu0 %v5677
    %5727 = vmatprep.subr.bf16.mxu0 0
    %5728 = vmatpush2.bf16.msra.mxu0 %v5676
    %5729 = vmatprep.subr.bf16.mxu0 0
    %5730 = vmatpush2.bf16.msra.mxu0 %v5675
    %5731 = vmatprep.mubr.bf16.mxu0 %v5563
    %5732 = vmatmul.mubr.bf16.gmra.mxu0 %v5562
    %v5733 = vpop.f32.mrf.mxu0
    %v5734 = vadd.f32 %v5601, %v5733
    %v5735 = vpop.f32.mrf.mxu0
    %v5736 = vpop.f32.mrf.mxu0
    %v5737 = vadd.f32 %v5601, %v5736
    %v5738 = vpop.f32.mrf.mxu0
    %5739 = vdwg.mxu0
    %v5740 = vadd.f32 %v5734, %v5404
    %v5741 = vadd.f32 %v5737, %v5405
    %5742 = vadd.xlane.f32.xlu0 %v5740
    %v5743 = vpop.xlane.xlu0 %5742
    %5744 = vadd.xlane.f32.xlu0 %v5741
    %v5745 = vpop.xlane.xlu0 %5744
    %v5746 = vmul.f32 %v5743, %v2793
    %v5747 = vmul.f32 %v5745, %v2793
    %v5748 = vsub.f32 %v5740, %v5746
    %v5749 = vsub.f32 %v5741, %v5747
    %v5750 = vmul.f32 %v5748, %v5748
    %v5751 = vmul.f32 %v5749, %v5749
    %5752 = vadd.xlane.f32.xlu0 %v5750
    %v5753 = vpop.xlane.xlu0 %5752
    %5754 = vadd.xlane.f32.xlu0 %v5751
    %v5755 = vpop.xlane.xlu0 %5754
    %v5756 = vmul.f32 %v5753, %v2793
    %v5757 = vmul.f32 %v5755, %v2793
    %v5758 = vadd.f32 %v5756, 1e-05
    %v5759 = vadd.f32 %v5757, 1e-05
    %v5760 = vrsqrt.pop %v5758
    %v5761 = vrsqrt.pop %v5759
    %v5762 = vmul.f32 %v5748, %v5760
    %v5763 = vmul.f32 %v5749, %v5761
    %v5764 = vld [vmem:[%s55] sm:$0x1]
    %v5766 = vlaneseq
    %v5767 = vshrl.u32 %v5766, 7
    %v5768 = vsub.s32 0, %v5767
    %v5769 = vrot.slane %v5764, %v5768
    %v5771 = vmul.f32 %v5762, %v5769
    %v5772 = vmul.f32 %v5763, %v5769
    %v5773 = vld [vmem:[%s57] sm:$0x1]
    %v5775 = vlaneseq
    %v5776 = vshrl.u32 %v5775, 7
    %v5777 = vsub.s32 0, %v5776
    %v5778 = vrot.slane %v5773, %v5777
    %v5780 = vadd.f32 %v5771, %v5778
    %v5781 = vadd.f32 %v5772, %v5778
    %5782 = vst [vmem:[#allocation22] sm:$0xff] %v5780
    %5783 = vst [vmem:[#allocation22 + $0x8] sm:$0xff] %v5781
    // Predicated region
    $region166: #{tpu_custom_call.1} parent=1 // pred_check
      _
    $region167: #{tpu_custom_call.1} parent=1 // pred_check_branch
      %5785 = sbr.rel (0) target = $region169
    $region168: #{tpu_custom_call.1} parent=1 // pred_region
      %s5787 = ssub.s32 256, 256
      %5788 = vsyncadd [#allocation4], %s5787
      %s5789 = sshll.u32 [#allocation22], 4
      %s5790 = int_to_ptr.vmem [resolvable:$true] %s5789
      %5795 = dma.vmem_to_hbm [thread:$0]  %s5790, 256, %s59, [#allocation4], 128, 128, 8
    $region169: #{tpu_custom_call.1} parent=1 // pred_fallthru
      _
    // Predicated region
    $region170: #{tpu_custom_call.1} parent=1 // pred_check
      _
    $region171: #{tpu_custom_call.1} parent=1 // pred_check_branch
      %5797 = sbr.rel (0) target = $region173
    $region172: #{tpu_custom_call.1} parent=1 // pred_region
      %5798 = dma.done [#allocation4], 256
    $region173: #{tpu_custom_call.1} parent=1 // pred_fallthru
      _
    %5799 = vsyncpa [#allocation3], 1
    %5800 = vsyncpa [#allocation6], 1
    %5801 = vsyncpa [#allocation9], 1
    %5802 = vsyncpa [#allocation12], 1
    %5803 = vsyncpa [#allocation15], 1
    %5804 = vsyncpa [#allocation18], 1
    %5805 = vsyncpa [#allocation21], 1
    %5806 = vsyncpa [#allocation4], 1

</llo_original>
